<compile_context>
chip_gen: v5e
topology: v5e:2x2
jax: 0.10.0
libtpu: 0.0.40
codegen_flags: <defaults>
</compile_context>

<pallas_src>
import functools
import math

import jax
import jax.numpy as jnp
from jax import lax
from jax.experimental import pallas as pl
from jax.experimental.pallas import tpu as pltpu


# ----------------------------------------------------------------------------
# Small capability probes (keep the kernel runnable on any jax/TPU version)
# ----------------------------------------------------------------------------
@functools.lru_cache(maxsize=None)
def _single_buffer_supported():
    """Probe whether BlockSpec(pipeline_mode=pl.Buffered(1)) compiles & runs."""
    if not hasattr(pl, "Buffered"):
        return False
    try:
        def _k(x_ref, o_ref):
            o_ref[...] = x_ref[...] + 1.0

        spec = pl.BlockSpec((8, 128), lambda i: (0, 0), pipeline_mode=pl.Buffered(1))
        f = pl.pallas_call(
            _k,
            out_shape=jax.ShapeDtypeStruct((8, 128), jnp.float32),
            grid=(1,),
            in_specs=[spec],
            out_specs=pl.BlockSpec((8, 128), lambda i: (0, 0)),
        )
        jax.block_until_ready(f(jnp.zeros((8, 128), jnp.float32)))
        return True
    except Exception:
        return False


@functools.lru_cache(maxsize=None)
def _vmem_limit_bytes():
    # v5e/v6e: 128 MiB physical (scoped default only 16/32 MiB); v7x: 64 MiB.
    try:
        cap = int(pltpu.get_tpu_info().vmem_capacity_bytes)
    except Exception:
        cap = 128 * 1024 * 1024
    return int(min(cap * 3 // 4, 96 * 1024 * 1024))


def _resident_spec(shape):
    """Weight/bias block: constant index map (stays resident across the batch
    grid); single-buffered when the runtime supports it."""
    idx = lambda b: (0,) * len(shape)
    if _single_buffer_supported():
        return pl.BlockSpec(shape, idx, pipeline_mode=pl.Buffered(1))
    return pl.BlockSpec(shape, idx)


def _batched_spec(shape):
    """Per-batch-element block (full extent in trailing dims)."""
    return pl.BlockSpec((1,) + shape, lambda b, _n=len(shape): (b,) + (0,) * _n)


# ----------------------------------------------------------------------------
# Fused decoder-layer kernel (one batch element per grid step)
# ----------------------------------------------------------------------------
def decoder_layer_kernel(*refs, num_heads, causal):
    if causal:
        (x_ref, mem_ref, smask_ref,
         g0, be0, wq0, bq0, wk0, bk0, wv0, bv0, wo0, bo0,
         g1, be1, wq1, bq1, wk1, bk1, wv1, bv1, wo1, bo1,
         g2, be2, w1r, fb1, w2r, fb2,
         o_ref, ctx_ref) = refs
        tmask_ref = None
    else:
        (x_ref, mem_ref, smask_ref, tmask_ref,
         g0, be0, wq0, bq0, wk0, bk0, wv0, bv0, wo0, bo0,
         g1, be1, wq1, bq1, wk1, bk1, wv1, bv1, wo1, bo1,
         g2, be2, w1r, fb1, w2r, fb2,
         o_ref, ctx_ref) = refs

    x = x_ref[0].astype(jnp.float32)                       # (T, D)
    T, D = x.shape
    dk = D // num_heads
    scale = 1.0 / math.sqrt(dk)

    # ---- masks: computed ONCE, hoisted out of the per-head loops ------------
    if causal:
        # causal (subsequent) mask generated in-kernel: no B*T*T HBM traffic.
        row = lax.broadcasted_iota(jnp.int32, (T, T), 0)
        col = lax.broadcasted_iota(jnp.int32, (T, T), 1)
        tgt_keep = col <= row                              # (T, T) bool
    else:
        tgt_keep = tmask_ref[0] != 0                       # (T, T) bool
    src_keep = smask_ref[0] != 0                           # (1, S) bool (bcasts)

    def layernorm(v, gamma, beta):
        # annotated-transformer LayerNorm: unbiased std (ddof=1), eps on std.
        mean = jnp.mean(v, axis=-1, keepdims=True)
        diff = v - mean
        var = jnp.sum(diff * diff, axis=-1, keepdims=True) * (1.0 / (D - 1))
        inv = pl.reciprocal(jnp.sqrt(var) + 1e-6, approx=True)   # EUP slot
        return gamma * diff * inv + beta

    def attention(x_res, kv16, keep, gamma, beta, wq, bq, wk, bk, wv, bv, wo, bo):
        # pre-norm; MXU operands in bf16, accumulation + residual in f32.
        y16 = layernorm(x_res, gamma[...], beta[...]).astype(jnp.bfloat16)
        if kv16 is None:                                   # self-attention
            kv16 = y16
        q = jnp.dot(y16, wq[...], preferred_element_type=jnp.float32) + bq[...]
        k = jnp.dot(kv16, wk[...], preferred_element_type=jnp.float32) + bk[...]
        v = jnp.dot(kv16, wv[...], preferred_element_type=jnp.float32) + bv[...]
        q16 = (q * scale).astype(jnp.bfloat16)             # fold 1/sqrt(dk) into q
        k16 = k.astype(jnp.bfloat16)
        v16 = v.astype(jnp.bfloat16)

        # TODO(synk): at realistic T/S/H move heads onto a grid axis and use a
        # flash-style online softmax over S tiles instead of full (T,S) scores.
        for h in range(num_heads):
            sl = slice(h * dk, (h + 1) * dk)
            # q . k^T via dot_general contracting the last dims (no K transpose
            # materialized) — same form as the flash-attention reference.
            s = lax.dot_general(q16[:, sl], k16[:, sl],
                                (((1,), (1,)), ((), ())),
                                preferred_element_type=jnp.float32)    # (T, Skv)
            s = jnp.where(keep, s, -1e9)                   # masked_fill(mask==0)
            m = jnp.max(s, axis=-1, keepdims=True)
            p = jnp.exp(s - m)
            l = jnp.sum(p, axis=-1, keepdims=True)
            p = p * pl.reciprocal(l, approx=True)          # EUP, keeps VALU free
            ctx_ref[:, sl] = jnp.dot(p.astype(jnp.bfloat16), v16[:, sl],
                                     preferred_element_type=jnp.float32)

        # ONE full-K output projection (T,D)@(D,D) — much better MXU fill than
        # per-head (T,dk)@(dk,D) accumulation.
        out = jnp.dot(ctx_ref[...].astype(jnp.bfloat16), wo[...],
                      preferred_element_type=jnp.float32) + bo[...]
        return x_res + out                                 # residual (f32)

    def feed_forward(x_res, gamma, beta, w1, b1, w2, b2):
        y16 = layernorm(x_res, gamma[...], beta[...]).astype(jnp.bfloat16)
        h1 = jnp.dot(y16, w1[...], preferred_element_type=jnp.float32) + b1[...]
        h1 = jnp.maximum(h1, 0.0).astype(jnp.bfloat16)
        out = jnp.dot(h1, w2[...], preferred_element_type=jnp.float32) + b2[...]
        return x_res + out

    mem16 = mem_ref[0].astype(jnp.bfloat16)                # (S, D)

    # sublayer[0]: x + self_attn(norm(x), norm(x), norm(x), tgt_mask)
    x = attention(x, None, tgt_keep, g0, be0, wq0, bq0, wk0, bk0, wv0, bv0, wo0, bo0)
    # sublayer[1]: x + src_attn(norm(x), memory, memory, src_mask)
    x = attention(x, mem16, src_keep, g1, be1, wq1, bq1, wk1, bk1, wv1, bv1, wo1, bo1)
    # sublayer[2]: x + feed_forward(norm(x))
    x = feed_forward(x, g2, be2, w1r, fb1, w2r, fb2)

    o_ref[0] = x.astype(o_ref.dtype)


# ----------------------------------------------------------------------------
# Wrapper
# ----------------------------------------------------------------------------
def decoder_layer(params, x, memory, src_mask, num_heads, tgt_mask=None):
    """Fused DecoderLayer forward. If tgt_mask is None, a causal (subsequent)
    mask is generated in-kernel; otherwise the given [B,T,T] mask is used."""
    B, T, D = x.shape
    S = memory.shape[1]
    DFF = params["ffn"][0].shape[1]
    causal = tgt_mask is None

    g0, be0 = params["ln"][0]
    g1, be1 = params["ln"][1]
    g2, be2 = params["ln"][2]
    wq0, bq0, wk0, bk0, wv0, bv0, wo0, bo0 = params["self_attn"]
    wq1, bq1, wk1, bk1, wv1, bv1, wo1, bo1 = params["src_attn"]
    w1, fb1, w2, fb2 = params["ffn"]

    bf = lambda w: w.astype(jnp.bfloat16)                  # weight matrices -> bf16 DMA
    r2 = lambda v: v.reshape(1, -1).astype(jnp.float32)    # vectors -> (1, n) f32

    in_specs = [_batched_spec((T, D)), _batched_spec((S, D)), _batched_spec((1, S))]
    args = [x, memory, src_mask.astype(jnp.int32)]
    if not causal:
        in_specs.append(_batched_spec((T, T)))
        args.append(tgt_mask.astype(jnp.int32))

    def add_param(arr, shape):
        in_specs.append(_resident_spec(shape))
        args.append(arr)

    # ln0 + self-attention
    add_param(r2(g0), (1, D)); add_param(r2(be0), (1, D))
    for w, b in ((wq0, bq0), (wk0, bk0), (wv0, bv0), (wo0, bo0)):
        add_param(bf(w), (D, D)); add_param(r2(b), (1, D))
    # ln1 + cross-attention
    add_param(r2(g1), (1, D)); add_param(r2(be1), (1, D))
    for w, b in ((wq1, bq1), (wk1, bk1), (wv1, bv1), (wo1, bo1)):
        add_param(bf(w), (D, D)); add_param(r2(b), (1, D))
    # ln2 + FFN
    add_param(r2(g2), (1, D)); add_param(r2(be2), (1, D))
    add_param(bf(w1), (D, DFF)); add_param(r2(fb1), (1, DFF))
    add_param(bf(w2), (DFF, D)); add_param(r2(fb2), (1, D))

    kern = functools.partial(decoder_layer_kernel, num_heads=num_heads, causal=causal)

    return pl.pallas_call(
        kern,
        out_shape=jax.ShapeDtypeStruct((B, T, D), x.dtype),
        grid=(B,),
        in_specs=in_specs,
        out_specs=_batched_spec((T, D)),
        scratch_shapes=[pltpu.VMEM((T, D), jnp.float32)],   # per-head ctx slab
        compiler_params=pltpu.CompilerParams(
            dimension_semantics=("parallel",),              # megacore shards batch
            vmem_limit_bytes=_vmem_limit_bytes(),
        ),
    )(*args)


# ----------------------------------------------------------------------------
# Pure-JAX f32 reference (PyTorch semantics) for correctness check
# ----------------------------------------------------------------------------
def ref_decoder_layer(params, x, memory, src_mask, tgt_mask, h):
    def ln(v, g, b):
        mean = v.mean(-1, keepdims=True)
        var = ((v - mean) ** 2).sum(-1, keepdims=True) / (v.shape[-1] - 1)
        return g * (v - mean) / (jnp.sqrt(var) + 1e-6) + b

    def lin(v, w, b):
        return v @ w + b

    def mha(p, q_in, k_in, v_in, mask):
        wq, bq, wk, bk, wv, bv, wo, bo = p
        B, T, D = q_in.shape
        S = k_in.shape[1]
        dk = D // h
        q = lin(q_in, wq, bq).reshape(B, T, h, dk).transpose(0, 2, 1, 3)
        k = lin(k_in, wk, bk).reshape(B, S, h, dk).transpose(0, 2, 1, 3)
        v = lin(v_in, wv, bv).reshape(B, S, h, dk).transpose(0, 2, 1, 3)
        scores = jnp.einsum("bhtd,bhsd->bhts", q, k) / math.sqrt(dk)
        scores = jnp.where(mask[:, None] == 0, -1e9, scores)
        p_attn = jax.nn.softmax(scores, axis=-1)
        o = jnp.einsum("bhts,bhsd->bhtd", p_attn, v).transpose(0, 2, 1, 3).reshape(B, T, D)
        return lin(o, wo, bo)

    y = ln(x, params["ln"][0][0], params["ln"][0][1])
    x = x + mha(params["self_attn"], y, y, y, tgt_mask)
    y = ln(x, params["ln"][1][0], params["ln"][1][1])
    x = x + mha(params["src_attn"], y, memory, memory, src_mask)
    y = ln(x, params["ln"][2][0], params["ln"][2][1])
    w1, b1, w2, b2 = params["ffn"]
    h1 = jnp.maximum(lin(y, w1, b1), 0.0)
    return x + lin(h1, w2, b2)


# ----------------------------------------------------------------------------
# Main
# ----------------------------------------------------------------------------
if __name__ == "__main__":
    B, T, S, D, H, DFF = 2, 8, 16, 32, 4, 64
    key = jax.random.PRNGKey(0)
    keys = iter(jax.random.split(key, 32))

    def init_linear(din, dout):
        # stored pre-transposed (din, dout) so y = x @ w + b == torch x @ W^T + b
        w = jax.random.normal(next(keys), (din, dout), jnp.float32) / math.sqrt(din)
        b = jax.random.normal(next(keys), (dout,), jnp.float32) * 0.02
        return w, b

    def init_mha():
        p = []
        for _ in range(4):                                 # q, k, v, out projections
            p.extend(init_linear(D, D))
        return tuple(p)

    params = {
        "self_attn": init_mha(),
        "src_attn": init_mha(),
        "ffn": init_linear(D, DFF) + init_linear(DFF, D),
        "ln": [(jnp.ones((D,), jnp.float32), jnp.zeros((D,), jnp.float32))
               for _ in range(3)],
    }

    x = jax.random.normal(next(keys), (B, T, D), jnp.float32)
    memory = jax.random.normal(next(keys), (B, S, D), jnp.float32)
    # source padding mask; mask last 3 memory positions of batch element 1
    src_mask = jnp.ones((B, 1, S), jnp.int32).at[1, 0, S - 3:].set(0)
    # causal (subsequent) target mask, for the reference / explicit-mask path
    tgt_mask = jnp.broadcast_to(jnp.tril(jnp.ones((T, T), jnp.int32)), (B, T, T))

    # Optimized path: causal tgt mask generated in-kernel (no B*T*T DMA).
    out = jax.block_until_ready(decoder_layer(params, x, memory, src_mask, H))
    # Explicit-mask path (original forward signature) — must agree with causal.
    out_masked = jax.block_until_ready(
        decoder_layer(params, x, memory, src_mask, H, tgt_mask=tgt_mask))

    ref = ref_decoder_layer(params, x, memory, src_mask, tgt_mask, H)
    assert out.shape == (B, T, D) and out.dtype == jnp.float32
    # Loose tolerance: kernel matmuls use bf16 operands (f32 accumulation) and
    # EUP approx reciprocals; the reference is pure f32.
    assert jnp.allclose(out, ref, rtol=5e-2, atol=1e-1), "Pallas output mismatch vs f32 reference"
    assert jnp.allclose(out_masked, out, rtol=0.0, atol=1e-5), "explicit-mask path mismatch"

    print("KERNEL_OK")
</pallas_src>

<mosaic_0001>
module attributes {stable_mosaic.version = 11 : i64} {
  func.func @_k(%arg0: i32, %arg1: memref<8x128xf32, #tpu.memory_space<vmem>>, %arg2: memref<8x128xf32, #tpu.memory_space<vmem>>) attributes {dimension_semantics = [#tpu.dimension_semantics<arbitrary>], iteration_bounds = array<i64: 1>, scalar_prefetch = 0 : i64, scratch_operands = 0 : i64, tpu.core_type = #tpu.core_type<tc>, window_params = [{pipeline_mode = #tpu.pipeline_mode<synchronous>, transform_indices = @transform_0, window_bounds = array<i64: 8, 128>}, {pipeline_mode = #tpu.pipeline_mode<synchronous>, transform_indices = @transform_1, window_bounds = array<i64: 8, 128>}]} {
    %c0 = arith.constant 0 : index
    %c0_0 = arith.constant 0 : index
    %0 = vector.load %arg1[%c0, %c0_0] : memref<8x128xf32, #tpu.memory_space<vmem>>, vector<8x128xf32>
    %cst = arith.constant 1.000000e+00 : f32
    %1 = vector.broadcast %cst : f32 to vector<8x128xf32>
    %2 = arith.addf %0, %1 : vector<8x128xf32>
    %c0_1 = arith.constant 0 : index
    %c0_2 = arith.constant 0 : index
    %3 = vector.load %arg2[%c0_1, %c0_2] : memref<8x128xf32, #tpu.memory_space<vmem>>, vector<8x128xf32>
    tpu.vector_store %arg2[%c0_1, %c0_2], %2 {strides = array<i32>} : memref<8x128xf32, #tpu.memory_space<vmem>>, vector<8x128xf32>,
    return
  }
  func.func @transform_0(%arg0: i32) -> (i32, i32) {
    %c0_i32 = arith.constant 0 : i32
    %c0_i32_0 = arith.constant 0 : i32
    %c0_i32_1 = arith.constant 0 : i32
    return %c0_i32, %c0_i32_0 : i32, i32
  }
  func.func @transform_1(%arg0: i32) -> (i32, i32) {
    %c0_i32 = arith.constant 0 : i32
    %c0_i32_0 = arith.constant 0 : i32
    %c0_i32_1 = arith.constant 0 : i32
    return %c0_i32, %c0_i32_0 : i32, i32
  }
}

module attributes {stable_mosaic.version = 11 : i64} {
  func.func @decoder_layer_kernel(%arg0: i32, %arg1: memref<1x8x32xf32, #tpu.memory_space<vmem>>, %arg2: memref<1x16x32xf32, #tpu.memory_space<vmem>>, %arg3: memref<1x1x16xi32, #tpu.memory_space<vmem>>, %arg4: memref<1x32xf32, #tpu.memory_space<vmem>>, %arg5: memref<1x32xf32, #tpu.memory_space<vmem>>, %arg6: memref<32x32xbf16, #tpu.memory_space<vmem>>, %arg7: memref<1x32xf32, #tpu.memory_space<vmem>>, %arg8: memref<32x32xbf16, #tpu.memory_space<vmem>>, %arg9: memref<1x32xf32, #tpu.memory_space<vmem>>, %arg10: memref<32x32xbf16, #tpu.memory_space<vmem>>, %arg11: memref<1x32xf32, #tpu.memory_space<vmem>>, %arg12: memref<32x32xbf16, #tpu.memory_space<vmem>>, %arg13: memref<1x32xf32, #tpu.memory_space<vmem>>, %arg14: memref<1x32xf32, #tpu.memory_space<vmem>>, %arg15: memref<1x32xf32, #tpu.memory_space<vmem>>, %arg16: memref<32x32xbf16, #tpu.memory_space<vmem>>, %arg17: memref<1x32xf32, #tpu.memory_space<vmem>>, %arg18: memref<32x32xbf16, #tpu.memory_space<vmem>>, %arg19: memref<1x32xf32, #tpu.memory_space<vmem>>, %arg20: memref<32x32xbf16, #tpu.memory_space<vmem>>, %arg21: memref<1x32xf32, #tpu.memory_space<vmem>>, %arg22: memref<32x32xbf16, #tpu.memory_space<vmem>>, %arg23: memref<1x32xf32, #tpu.memory_space<vmem>>, %arg24: memref<1x32xf32, #tpu.memory_space<vmem>>, %arg25: memref<1x32xf32, #tpu.memory_space<vmem>>, %arg26: memref<32x64xbf16, #tpu.memory_space<vmem>>, %arg27: memref<1x64xf32, #tpu.memory_space<vmem>>, %arg28: memref<64x32xbf16, #tpu.memory_space<vmem>>, %arg29: memref<1x32xf32, #tpu.memory_space<vmem>>, %arg30: memref<1x8x32xf32, #tpu.memory_space<vmem>>, %arg31: memref<8x32xf32, #tpu.memory_space<vmem>>) attributes {dimension_semantics = [#tpu.dimension_semantics<parallel>], iteration_bounds = array<i64: 2>, scalar_prefetch = 0 : i64, scratch_operands = 1 : i64, tpu.core_type = #tpu.core_type<tc>, window_params = [{transform_indices = @transform_0, window_bounds = array<i64: 1, 8, 32>}, {transform_indices = @transform_1, window_bounds = array<i64: 1, 16, 32>}, {transform_indices = @transform_2, window_bounds = array<i64: 1, 1, 16>}, {pipeline_mode = #tpu.pipeline_mode<synchronous>, transform_indices = @transform_3, window_bounds = array<i64: 1, 32>}, {pipeline_mode = #tpu.pipeline_mode<synchronous>, transform_indices = @transform_4, window_bounds = array<i64: 1, 32>}, {pipeline_mode = #tpu.pipeline_mode<synchronous>, transform_indices = @transform_5, window_bounds = array<i64: 32, 32>}, {pipeline_mode = #tpu.pipeline_mode<synchronous>, transform_indices = @transform_6, window_bounds = array<i64: 1, 32>}, {pipeline_mode = #tpu.pipeline_mode<synchronous>, transform_indices = @transform_7, window_bounds = array<i64: 32, 32>}, {pipeline_mode = #tpu.pipeline_mode<synchronous>, transform_indices = @transform_8, window_bounds = array<i64: 1, 32>}, {pipeline_mode = #tpu.pipeline_mode<synchronous>, transform_indices = @transform_9, window_bounds = array<i64: 32, 32>}, {pipeline_mode = #tpu.pipeline_mode<synchronous>, transform_indices = @transform_10, window_bounds = array<i64: 1, 32>}, {pipeline_mode = #tpu.pipeline_mode<synchronous>, transform_indices = @transform_11, window_bounds = array<i64: 32, 32>}, {pipeline_mode = #tpu.pipeline_mode<synchronous>, transform_indices = @transform_12, window_bounds = array<i64: 1, 32>}, {pipeline_mode = #tpu.pipeline_mode<synchronous>, transform_indices = @transform_13, window_bounds = array<i64: 1, 32>}, {pipeline_mode = #tpu.pipeline_mode<synchronous>, transform_indices = @transform_14, window_bounds = array<i64: 1, 32>}, {pipeline_mode = #tpu.pipeline_mode<synchronous>, transform_indices = @transform_15, window_bounds = array<i64: 32, 32>}, {pipeline_mode = #tpu.pipeline_mode<synchronous>, transform_indices = @transform_16, window_bounds = array<i64: 1, 32>}, {pipeline_mode = #tpu.pipeline_mode<synchronous>, transform_indices = @transform_17, window_bounds = array<i64: 32, 32>}, {pipeline_mode = #tpu.pipeline_mode<synchronous>, transform_indices = @transform_18, window_bounds = array<i64: 1, 32>}, {pipeline_mode = #tpu.pipeline_mode<synchronous>, transform_indices = @transform_19, window_bounds = array<i64: 32, 32>}, {pipeline_mode = #tpu.pipeline_mode<synchronous>, transform_indices = @transform_20, window_bounds = array<i64: 1, 32>}, {pipeline_mode = #tpu.pipeline_mode<synchronous>, transform_indices = @transform_21, window_bounds = array<i64: 32, 32>}, {pipeline_mode = #tpu.pipeline_mode<synchronous>, transform_indices = @transform_22, window_bounds = array<i64: 1, 32>}, {pipeline_mode = #tpu.pipeline_mode<synchronous>, transform_indices = @transform_23, window_bounds = array<i64: 1, 32>}, {pipeline_mode = #tpu.pipeline_mode<synchronous>, transform_indices = @transform_24, window_bounds = array<i64: 1, 32>}, {pipeline_mode = #tpu.pipeline_mode<synchronous>, transform_indices = @transform_25, window_bounds = array<i64: 32, 64>}, {pipeline_mode = #tpu.pipeline_mode<synchronous>, transform_indices = @transform_26, window_bounds = array<i64: 1, 64>}, {pipeline_mode = #tpu.pipeline_mode<synchronous>, transform_indices = @transform_27, window_bounds = array<i64: 64, 32>}, {pipeline_mode = #tpu.pipeline_mode<synchronous>, transform_indices = @transform_28, window_bounds = array<i64: 1, 32>}, {transform_indices = @transform_29, window_bounds = array<i64: 1, 8, 32>}]} {
    %c0 = arith.constant 0 : index
    %c0_0 = arith.constant 0 : index
    %c0_1 = arith.constant 0 : index
    %0 = vector.load %arg1[%c0, %c0_0, %c0_1] : memref<1x8x32xf32, #tpu.memory_space<vmem>>, vector<1x8x32xf32>
    %1 = vector.shape_cast %0 : vector<1x8x32xf32> to vector<8x32xf32>
    %2 = tpu.iota {dimensions = array<i32: 0>} : vector<8x8xi32>
    %3 = tpu.iota {dimensions = array<i32: 1>} : vector<8x8xi32>
    %4 = arith.cmpi sle, %3, %2 : vector<8x8xi32>
    %c0_2 = arith.constant 0 : index
    %c0_3 = arith.constant 0 : index
    %c0_4 = arith.constant 0 : index
    %5 = vector.load %arg3[%c0_2, %c0_3, %c0_4] : memref<1x1x16xi32, #tpu.memory_space<vmem>>, vector<1x1x16xi32>
    %6 = vector.shape_cast %5 : vector<1x1x16xi32> to vector<1x16xi32>
    %c0_i32 = arith.constant 0 : i32
    %7 = vector.broadcast %c0_i32 : i32 to vector<1x16xi32>
    %8 = arith.cmpi ne, %6, %7 : vector<1x16xi32>
    %c0_5 = arith.constant 0 : index
    %c0_6 = arith.constant 0 : index
    %c0_7 = arith.constant 0 : index
    %9 = vector.load %arg2[%c0_5, %c0_6, %c0_7] : memref<1x16x32xf32, #tpu.memory_space<vmem>>, vector<1x16x32xf32>
    %10 = vector.shape_cast %9 : vector<1x16x32xf32> to vector<16x32xf32>
    %11 = arith.truncf %10 : vector<16x32xf32> to vector<16x32xbf16>
    %c0_8 = arith.constant 0 : index
    %c0_9 = arith.constant 0 : index
    %12 = vector.load %arg4[%c0_8, %c0_9] : memref<1x32xf32, #tpu.memory_space<vmem>>, vector<1x32xf32>
    %c0_10 = arith.constant 0 : index
    %c0_11 = arith.constant 0 : index
    %13 = vector.load %arg5[%c0_10, %c0_11] : memref<1x32xf32, #tpu.memory_space<vmem>>, vector<1x32xf32>
    %cst = arith.constant dense<0.000000e+00> : vector<8xf32>
    %14 = vector.multi_reduction <add>, %1, %cst [1] : vector<8x32xf32> to vector<8xf32>
    %15 = vector.shape_cast %14 : vector<8xf32> to vector<8x1xf32>
    %cst_12 = arith.constant 3.200000e+01 : f32
    %16 = vector.broadcast %cst_12 : f32 to vector<8x1xf32>
    %17 = arith.divf %15, %16 : vector<8x1xf32>
    %18 = vector.broadcast %17 : vector<8x1xf32> to vector<8x32xf32>
    %19 = arith.subf %1, %18 : vector<8x32xf32>
    %20 = arith.mulf %19, %19 : vector<8x32xf32>
    %cst_13 = arith.constant dense<0.000000e+00> : vector<8xf32>
    %21 = vector.multi_reduction <add>, %20, %cst_13 [1] : vector<8x32xf32> to vector<8xf32>
    %22 = vector.shape_cast %21 : vector<8xf32> to vector<8x1xf32>
    %cst_14 = arith.constant 0.0322580636 : f32
    %23 = vector.broadcast %cst_14 : f32 to vector<8x1xf32>
    %24 = arith.mulf %22, %23 : vector<8x1xf32>
    %25 = math.sqrt %24 : vector<8x1xf32>
    %cst_15 = arith.constant 9.99999997E-7 : f32
    %26 = vector.broadcast %cst_15 : f32 to vector<8x1xf32>
    %27 = arith.addf %25, %26 : vector<8x1xf32>
    %28 = tpu.reciprocal %27 {approx = true} : vector<8x1xf32> -> vector<8x1xf32>
    %29 = vector.broadcast %12 : vector<1x32xf32> to vector<8x32xf32>
    %30 = arith.mulf %29, %19 : vector<8x32xf32>
    %31 = vector.broadcast %28 : vector<8x1xf32> to vector<8x32xf32>
    %32 = arith.mulf %30, %31 : vector<8x32xf32>
    %33 = vector.broadcast %13 : vector<1x32xf32> to vector<8x32xf32>
    %34 = arith.addf %32, %33 : vector<8x32xf32>
    %35 = arith.truncf %34 : vector<8x32xf32> to vector<8x32xbf16>
    %c0_16 = arith.constant 0 : index
    %c0_17 = arith.constant 0 : index
    %36 = vector.load %arg6[%c0_16, %c0_17] : memref<32x32xbf16, #tpu.memory_space<vmem>>, vector<32x32xbf16>
    %cst_18 = arith.constant dense<0.000000e+00> : vector<8x32xf32>
    %37 = tpu.matmul %35, %36, %cst_18 {dimension_numbers = #tpu.dot_dimension_numbers<[1], [0], [0], [1], [0, 0, 1, 1], [], []>} : vector<8x32xbf16>, vector<32x32xbf16>, vector<8x32xf32> -> vector<8x32xf32>
    %c0_19 = arith.constant 0 : index
    %c0_20 = arith.constant 0 : index
    %38 = vector.load %arg7[%c0_19, %c0_20] : memref<1x32xf32, #tpu.memory_space<vmem>>, vector<1x32xf32>
    %39 = vector.broadcast %38 : vector<1x32xf32> to vector<8x32xf32>
    %40 = arith.addf %37, %39 : vector<8x32xf32>
    %c0_21 = arith.constant 0 : index
    %c0_22 = arith.constant 0 : index
    %41 = vector.load %arg8[%c0_21, %c0_22] : memref<32x32xbf16, #tpu.memory_space<vmem>>, vector<32x32xbf16>
    %cst_23 = arith.constant dense<0.000000e+00> : vector<8x32xf32>
    %42 = tpu.matmul %35, %41, %cst_23 {dimension_numbers = #tpu.dot_dimension_numbers<[1], [0], [0], [1], [0, 0, 1, 1], [], []>} : vector<8x32xbf16>, vector<32x32xbf16>, vector<8x32xf32> -> vector<8x32xf32>
    %c0_24 = arith.constant 0 : index
    %c0_25 = arith.constant 0 : index
    %43 = vector.load %arg9[%c0_24, %c0_25] : memref<1x32xf32, #tpu.memory_space<vmem>>, vector<1x32xf32>
    %44 = vector.broadcast %43 : vector<1x32xf32> to vector<8x32xf32>
    %45 = arith.addf %42, %44 : vector<8x32xf32>
    %c0_26 = arith.constant 0 : index
    %c0_27 = arith.constant 0 : index
    %46 = vector.load %arg10[%c0_26, %c0_27] : memref<32x32xbf16, #tpu.memory_space<vmem>>, vector<32x32xbf16>
    %cst_28 = arith.constant dense<0.000000e+00> : vector<8x32xf32>
    %47 = tpu.matmul %35, %46, %cst_28 {dimension_numbers = #tpu.dot_dimension_numbers<[1], [0], [0], [1], [0, 0, 1, 1], [], []>} : vector<8x32xbf16>, vector<32x32xbf16>, vector<8x32xf32> -> vector<8x32xf32>
    %c0_29 = arith.constant 0 : index
    %c0_30 = arith.constant 0 : index
    %48 = vector.load %arg11[%c0_29, %c0_30] : memref<1x32xf32, #tpu.memory_space<vmem>>, vector<1x32xf32>
    %49 = vector.broadcast %48 : vector<1x32xf32> to vector<8x32xf32>
    %50 = arith.addf %47, %49 : vector<8x32xf32>
    %cst_31 = arith.constant 0.353553385 : f32
    %51 = vector.broadcast %cst_31 : f32 to vector<8x32xf32>
    %52 = arith.mulf %40, %51 : vector<8x32xf32>
    %53 = arith.truncf %52 : vector<8x32xf32> to vector<8x32xbf16>
    %54 = arith.truncf %45 : vector<8x32xf32> to vector<8x32xbf16>
    %55 = arith.truncf %50 : vector<8x32xf32> to vector<8x32xbf16>
    %56 = vector.extract_strided_slice %53 {offsets = [0, 0], sizes = [8, 8], strides = [1, 1]} : vector<8x32xbf16> to vector<8x8xbf16>
    %57 = vector.extract_strided_slice %54 {offsets = [0, 0], sizes = [8, 8], strides = [1, 1]} : vector<8x32xbf16> to vector<8x8xbf16>
    %cst_32 = arith.constant dense<0.000000e+00> : vector<8x8xf32>
    %58 = tpu.matmul %56, %57, %cst_32 {dimension_numbers = #tpu.dot_dimension_numbers<[1], [1], [0], [0], [0, 0, 1, 0], [], []>} : vector<8x8xbf16>, vector<8x8xbf16>, vector<8x8xf32> -> vector<8x8xf32>
    %cst_33 = arith.constant -1.000000e+09 : f32
    %59 = vector.broadcast %cst_33 : f32 to vector<8x8xf32>
    %60 = arith.select %4, %58, %59 : vector<8x8xi1>, vector<8x8xf32>
    %cst_34 = arith.constant dense<0xFF800000> : vector<8xf32>
    %61 = vector.multi_reduction <maximumf>, %60, %cst_34 [1] : vector<8x8xf32> to vector<8xf32>
    %62 = vector.shape_cast %61 : vector<8xf32> to vector<8x1xf32>
    %63 = vector.broadcast %62 : vector<8x1xf32> to vector<8x8xf32>
    %64 = arith.subf %60, %63 : vector<8x8xf32>
    %65 = math.exp %64 : vector<8x8xf32>
    %cst_35 = arith.constant dense<0.000000e+00> : vector<8xf32>
    %66 = vector.multi_reduction <add>, %65, %cst_35 [1] : vector<8x8xf32> to vector<8xf32>
    %67 = vector.shape_cast %66 : vector<8xf32> to vector<8x1xf32>
    %68 = tpu.reciprocal %67 {approx = true} : vector<8x1xf32> -> vector<8x1xf32>
    %69 = vector.broadcast %68 : vector<8x1xf32> to vector<8x8xf32>
    %70 = arith.mulf %65, %69 : vector<8x8xf32>
    %71 = arith.truncf %70 : vector<8x8xf32> to vector<8x8xbf16>
    %72 = vector.extract_strided_slice %55 {offsets = [0, 0], sizes = [8, 8], strides = [1, 1]} : vector<8x32xbf16> to vector<8x8xbf16>
    %cst_36 = arith.constant dense<0.000000e+00> : vector<8x8xf32>
    %73 = tpu.matmul %71, %72, %cst_36 {dimension_numbers = #tpu.dot_dimension_numbers<[1], [0], [0], [1], [0, 0, 1, 1], [], []>} : vector<8x8xbf16>, vector<8x8xbf16>, vector<8x8xf32> -> vector<8x8xf32>
    %c0_37 = arith.constant 0 : index
    %c0_38 = arith.constant 0 : index
    %74 = vector.load %arg31[%c0_37, %c0_38] : memref<8x32xf32, #tpu.memory_space<vmem>>, vector<8x8xf32>
    tpu.vector_store %arg31[%c0_37, %c0_38], %73 {strides = array<i32>} : memref<8x32xf32, #tpu.memory_space<vmem>>, vector<8x8xf32>,
    %75 = vector.extract_strided_slice %53 {offsets = [0, 8], sizes = [8, 8], strides = [1, 1]} : vector<8x32xbf16> to vector<8x8xbf16>
    %76 = vector.extract_strided_slice %54 {offsets = [0, 8], sizes = [8, 8], strides = [1, 1]} : vector<8x32xbf16> to vector<8x8xbf16>
    %cst_39 = arith.constant dense<0.000000e+00> : vector<8x8xf32>
    %77 = tpu.matmul %75, %76, %cst_39 {dimension_numbers = #tpu.dot_dimension_numbers<[1], [1], [0], [0], [0, 0, 1, 0], [], []>} : vector<8x8xbf16>, vector<8x8xbf16>, vector<8x8xf32> -> vector<8x8xf32>
    %cst_40 = arith.constant -1.000000e+09 : f32
    %78 = vector.broadcast %cst_40 : f32 to vector<8x8xf32>
    %79 = arith.select %4, %77, %78 : vector<8x8xi1>, vector<8x8xf32>
    %cst_41 = arith.constant dense<0xFF800000> : vector<8xf32>
    %80 = vector.multi_reduction <maximumf>, %79, %cst_41 [1] : vector<8x8xf32> to vector<8xf32>
    %81 = vector.shape_cast %80 : vector<8xf32> to vector<8x1xf32>
    %82 = vector.broadcast %81 : vector<8x1xf32> to vector<8x8xf32>
    %83 = arith.subf %79, %82 : vector<8x8xf32>
    %84 = math.exp %83 : vector<8x8xf32>
    %cst_42 = arith.constant dense<0.000000e+00> : vector<8xf32>
    %85 = vector.multi_reduction <add>, %84, %cst_42 [1] : vector<8x8xf32> to vector<8xf32>
    %86 = vector.shape_cast %85 : vector<8xf32> to vector<8x1xf32>
    %87 = tpu.reciprocal %86 {approx = true} : vector<8x1xf32> -> vector<8x1xf32>
    %88 = vector.broadcast %87 : vector<8x1xf32> to vector<8x8xf32>
    %89 = arith.mulf %84, %88 : vector<8x8xf32>
    %90 = arith.truncf %89 : vector<8x8xf32> to vector<8x8xbf16>
    %91 = vector.extract_strided_slice %55 {offsets = [0, 8], sizes = [8, 8], strides = [1, 1]} : vector<8x32xbf16> to vector<8x8xbf16>
    %cst_43 = arith.constant dense<0.000000e+00> : vector<8x8xf32>
    %92 = tpu.matmul %90, %91, %cst_43 {dimension_numbers = #tpu.dot_dimension_numbers<[1], [0], [0], [1], [0, 0, 1, 1], [], []>} : vector<8x8xbf16>, vector<8x8xbf16>, vector<8x8xf32> -> vector<8x8xf32>
    %c0_44 = arith.constant 0 : index
    %c8 = arith.constant 8 : index
    %93 = vector.load %arg31[%c0_44, %c8] : memref<8x32xf32, #tpu.memory_space<vmem>>, vector<8x8xf32>
    tpu.vector_store %arg31[%c0_44, %c8], %92 {strides = array<i32>} : memref<8x32xf32, #tpu.memory_space<vmem>>, vector<8x8xf32>,
    %94 = vector.extract_strided_slice %53 {offsets = [0, 16], sizes = [8, 8], strides = [1, 1]} : vector<8x32xbf16> to vector<8x8xbf16>
    %95 = vector.extract_strided_slice %54 {offsets = [0, 16], sizes = [8, 8], strides = [1, 1]} : vector<8x32xbf16> to vector<8x8xbf16>
    %cst_45 = arith.constant dense<0.000000e+00> : vector<8x8xf32>
    %96 = tpu.matmul %94, %95, %cst_45 {dimension_numbers = #tpu.dot_dimension_numbers<[1], [1], [0], [0], [0, 0, 1, 0], [], []>} : vector<8x8xbf16>, vector<8x8xbf16>, vector<8x8xf32> -> vector<8x8xf32>
    %cst_46 = arith.constant -1.000000e+09 : f32
    %97 = vector.broadcast %cst_46 : f32 to vector<8x8xf32>
    %98 = arith.select %4, %96, %97 : vector<8x8xi1>, vector<8x8xf32>
    %cst_47 = arith.constant dense<0xFF800000> : vector<8xf32>
    %99 = vector.multi_reduction <maximumf>, %98, %cst_47 [1] : vector<8x8xf32> to vector<8xf32>
    %100 = vector.shape_cast %99 : vector<8xf32> to vector<8x1xf32>
    %101 = vector.broadcast %100 : vector<8x1xf32> to vector<8x8xf32>
    %102 = arith.subf %98, %101 : vector<8x8xf32>
    %103 = math.exp %102 : vector<8x8xf32>
    %cst_48 = arith.constant dense<0.000000e+00> : vector<8xf32>
    %104 = vector.multi_reduction <add>, %103, %cst_48 [1] : vector<8x8xf32> to vector<8xf32>
    %105 = vector.shape_cast %104 : vector<8xf32> to vector<8x1xf32>
    %106 = tpu.reciprocal %105 {approx = true} : vector<8x1xf32> -> vector<8x1xf32>
    %107 = vector.broadcast %106 : vector<8x1xf32> to vector<8x8xf32>
    %108 = arith.mulf %103, %107 : vector<8x8xf32>
    %109 = arith.truncf %108 : vector<8x8xf32> to vector<8x8xbf16>
    %110 = vector.extract_strided_slice %55 {offsets = [0, 16], sizes = [8, 8], strides = [1, 1]} : vector<8x32xbf16> to vector<8x8xbf16>
    %cst_49 = arith.constant dense<0.000000e+00> : vector<8x8xf32>
    %111 = tpu.matmul %109, %110, %cst_49 {dimension_numbers = #tpu.dot_dimension_numbers<[1], [0], [0], [1], [0, 0, 1, 1], [], []>} : vector<8x8xbf16>, vector<8x8xbf16>, vector<8x8xf32> -> vector<8x8xf32>
    %c0_50 = arith.constant 0 : index
    %c16 = arith.constant 16 : index
    %112 = vector.load %arg31[%c0_50, %c16] : memref<8x32xf32, #tpu.memory_space<vmem>>, vector<8x8xf32>
    tpu.vector_store %arg31[%c0_50, %c16], %111 {strides = array<i32>} : memref<8x32xf32, #tpu.memory_space<vmem>>, vector<8x8xf32>,
    %113 = vector.extract_strided_slice %53 {offsets = [0, 24], sizes = [8, 8], strides = [1, 1]} : vector<8x32xbf16> to vector<8x8xbf16>
    %114 = vector.extract_strided_slice %54 {offsets = [0, 24], sizes = [8, 8], strides = [1, 1]} : vector<8x32xbf16> to vector<8x8xbf16>
    %cst_51 = arith.constant dense<0.000000e+00> : vector<8x8xf32>
    %115 = tpu.matmul %113, %114, %cst_51 {dimension_numbers = #tpu.dot_dimension_numbers<[1], [1], [0], [0], [0, 0, 1, 0], [], []>} : vector<8x8xbf16>, vector<8x8xbf16>, vector<8x8xf32> -> vector<8x8xf32>
    %cst_52 = arith.constant -1.000000e+09 : f32
    %116 = vector.broadcast %cst_52 : f32 to vector<8x8xf32>
    %117 = arith.select %4, %115, %116 : vector<8x8xi1>, vector<8x8xf32>
    %cst_53 = arith.constant dense<0xFF800000> : vector<8xf32>
    %118 = vector.multi_reduction <maximumf>, %117, %cst_53 [1] : vector<8x8xf32> to vector<8xf32>
    %119 = vector.shape_cast %118 : vector<8xf32> to vector<8x1xf32>
    %120 = vector.broadcast %119 : vector<8x1xf32> to vector<8x8xf32>
    %121 = arith.subf %117, %120 : vector<8x8xf32>
    %122 = math.exp %121 : vector<8x8xf32>
    %cst_54 = arith.constant dense<0.000000e+00> : vector<8xf32>
    %123 = vector.multi_reduction <add>, %122, %cst_54 [1] : vector<8x8xf32> to vector<8xf32>
    %124 = vector.shape_cast %123 : vector<8xf32> to vector<8x1xf32>
    %125 = tpu.reciprocal %124 {approx = true} : vector<8x1xf32> -> vector<8x1xf32>
    %126 = vector.broadcast %125 : vector<8x1xf32> to vector<8x8xf32>
    %127 = arith.mulf %122, %126 : vector<8x8xf32>
    %128 = arith.truncf %127 : vector<8x8xf32> to vector<8x8xbf16>
    %129 = vector.extract_strided_slice %55 {offsets = [0, 24], sizes = [8, 8], strides = [1, 1]} : vector<8x32xbf16> to vector<8x8xbf16>
    %cst_55 = arith.constant dense<0.000000e+00> : vector<8x8xf32>
    %130 = tpu.matmul %128, %129, %cst_55 {dimension_numbers = #tpu.dot_dimension_numbers<[1], [0], [0], [1], [0, 0, 1, 1], [], []>} : vector<8x8xbf16>, vector<8x8xbf16>, vector<8x8xf32> -> vector<8x8xf32>
    %c0_56 = arith.constant 0 : index
    %c24 = arith.constant 24 : index
    %131 = vector.load %arg31[%c0_56, %c24] : memref<8x32xf32, #tpu.memory_space<vmem>>, vector<8x8xf32>
    tpu.vector_store %arg31[%c0_56, %c24], %130 {strides = array<i32>} : memref<8x32xf32, #tpu.memory_space<vmem>>, vector<8x8xf32>,
    %c0_57 = arith.constant 0 : index
    %c0_58 = arith.constant 0 : index
    %132 = vector.load %arg31[%c0_57, %c0_58] : memref<8x32xf32, #tpu.memory_space<vmem>>, vector<8x32xf32>
    %133 = arith.truncf %132 : vector<8x32xf32> to vector<8x32xbf16>
    %c0_59 = arith.constant 0 : index
    %c0_60 = arith.constant 0 : index
    %134 = vector.load %arg12[%c0_59, %c0_60] : memref<32x32xbf16, #tpu.memory_space<vmem>>, vector<32x32xbf16>
    %cst_61 = arith.constant dense<0.000000e+00> : vector<8x32xf32>
    %135 = tpu.matmul %133, %134, %cst_61 {dimension_numbers = #tpu.dot_dimension_numbers<[1], [0], [0], [1], [0, 0, 1, 1], [], []>} : vector<8x32xbf16>, vector<32x32xbf16>, vector<8x32xf32> -> vector<8x32xf32>
    %c0_62 = arith.constant 0 : index
    %c0_63 = arith.constant 0 : index
    %136 = vector.load %arg13[%c0_62, %c0_63] : memref<1x32xf32, #tpu.memory_space<vmem>>, vector<1x32xf32>
    %137 = vector.broadcast %136 : vector<1x32xf32> to vector<8x32xf32>
    %138 = arith.addf %135, %137 : vector<8x32xf32>
    %139 = arith.addf %1, %138 : vector<8x32xf32>
    %c0_64 = arith.constant 0 : index
    %c0_65 = arith.constant 0 : index
    %140 = vector.load %arg14[%c0_64, %c0_65] : memref<1x32xf32, #tpu.memory_space<vmem>>, vector<1x32xf32>
    %c0_66 = arith.constant 0 : index
    %c0_67 = arith.constant 0 : index
    %141 = vector.load %arg15[%c0_66, %c0_67] : memref<1x32xf32, #tpu.memory_space<vmem>>, vector<1x32xf32>
    %cst_68 = arith.constant dense<0.000000e+00> : vector<8xf32>
    %142 = vector.multi_reduction <add>, %139, %cst_68 [1] : vector<8x32xf32> to vector<8xf32>
    %143 = vector.shape_cast %142 : vector<8xf32> to vector<8x1xf32>
    %cst_69 = arith.constant 3.200000e+01 : f32
    %144 = vector.broadcast %cst_69 : f32 to vector<8x1xf32>
    %145 = arith.divf %143, %144 : vector<8x1xf32>
    %146 = vector.broadcast %145 : vector<8x1xf32> to vector<8x32xf32>
    %147 = arith.subf %139, %146 : vector<8x32xf32>
    %148 = arith.mulf %147, %147 : vector<8x32xf32>
    %cst_70 = arith.constant dense<0.000000e+00> : vector<8xf32>
    %149 = vector.multi_reduction <add>, %148, %cst_70 [1] : vector<8x32xf32> to vector<8xf32>
    %150 = vector.shape_cast %149 : vector<8xf32> to vector<8x1xf32>
    %cst_71 = arith.constant 0.0322580636 : f32
    %151 = vector.broadcast %cst_71 : f32 to vector<8x1xf32>
    %152 = arith.mulf %150, %151 : vector<8x1xf32>
    %153 = math.sqrt %152 : vector<8x1xf32>
    %cst_72 = arith.constant 9.99999997E-7 : f32
    %154 = vector.broadcast %cst_72 : f32 to vector<8x1xf32>
    %155 = arith.addf %153, %154 : vector<8x1xf32>
    %156 = tpu.reciprocal %155 {approx = true} : vector<8x1xf32> -> vector<8x1xf32>
    %157 = vector.broadcast %140 : vector<1x32xf32> to vector<8x32xf32>
    %158 = arith.mulf %157, %147 : vector<8x32xf32>
    %159 = vector.broadcast %156 : vector<8x1xf32> to vector<8x32xf32>
    %160 = arith.mulf %158, %159 : vector<8x32xf32>
    %161 = vector.broadcast %141 : vector<1x32xf32> to vector<8x32xf32>
    %162 = arith.addf %160, %161 : vector<8x32xf32>
    %163 = arith.truncf %162 : vector<8x32xf32> to vector<8x32xbf16>
    %c0_73 = arith.constant 0 : index
    %c0_74 = arith.constant 0 : index
    %164 = vector.load %arg16[%c0_73, %c0_74] : memref<32x32xbf16, #tpu.memory_space<vmem>>, vector<32x32xbf16>
    %cst_75 = arith.constant dense<0.000000e+00> : vector<8x32xf32>
    %165 = tpu.matmul %163, %164, %cst_75 {dimension_numbers = #tpu.dot_dimension_numbers<[1], [0], [0], [1], [0, 0, 1, 1], [], []>} : vector<8x32xbf16>, vector<32x32xbf16>, vector<8x32xf32> -> vector<8x32xf32>
    %c0_76 = arith.constant 0 : index
    %c0_77 = arith.constant 0 : index
    %166 = vector.load %arg17[%c0_76, %c0_77] : memref<1x32xf32, #tpu.memory_space<vmem>>, vector<1x32xf32>
    %167 = vector.broadcast %166 : vector<1x32xf32> to vector<8x32xf32>
    %168 = arith.addf %165, %167 : vector<8x32xf32>
    %c0_78 = arith.constant 0 : index
    %c0_79 = arith.constant 0 : index
    %169 = vector.load %arg18[%c0_78, %c0_79] : memref<32x32xbf16, #tpu.memory_space<vmem>>, vector<32x32xbf16>
    %cst_80 = arith.constant dense<0.000000e+00> : vector<16x32xf32>
    %170 = tpu.matmul %11, %169, %cst_80 {dimension_numbers = #tpu.dot_dimension_numbers<[1], [0], [0], [1], [0, 0, 1, 1], [], []>} : vector<16x32xbf16>, vector<32x32xbf16>, vector<16x32xf32> -> vector<16x32xf32>
    %c0_81 = arith.constant 0 : index
    %c0_82 = arith.constant 0 : index
    %171 = vector.load %arg19[%c0_81, %c0_82] : memref<1x32xf32, #tpu.memory_space<vmem>>, vector<1x32xf32>
    %172 = vector.broadcast %171 : vector<1x32xf32> to vector<16x32xf32>
    %173 = arith.addf %170, %172 : vector<16x32xf32>
    %c0_83 = arith.constant 0 : index
    %c0_84 = arith.constant 0 : index
    %174 = vector.load %arg20[%c0_83, %c0_84] : memref<32x32xbf16, #tpu.memory_space<vmem>>, vector<32x32xbf16>
    %cst_85 = arith.constant dense<0.000000e+00> : vector<16x32xf32>
    %175 = tpu.matmul %11, %174, %cst_85 {dimension_numbers = #tpu.dot_dimension_numbers<[1], [0], [0], [1], [0, 0, 1, 1], [], []>} : vector<16x32xbf16>, vector<32x32xbf16>, vector<16x32xf32> -> vector<16x32xf32>
    %c0_86 = arith.constant 0 : index
    %c0_87 = arith.constant 0 : index
    %176 = vector.load %arg21[%c0_86, %c0_87] : memref<1x32xf32, #tpu.memory_space<vmem>>, vector<1x32xf32>
    %177 = vector.broadcast %176 : vector<1x32xf32> to vector<16x32xf32>
    %178 = arith.addf %175, %177 : vector<16x32xf32>
    %cst_88 = arith.constant 0.353553385 : f32
    %179 = vector.broadcast %cst_88 : f32 to vector<8x32xf32>
    %180 = arith.mulf %168, %179 : vector<8x32xf32>
    %181 = arith.truncf %180 : vector<8x32xf32> to vector<8x32xbf16>
    %182 = arith.truncf %173 : vector<16x32xf32> to vector<16x32xbf16>
    %183 = arith.truncf %178 : vector<16x32xf32> to vector<16x32xbf16>
    %184 = vector.extract_strided_slice %181 {offsets = [0, 0], sizes = [8, 8], strides = [1, 1]} : vector<8x32xbf16> to vector<8x8xbf16>
    %185 = vector.extract_strided_slice %182 {offsets = [0, 0], sizes = [16, 8], strides = [1, 1]} : vector<16x32xbf16> to vector<16x8xbf16>
    %cst_89 = arith.constant dense<0.000000e+00> : vector<8x16xf32>
    %186 = tpu.matmul %184, %185, %cst_89 {dimension_numbers = #tpu.dot_dimension_numbers<[1], [1], [0], [0], [0, 0, 1, 0], [], []>} : vector<8x8xbf16>, vector<16x8xbf16>, vector<8x16xf32> -> vector<8x16xf32>
    %cst_90 = arith.constant -1.000000e+09 : f32
    %187 = vector.shape_cast %8 : vector<1x16xi1> to vector<1x16xi1>
    %188 = vector.broadcast %187 : vector<1x16xi1> to vector<8x16xi1>
    %189 = vector.broadcast %cst_90 : f32 to vector<8x16xf32>
    %190 = arith.select %188, %186, %189 : vector<8x16xi1>, vector<8x16xf32>
    %cst_91 = arith.constant dense<0xFF800000> : vector<8xf32>
    %191 = vector.multi_reduction <maximumf>, %190, %cst_91 [1] : vector<8x16xf32> to vector<8xf32>
    %192 = vector.shape_cast %191 : vector<8xf32> to vector<8x1xf32>
    %193 = vector.broadcast %192 : vector<8x1xf32> to vector<8x16xf32>
    %194 = arith.subf %190, %193 : vector<8x16xf32>
    %195 = math.exp %194 : vector<8x16xf32>
    %cst_92 = arith.constant dense<0.000000e+00> : vector<8xf32>
    %196 = vector.multi_reduction <add>, %195, %cst_92 [1] : vector<8x16xf32> to vector<8xf32>
    %197 = vector.shape_cast %196 : vector<8xf32> to vector<8x1xf32>
    %198 = tpu.reciprocal %197 {approx = true} : vector<8x1xf32> -> vector<8x1xf32>
    %199 = vector.broadcast %198 : vector<8x1xf32> to vector<8x16xf32>
    %200 = arith.mulf %195, %199 : vector<8x16xf32>
    %201 = arith.truncf %200 : vector<8x16xf32> to vector<8x16xbf16>
    %202 = vector.extract_strided_slice %183 {offsets = [0, 0], sizes = [16, 8], strides = [1, 1]} : vector<16x32xbf16> to vector<16x8xbf16>
    %cst_93 = arith.constant dense<0.000000e+00> : vector<8x8xf32>
    %203 = tpu.matmul %201, %202, %cst_93 {dimension_numbers = #tpu.dot_dimension_numbers<[1], [0], [0], [1], [0, 0, 1, 1], [], []>} : vector<8x16xbf16>, vector<16x8xbf16>, vector<8x8xf32> -> vector<8x8xf32>
    %c0_94 = arith.constant 0 : index
    %c0_95 = arith.constant 0 : index
    %204 = vector.load %arg31[%c0_94, %c0_95] : memref<8x32xf32, #tpu.memory_space<vmem>>, vector<8x8xf32>
    tpu.vector_store %arg31[%c0_94, %c0_95], %203 {strides = array<i32>} : memref<8x32xf32, #tpu.memory_space<vmem>>, vector<8x8xf32>,
    %205 = vector.extract_strided_slice %181 {offsets = [0, 8], sizes = [8, 8], strides = [1, 1]} : vector<8x32xbf16> to vector<8x8xbf16>
    %206 = vector.extract_strided_slice %182 {offsets = [0, 8], sizes = [16, 8], strides = [1, 1]} : vector<16x32xbf16> to vector<16x8xbf16>
    %cst_96 = arith.constant dense<0.000000e+00> : vector<8x16xf32>
    %207 = tpu.matmul %205, %206, %cst_96 {dimension_numbers = #tpu.dot_dimension_numbers<[1], [1], [0], [0], [0, 0, 1, 0], [], []>} : vector<8x8xbf16>, vector<16x8xbf16>, vector<8x16xf32> -> vector<8x16xf32>
    %cst_97 = arith.constant -1.000000e+09 : f32
    %208 = vector.shape_cast %8 : vector<1x16xi1> to vector<1x16xi1>
    %209 = vector.broadcast %208 : vector<1x16xi1> to vector<8x16xi1>
    %210 = vector.broadcast %cst_97 : f32 to vector<8x16xf32>
    %211 = arith.select %209, %207, %210 : vector<8x16xi1>, vector<8x16xf32>
    %cst_98 = arith.constant dense<0xFF800000> : vector<8xf32>
    %212 = vector.multi_reduction <maximumf>, %211, %cst_98 [1] : vector<8x16xf32> to vector<8xf32>
    %213 = vector.shape_cast %212 : vector<8xf32> to vector<8x1xf32>
    %214 = vector.broadcast %213 : vector<8x1xf32> to vector<8x16xf32>
    %215 = arith.subf %211, %214 : vector<8x16xf32>
    %216 = math.exp %215 : vector<8x16xf32>
    %cst_99 = arith.constant dense<0.000000e+00> : vector<8xf32>
    %217 = vector.multi_reduction <add>, %216, %cst_99 [1] : vector<8x16xf32> to vector<8xf32>
    %218 = vector.shape_cast %217 : vector<8xf32> to vector<8x1xf32>
    %219 = tpu.reciprocal %218 {approx = true} : vector<8x1xf32> -> vector<8x1xf32>
    %220 = vector.broadcast %219 : vector<8x1xf32> to vector<8x16xf32>
    %221 = arith.mulf %216, %220 : vector<8x16xf32>
    %222 = arith.truncf %221 : vector<8x16xf32> to vector<8x16xbf16>
    %223 = vector.extract_strided_slice %183 {offsets = [0, 8], sizes = [16, 8], strides = [1, 1]} : vector<16x32xbf16> to vector<16x8xbf16>
    %cst_100 = arith.constant dense<0.000000e+00> : vector<8x8xf32>
    %224 = tpu.matmul %222, %223, %cst_100 {dimension_numbers = #tpu.dot_dimension_numbers<[1], [0], [0], [1], [0, 0, 1, 1], [], []>} : vector<8x16xbf16>, vector<16x8xbf16>, vector<8x8xf32> -> vector<8x8xf32>
    %c0_101 = arith.constant 0 : index
    %c8_102 = arith.constant 8 : index
    %225 = vector.load %arg31[%c0_101, %c8_102] : memref<8x32xf32, #tpu.memory_space<vmem>>, vector<8x8xf32>
    tpu.vector_store %arg31[%c0_101, %c8_102], %224 {strides = array<i32>} : memref<8x32xf32, #tpu.memory_space<vmem>>, vector<8x8xf32>,
    %226 = vector.extract_strided_slice %181 {offsets = [0, 16], sizes = [8, 8], strides = [1, 1]} : vector<8x32xbf16> to vector<8x8xbf16>
    %227 = vector.extract_strided_slice %182 {offsets = [0, 16], sizes = [16, 8], strides = [1, 1]} : vector<16x32xbf16> to vector<16x8xbf16>
    %cst_103 = arith.constant dense<0.000000e+00> : vector<8x16xf32>
    %228 = tpu.matmul %226, %227, %cst_103 {dimension_numbers = #tpu.dot_dimension_numbers<[1], [1], [0], [0], [0, 0, 1, 0], [], []>} : vector<8x8xbf16>, vector<16x8xbf16>, vector<8x16xf32> -> vector<8x16xf32>
    %cst_104 = arith.constant -1.000000e+09 : f32
    %229 = vector.shape_cast %8 : vector<1x16xi1> to vector<1x16xi1>
    %230 = vector.broadcast %229 : vector<1x16xi1> to vector<8x16xi1>
    %231 = vector.broadcast %cst_104 : f32 to vector<8x16xf32>
    %232 = arith.select %230, %228, %231 : vector<8x16xi1>, vector<8x16xf32>
    %cst_105 = arith.constant dense<0xFF800000> : vector<8xf32>
    %233 = vector.multi_reduction <maximumf>, %232, %cst_105 [1] : vector<8x16xf32> to vector<8xf32>
    %234 = vector.shape_cast %233 : vector<8xf32> to vector<8x1xf32>
    %235 = vector.broadcast %234 : vector<8x1xf32> to vector<8x16xf32>
    %236 = arith.subf %232, %235 : vector<8x16xf32>
    %237 = math.exp %236 : vector<8x16xf32>
    %cst_106 = arith.constant dense<0.000000e+00> : vector<8xf32>
    %238 = vector.multi_reduction <add>, %237, %cst_106 [1] : vector<8x16xf32> to vector<8xf32>
    %239 = vector.shape_cast %238 : vector<8xf32> to vector<8x1xf32>
    %240 = tpu.reciprocal %239 {approx = true} : vector<8x1xf32> -> vector<8x1xf32>
    %241 = vector.broadcast %240 : vector<8x1xf32> to vector<8x16xf32>
    %242 = arith.mulf %237, %241 : vector<8x16xf32>
    %243 = arith.truncf %242 : vector<8x16xf32> to vector<8x16xbf16>
    %244 = vector.extract_strided_slice %183 {offsets = [0, 16], sizes = [16, 8], strides = [1, 1]} : vector<16x32xbf16> to vector<16x8xbf16>
    %cst_107 = arith.constant dense<0.000000e+00> : vector<8x8xf32>
    %245 = tpu.matmul %243, %244, %cst_107 {dimension_numbers = #tpu.dot_dimension_numbers<[1], [0], [0], [1], [0, 0, 1, 1], [], []>} : vector<8x16xbf16>, vector<16x8xbf16>, vector<8x8xf32> -> vector<8x8xf32>
    %c0_108 = arith.constant 0 : index
    %c16_109 = arith.constant 16 : index
    %246 = vector.load %arg31[%c0_108, %c16_109] : memref<8x32xf32, #tpu.memory_space<vmem>>, vector<8x8xf32>
    tpu.vector_store %arg31[%c0_108, %c16_109], %245 {strides = array<i32>} : memref<8x32xf32, #tpu.memory_space<vmem>>, vector<8x8xf32>,
    %247 = vector.extract_strided_slice %181 {offsets = [0, 24], sizes = [8, 8], strides = [1, 1]} : vector<8x32xbf16> to vector<8x8xbf16>
    %248 = vector.extract_strided_slice %182 {offsets = [0, 24], sizes = [16, 8], strides = [1, 1]} : vector<16x32xbf16> to vector<16x8xbf16>
    %cst_110 = arith.constant dense<0.000000e+00> : vector<8x16xf32>
    %249 = tpu.matmul %247, %248, %cst_110 {dimension_numbers = #tpu.dot_dimension_numbers<[1], [1], [0], [0], [0, 0, 1, 0], [], []>} : vector<8x8xbf16>, vector<16x8xbf16>, vector<8x16xf32> -> vector<8x16xf32>
    %cst_111 = arith.constant -1.000000e+09 : f32
    %250 = vector.shape_cast %8 : vector<1x16xi1> to vector<1x16xi1>
    %251 = vector.broadcast %250 : vector<1x16xi1> to vector<8x16xi1>
    %252 = vector.broadcast %cst_111 : f32 to vector<8x16xf32>
    %253 = arith.select %251, %249, %252 : vector<8x16xi1>, vector<8x16xf32>
    %cst_112 = arith.constant dense<0xFF800000> : vector<8xf32>
    %254 = vector.multi_reduction <maximumf>, %253, %cst_112 [1] : vector<8x16xf32> to vector<8xf32>
    %255 = vector.shape_cast %254 : vector<8xf32> to vector<8x1xf32>
    %256 = vector.broadcast %255 : vector<8x1xf32> to vector<8x16xf32>
    %257 = arith.subf %253, %256 : vector<8x16xf32>
    %258 = math.exp %257 : vector<8x16xf32>
    %cst_113 = arith.constant dense<0.000000e+00> : vector<8xf32>
    %259 = vector.multi_reduction <add>, %258, %cst_113 [1] : vector<8x16xf32> to vector<8xf32>
    %260 = vector.shape_cast %259 : vector<8xf32> to vector<8x1xf32>
    %261 = tpu.reciprocal %260 {approx = true} : vector<8x1xf32> -> vector<8x1xf32>
    %262 = vector.broadcast %261 : vector<8x1xf32> to vector<8x16xf32>
    %263 = arith.mulf %258, %262 : vector<8x16xf32>
    %264 = arith.truncf %263 : vector<8x16xf32> to vector<8x16xbf16>
    %265 = vector.extract_strided_slice %183 {offsets = [0, 24], sizes = [16, 8], strides = [1, 1]} : vector<16x32xbf16> to vector<16x8xbf16>
    %cst_114 = arith.constant dense<0.000000e+00> : vector<8x8xf32>
    %266 = tpu.matmul %264, %265, %cst_114 {dimension_numbers = #tpu.dot_dimension_numbers<[1], [0], [0], [1], [0, 0, 1, 1], [], []>} : vector<8x16xbf16>, vector<16x8xbf16>, vector<8x8xf32> -> vector<8x8xf32>
    %c0_115 = arith.constant 0 : index
    %c24_116 = arith.constant 24 : index
    %267 = vector.load %arg31[%c0_115, %c24_116] : memref<8x32xf32, #tpu.memory_space<vmem>>, vector<8x8xf32>
    tpu.vector_store %arg31[%c0_115, %c24_116], %266 {strides = array<i32>} : memref<8x32xf32, #tpu.memory_space<vmem>>, vector<8x8xf32>,
    %c0_117 = arith.constant 0 : index
    %c0_118 = arith.constant 0 : index
    %268 = vector.load %arg31[%c0_117, %c0_118] : memref<8x32xf32, #tpu.memory_space<vmem>>, vector<8x32xf32>
    %269 = arith.truncf %268 : vector<8x32xf32> to vector<8x32xbf16>
    %c0_119 = arith.constant 0 : index
    %c0_120 = arith.constant 0 : index
    %270 = vector.load %arg22[%c0_119, %c0_120] : memref<32x32xbf16, #tpu.memory_space<vmem>>, vector<32x32xbf16>
    %cst_121 = arith.constant dense<0.000000e+00> : vector<8x32xf32>
    %271 = tpu.matmul %269, %270, %cst_121 {dimension_numbers = #tpu.dot_dimension_numbers<[1], [0], [0], [1], [0, 0, 1, 1], [], []>} : vector<8x32xbf16>, vector<32x32xbf16>, vector<8x32xf32> -> vector<8x32xf32>
    %c0_122 = arith.constant 0 : index
    %c0_123 = arith.constant 0 : index
    %272 = vector.load %arg23[%c0_122, %c0_123] : memref<1x32xf32, #tpu.memory_space<vmem>>, vector<1x32xf32>
    %273 = vector.broadcast %272 : vector<1x32xf32> to vector<8x32xf32>
    %274 = arith.addf %271, %273 : vector<8x32xf32>
    %275 = arith.addf %139, %274 : vector<8x32xf32>
    %c0_124 = arith.constant 0 : index
    %c0_125 = arith.constant 0 : index
    %276 = vector.load %arg24[%c0_124, %c0_125] : memref<1x32xf32, #tpu.memory_space<vmem>>, vector<1x32xf32>
    %c0_126 = arith.constant 0 : index
    %c0_127 = arith.constant 0 : index
    %277 = vector.load %arg25[%c0_126, %c0_127] : memref<1x32xf32, #tpu.memory_space<vmem>>, vector<1x32xf32>
    %cst_128 = arith.constant dense<0.000000e+00> : vector<8xf32>
    %278 = vector.multi_reduction <add>, %275, %cst_128 [1] : vector<8x32xf32> to vector<8xf32>
    %279 = vector.shape_cast %278 : vector<8xf32> to vector<8x1xf32>
    %cst_129 = arith.constant 3.200000e+01 : f32
    %280 = vector.broadcast %cst_129 : f32 to vector<8x1xf32>
    %281 = arith.divf %279, %280 : vector<8x1xf32>
    %282 = vector.broadcast %281 : vector<8x1xf32> to vector<8x32xf32>
    %283 = arith.subf %275, %282 : vector<8x32xf32>
    %284 = arith.mulf %283, %283 : vector<8x32xf32>
    %cst_130 = arith.constant dense<0.000000e+00> : vector<8xf32>
    %285 = vector.multi_reduction <add>, %284, %cst_130 [1] : vector<8x32xf32> to vector<8xf32>
    %286 = vector.shape_cast %285 : vector<8xf32> to vector<8x1xf32>
    %cst_131 = arith.constant 0.0322580636 : f32
    %287 = vector.broadcast %cst_131 : f32 to vector<8x1xf32>
    %288 = arith.mulf %286, %287 : vector<8x1xf32>
    %289 = math.sqrt %288 : vector<8x1xf32>
    %cst_132 = arith.constant 9.99999997E-7 : f32
    %290 = vector.broadcast %cst_132 : f32 to vector<8x1xf32>
    %291 = arith.addf %289, %290 : vector<8x1xf32>
    %292 = tpu.reciprocal %291 {approx = true} : vector<8x1xf32> -> vector<8x1xf32>
    %293 = vector.broadcast %276 : vector<1x32xf32> to vector<8x32xf32>
    %294 = arith.mulf %293, %283 : vector<8x32xf32>
    %295 = vector.broadcast %292 : vector<8x1xf32> to vector<8x32xf32>
    %296 = arith.mulf %294, %295 : vector<8x32xf32>
    %297 = vector.broadcast %277 : vector<1x32xf32> to vector<8x32xf32>
    %298 = arith.addf %296, %297 : vector<8x32xf32>
    %299 = arith.truncf %298 : vector<8x32xf32> to vector<8x32xbf16>
    %c0_133 = arith.constant 0 : index
    %c0_134 = arith.constant 0 : index
    %300 = vector.load %arg26[%c0_133, %c0_134] : memref<32x64xbf16, #tpu.memory_space<vmem>>, vector<32x64xbf16>
    %cst_135 = arith.constant dense<0.000000e+00> : vector<8x64xf32>
    %301 = tpu.matmul %299, %300, %cst_135 {dimension_numbers = #tpu.dot_dimension_numbers<[1], [0], [0], [1], [0, 0, 1, 1], [], []>} : vector<8x32xbf16>, vector<32x64xbf16>, vector<8x64xf32> -> vector<8x64xf32>
    %c0_136 = arith.constant 0 : index
    %c0_137 = arith.constant 0 : index
    %302 = vector.load %arg27[%c0_136, %c0_137] : memref<1x64xf32, #tpu.memory_space<vmem>>, vector<1x64xf32>
    %303 = vector.broadcast %302 : vector<1x64xf32> to vector<8x64xf32>
    %304 = arith.addf %301, %303 : vector<8x64xf32>
    %cst_138 = arith.constant 0.000000e+00 : f32
    %305 = vector.broadcast %cst_138 : f32 to vector<8x64xf32>
    %306 = arith.maximumf %304, %305 : vector<8x64xf32>
    %307 = arith.truncf %306 : vector<8x64xf32> to vector<8x64xbf16>
    %c0_139 = arith.constant 0 : index
    %c0_140 = arith.constant 0 : index
    %308 = vector.load %arg28[%c0_139, %c0_140] : memref<64x32xbf16, #tpu.memory_space<vmem>>, vector<64x32xbf16>
    %cst_141 = arith.constant dense<0.000000e+00> : vector<8x32xf32>
    %309 = tpu.matmul %307, %308, %cst_141 {dimension_numbers = #tpu.dot_dimension_numbers<[1], [0], [0], [1], [0, 0, 1, 1], [], []>} : vector<8x64xbf16>, vector<64x32xbf16>, vector<8x32xf32> -> vector<8x32xf32>
    %c0_142 = arith.constant 0 : index
    %c0_143 = arith.constant 0 : index
    %310 = vector.load %arg29[%c0_142, %c0_143] : memref<1x32xf32, #tpu.memory_space<vmem>>, vector<1x32xf32>
    %311 = vector.broadcast %310 : vector<1x32xf32> to vector<8x32xf32>
    %312 = arith.addf %309, %311 : vector<8x32xf32>
    %313 = arith.addf %275, %312 : vector<8x32xf32>
    %c0_144 = arith.constant 0 : index
    %c0_145 = arith.constant 0 : index
    %c0_146 = arith.constant 0 : index
    %314 = vector.load %arg30[%c0_144, %c0_145, %c0_146] : memref<1x8x32xf32, #tpu.memory_space<vmem>>, vector<1x8x32xf32>
    %315 = vector.shape_cast %314 : vector<1x8x32xf32> to vector<8x32xf32>
    %316 = vector.shape_cast %313 : vector<8x32xf32> to vector<1x8x32xf32>
    tpu.vector_store %arg30[%c0_144, %c0_145, %c0_146], %316 {strides = array<i32>} : memref<1x8x32xf32, #tpu.memory_space<vmem>>, vector<1x8x32xf32>,
    return
  }
  func.func @transform_0(%arg0: i32) -> (i32, i32, i32) {
    %c0_i32 = arith.constant 0 : i32
    %c0_i32_0 = arith.constant 0 : i32
    %c0_i32_1 = arith.constant 0 : i32
    return %arg0, %c0_i32, %c0_i32_0 : i32, i32, i32
  }
  func.func @transform_1(%arg0: i32) -> (i32, i32, i32) {
    %c0_i32 = arith.constant 0 : i32
    %c0_i32_0 = arith.constant 0 : i32
    %c0_i32_1 = arith.constant 0 : i32
    return %arg0, %c0_i32, %c0_i32_0 : i32, i32, i32
  }
  func.func @transform_2(%arg0: i32) -> (i32, i32, i32) {
    %c0_i32 = arith.constant 0 : i32
    %c0_i32_0 = arith.constant 0 : i32
    %c0_i32_1 = arith.constant 0 : i32
    return %arg0, %c0_i32, %c0_i32_0 : i32, i32, i32
  }
  func.func @transform_3(%arg0: i32) -> (i32, i32) {
    %c0_i32 = arith.constant 0 : i32
    %c0_i32_0 = arith.constant 0 : i32
    %c0_i32_1 = arith.constant 0 : i32
    return %c0_i32, %c0_i32_0 : i32, i32
  }
  func.func @transform_4(%arg0: i32) -> (i32, i32) {
    %c0_i32 = arith.constant 0 : i32
    %c0_i32_0 = arith.constant 0 : i32
    %c0_i32_1 = arith.constant 0 : i32
    return %c0_i32, %c0_i32_0 : i32, i32
  }
  func.func @transform_5(%arg0: i32) -> (i32, i32) {
    %c0_i32 = arith.constant 0 : i32
    %c0_i32_0 = arith.constant 0 : i32
    %c0_i32_1 = arith.constant 0 : i32
    return %c0_i32, %c0_i32_0 : i32, i32
  }
  func.func @transform_6(%arg0: i32) -> (i32, i32) {
    %c0_i32 = arith.constant 0 : i32
    %c0_i32_0 = arith.constant 0 : i32
    %c0_i32_1 = arith.constant 0 : i32
    return %c0_i32, %c0_i32_0 : i32, i32
  }
  func.func @transform_7(%arg0: i32) -> (i32, i32) {
    %c0_i32 = arith.constant 0 : i32
    %c0_i32_0 = arith.constant 0 : i32
    %c0_i32_1 = arith.constant 0 : i32
    return %c0_i32, %c0_i32_0 : i32, i32
  }
  func.func @transform_8(%arg0: i32) -> (i32, i32) {
    %c0_i32 = arith.constant 0 : i32
    %c0_i32_0 = arith.constant 0 : i32
    %c0_i32_1 = arith.constant 0 : i32
    return %c0_i32, %c0_i32_0 : i32, i32
  }
  func.func @transform_9(%arg0: i32) -> (i32, i32) {
    %c0_i32 = arith.constant 0 : i32
    %c0_i32_0 = arith.constant 0 : i32
    %c0_i32_1 = arith.constant 0 : i32
    return %c0_i32, %c0_i32_0 : i32, i32
  }
  func.func @transform_10(%arg0: i32) -> (i32, i32) {
    %c0_i32 = arith.constant 0 : i32
    %c0_i32_0 = arith.constant 0 : i32
    %c0_i32_1 = arith.constant 0 : i32
    return %c0_i32, %c0_i32_0 : i32, i32
  }
  func.func @transform_11(%arg0: i32) -> (i32, i32) {
    %c0_i32 = arith.constant 0 : i32
    %c0_i32_0 = arith.constant 0 : i32
    %c0_i32_1 = arith.constant 0 : i32
    return %c0_i32, %c0_i32_0 : i32, i32
  }
  func.func @transform_12(%arg0: i32) -> (i32, i32) {
    %c0_i32 = arith.constant 0 : i32
    %c0_i32_0 = arith.constant 0 : i32
    %c0_i32_1 = arith.constant 0 : i32
    return %c0_i32, %c0_i32_0 : i32, i32
  }
  func.func @transform_13(%arg0: i32) -> (i32, i32) {
    %c0_i32 = arith.constant 0 : i32
    %c0_i32_0 = arith.constant 0 : i32
    %c0_i32_1 = arith.constant 0 : i32
    return %c0_i32, %c0_i32_0 : i32, i32
  }
  func.func @transform_14(%arg0: i32) -> (i32, i32) {
    %c0_i32 = arith.constant 0 : i32
    %c0_i32_0 = arith.constant 0 : i32
    %c0_i32_1 = arith.constant 0 : i32
    return %c0_i32, %c0_i32_0 : i32, i32
  }
  func.func @transform_15(%arg0: i32) -> (i32, i32) {
    %c0_i32 = arith.constant 0 : i32
    %c0_i32_0 = arith.constant 0 : i32
    %c0_i32_1 = arith.constant 0 : i32
    return %c0_i32, %c0_i32_0 : i32, i32
  }
  func.func @transform_16(%arg0: i32) -> (i32, i32) {
    %c0_i32 = arith.constant 0 : i32
    %c0_i32_0 = arith.constant 0 : i32
    %c0_i32_1 = arith.constant 0 : i32
    return %c0_i32, %c0_i32_0 : i32, i32
  }
  func.func @transform_17(%arg0: i32) -> (i32, i32) {
    %c0_i32 = arith.constant 0 : i32
    %c0_i32_0 = arith.constant 0 : i32
    %c0_i32_1 = arith.constant 0 : i32
    return %c0_i32, %c0_i32_0 : i32, i32
  }
  func.func @transform_18(%arg0: i32) -> (i32, i32) {
    %c0_i32 = arith.constant 0 : i32
    %c0_i32_0 = arith.constant 0 : i32
    %c0_i32_1 = arith.constant 0 : i32
    return %c0_i32, %c0_i32_0 : i32, i32
  }
  func.func @transform_19(%arg0: i32) -> (i32, i32) {
    %c0_i32 = arith.constant 0 : i32
    %c0_i32_0 = arith.constant 0 : i32
    %c0_i32_1 = arith.constant 0 : i32
    return %c0_i32, %c0_i32_0 : i32, i32
  }
  func.func @transform_20(%arg0: i32) -> (i32, i32) {
    %c0_i32 = arith.constant 0 : i32
    %c0_i32_0 = arith.constant 0 : i32
    %c0_i32_1 = arith.constant 0 : i32
    return %c0_i32, %c0_i32_0 : i32, i32
  }
  func.func @transform_21(%arg0: i32) -> (i32, i32) {
    %c0_i32 = arith.constant 0 : i32
    %c0_i32_0 = arith.constant 0 : i32
    %c0_i32_1 = arith.constant 0 : i32
    return %c0_i32, %c0_i32_0 : i32, i32
  }
  func.func @transform_22(%arg0: i32) -> (i32, i32) {
    %c0_i32 = arith.constant 0 : i32
    %c0_i32_0 = arith.constant 0 : i32
    %c0_i32_1 = arith.constant 0 : i32
    return %c0_i32, %c0_i32_0 : i32, i32
  }
  func.func @transform_23(%arg0: i32) -> (i32, i32) {
    %c0_i32 = arith.constant 0 : i32
    %c0_i32_0 = arith.constant 0 : i32
    %c0_i32_1 = arith.constant 0 : i32
    return %c0_i32, %c0_i32_0 : i32, i32
  }
  func.func @transform_24(%arg0: i32) -> (i32, i32) {
    %c0_i32 = arith.constant 0 : i32
    %c0_i32_0 = arith.constant 0 : i32
    %c0_i32_1 = arith.constant 0 : i32
    return %c0_i32, %c0_i32_0 : i32, i32
  }
  func.func @transform_25(%arg0: i32) -> (i32, i32) {
    %c0_i32 = arith.constant 0 : i32
    %c0_i32_0 = arith.constant 0 : i32
    %c0_i32_1 = arith.constant 0 : i32
    return %c0_i32, %c0_i32_0 : i32, i32
  }
  func.func @transform_26(%arg0: i32) -> (i32, i32) {
    %c0_i32 = arith.constant 0 : i32
    %c0_i32_0 = arith.constant 0 : i32
    %c0_i32_1 = arith.constant 0 : i32
    return %c0_i32, %c0_i32_0 : i32, i32
  }
  func.func @transform_27(%arg0: i32) -> (i32, i32) {
    %c0_i32 = arith.constant 0 : i32
    %c0_i32_0 = arith.constant 0 : i32
    %c0_i32_1 = arith.constant 0 : i32
    return %c0_i32, %c0_i32_0 : i32, i32
  }
  func.func @transform_28(%arg0: i32) -> (i32, i32) {
    %c0_i32 = arith.constant 0 : i32
    %c0_i32_0 = arith.constant 0 : i32
    %c0_i32_1 = arith.constant 0 : i32
    return %c0_i32, %c0_i32_0 : i32, i32
  }
  func.func @transform_29(%arg0: i32) -> (i32, i32, i32) {
    %c0_i32 = arith.constant 0 : i32
    %c0_i32_0 = arith.constant 0 : i32
    %c0_i32_1 = arith.constant 0 : i32
    return %arg0, %c0_i32, %c0_i32_0 : i32, i32, i32
  }
}

</mosaic_0001>

<llo_original>
// kernel: tpu_custom_call.1
$region0: #{tpu_custom_call.1}
  #allocation0 [shape = 'u32[]', space=smem, size = 0x4, offset = 0x4, fixed_abs, tag = 'smem constant byte address 0x4 - core index']
  #allocation1 [shape = 'u32[72,128]{1,0:T(1,128)}', space=vmem, size = 0x9000, scoped, tag = 'internal scratch']
  %s0 = inlined_call_operand.hbm [shape: f32[8,128], index: 0, kind: input, shape index: {}]
  %s1 = inlined_call_operand.hbm [shape: f32[8,128], index: 1, kind: output, shape index: {}]
  %s2 = sld [smem:[#allocation0]]
  $region18: #{tpu_custom_call.1} parent=0
    _
  %s4 = ssub.s32 1, %s2
  %s5 = scalar_select 0, %s4, %s2
  $region1: #{tpu_custom_call.1} parent=0
    #allocation2 [shape = 'u8[4096]{0}', space=vmem, size = 0x1000, scoped, tag = 'input window, operand 0, single buffered']
    #allocation3 [shape = 's32[1]{0}', space=sflag, size = 0x4, scoped, tag = 'scoped memory for tpu_custom_call.1']
    #allocation4 [shape = 's32[1]{0}', space=sflag, size = 0x4, scoped, tag = 'scoped memory for tpu_custom_call.1']
    #allocation5 [shape = 'u8[4096]{0}', space=vmem, size = 0x1000, scoped, tag = 'output window, operand 0, single buffered']
    %6 = vsyncpa [#allocation3], 0
    %7 = vsyncpa [#allocation4], 0
    // Predicated region
    $region2: #{tpu_custom_call.1} parent=1 // pred_check
      _
    $region3: #{tpu_custom_call.1} parent=1 // pred_check_branch
      %9 = sbr.rel (0) target = $region5
    $region4: #{tpu_custom_call.1} parent=1 // pred_region
      %11 = vsyncadd [#allocation3], 0
      %s13 = sshll.u32 %s0, 4
      %s14 = int_to_ptr.hbm [resolvable:$true] %s13
      %s15 = sshll.u32 [#allocation2], 4
      %s16 = int_to_ptr.vmem [resolvable:$true] %s15
      %18 = dma.hbm_to_vmem [thread:$0]  %s14, 128, %s16, [#allocation3]
    $region5: #{tpu_custom_call.1} parent=1 // pred_fallthru
      _
    // Predicated region
    $region6: #{tpu_custom_call.1} parent=1 // pred_check
      _
    $region7: #{tpu_custom_call.1} parent=1 // pred_check_branch
      %20 = sbr.rel (0) target = $region9
    $region8: #{tpu_custom_call.1} parent=1 // pred_region
      %22 = dma.done [#allocation3], 128
    $region9: #{tpu_custom_call.1} parent=1 // pred_fallthru
      _
    %v23 = vld [vmem:[#allocation2] sm:$0xff]
    %v24 = vadd.f32 %v23, 1.0
    %25 = vst [vmem:[#allocation5] sm:$0xff] %v24
    // Predicated region
    $region10: #{tpu_custom_call.1} parent=1 // pred_check
      _
    $region11: #{tpu_custom_call.1} parent=1 // pred_check_branch
      %27 = sbr.rel (0) target = $region13
    $region12: #{tpu_custom_call.1} parent=1 // pred_region
      %29 = vsyncadd [#allocation4], 0
      %s31 = sshll.u32 [#allocation5], 4
      %s32 = int_to_ptr.vmem [resolvable:$true] %s31
      %s33 = sshll.u32 %s1, 4
      %s34 = int_to_ptr.hbm [resolvable:$true] %s33
      %36 = dma.vmem_to_hbm [thread:$0]  %s32, 128, %s34, [#allocation4]
    $region13: #{tpu_custom_call.1} parent=1 // pred_fallthru
      _
    // Predicated region
    $region14: #{tpu_custom_call.1} parent=1 // pred_check
      _
    $region15: #{tpu_custom_call.1} parent=1 // pred_check_branch
      %38 = sbr.rel (0) target = $region17
    $region16: #{tpu_custom_call.1} parent=1 // pred_region
      %40 = dma.done [#allocation4], 128
    $region17: #{tpu_custom_call.1} parent=1 // pred_fallthru
      _
    %41 = vsyncpa [#allocation3], 1
    %42 = vsyncpa [#allocation4], 1

// kernel: tpu_custom_call.1
$region0: #{tpu_custom_call.1}
  #allocation0 [shape = 'u32[]', space=smem, size = 0x4, offset = 0x4, fixed_abs, tag = 'smem constant byte address 0x4 - core index']
  #allocation1 [shape = 'u32[72,128]{1,0:T(1,128)}', space=vmem, size = 0x9000, scoped, tag = 'internal scratch']
  #allocation2 [shape = 'f32[8,32]{1,0:T(8,128)}', space=vmem, size = 0x1000, scoped, tag = 'scratch operand']
  %s0 = inlined_call_operand.smem [shape: u32[30], index: -1, kind: input, shape index: {}]
  %s1 = sld [smem:[%s0]]
  %s2 = scalar_lea.smem %s0, 1
  %s3 = sld [smem:[%s2]]
  %s4 = scalar_lea.smem %s0, 2
  %s5 = sld [smem:[%s4]]
  %s6 = scalar_lea.smem %s0, 3
  %s7 = sld [smem:[%s6]]
  %s8 = scalar_lea.smem %s0, 4
  %s9 = sld [smem:[%s8]]
  %s10 = scalar_lea.smem %s0, 5
  %s11 = sld [smem:[%s10]]
  %s12 = scalar_lea.smem %s0, 6
  %s13 = sld [smem:[%s12]]
  %s14 = scalar_lea.smem %s0, 7
  %s15 = sld [smem:[%s14]]
  %s16 = scalar_lea.smem %s0, 8
  %s17 = sld [smem:[%s16]]
  %s18 = scalar_lea.smem %s0, 9
  %s19 = sld [smem:[%s18]]
  %s20 = scalar_lea.smem %s0, 10
  %s21 = sld [smem:[%s20]]
  %s22 = scalar_lea.smem %s0, 11
  %s23 = sld [smem:[%s22]]
  %s24 = scalar_lea.smem %s0, 12
  %s25 = sld [smem:[%s24]]
  %s26 = scalar_lea.smem %s0, 13
  %s27 = sld [smem:[%s26]]
  %s28 = scalar_lea.smem %s0, 14
  %s29 = sld [smem:[%s28]]
  %s30 = scalar_lea.smem %s0, 15
  %s31 = sld [smem:[%s30]]
  %s32 = scalar_lea.smem %s0, 16
  %s33 = sld [smem:[%s32]]
  %s34 = scalar_lea.smem %s0, 17
  %s35 = sld [smem:[%s34]]
  %s36 = scalar_lea.smem %s0, 18
  %s37 = sld [smem:[%s36]]
  %s38 = scalar_lea.smem %s0, 19
  %s39 = sld [smem:[%s38]]
  %s40 = scalar_lea.smem %s0, 20
  %s41 = sld [smem:[%s40]]
  %s42 = scalar_lea.smem %s0, 21
  %s43 = sld [smem:[%s42]]
  %s44 = scalar_lea.smem %s0, 22
  %s45 = sld [smem:[%s44]]
  %s46 = scalar_lea.smem %s0, 23
  %s47 = sld [smem:[%s46]]
  %s48 = scalar_lea.smem %s0, 24
  %s49 = sld [smem:[%s48]]
  %s50 = scalar_lea.smem %s0, 25
  %s51 = sld [smem:[%s50]]
  %s52 = scalar_lea.smem %s0, 26
  %s53 = sld [smem:[%s52]]
  %s54 = scalar_lea.smem %s0, 27
  %s55 = sld [smem:[%s54]]
  %s56 = scalar_lea.smem %s0, 28
  %s57 = sld [smem:[%s56]]
  %s58 = scalar_lea.smem %s0, 29
  %s59 = sld [smem:[%s58]]
  %s60 = sld [smem:[#allocation0]]
  $region213: #{tpu_custom_call.1} parent=0
    _
  %s62 = ssub.s32 1, %s60
  %s63 = scalar_select 0, %s62, %s60
  $region1: #{tpu_custom_call.1} parent=0
    #allocation3 [shape = 'u8[1024]{0}', space=vmem, size = 0x400, scoped, tag = 'input window, operand 2']
    #allocation4 [shape = 's32[2]{0}', space=sflag, size = 0x8, scoped, tag = 'scoped memory for tpu_custom_call.1']
    #allocation5 [shape = 's32[2]{0}', space=sflag, size = 0x8, scoped, tag = 'scoped memory for tpu_custom_call.1']
    #allocation6 [shape = 'u8[8192]{0}', space=vmem, size = 0x2000, scoped, tag = 'input window, operand 5, single buffered']
    #allocation7 [shape = 's32[1]{0}', space=sflag, size = 0x4, scoped, tag = 'scoped memory for tpu_custom_call.1']
    #allocation8 [shape = 'u8[8192]{0}', space=vmem, size = 0x2000, scoped, tag = 'input window, operand 7, single buffered']
    #allocation9 [shape = 'u8[8192]{0}', space=vmem, size = 0x2000, scoped, tag = 'input window, operand 9, single buffered']
    #allocation10 [shape = 's32[1]{0}', space=sflag, size = 0x4, scoped, tag = 'scoped memory for tpu_custom_call.1']
    #allocation11 [shape = 'u8[8192]{0}', space=vmem, size = 0x2000, scoped, tag = 'input window, operand 11, single buffered']
    #allocation12 [shape = 'u8[8192]{0}', space=vmem, size = 0x2000, scoped, tag = 'input window, operand 15, single buffered']
    #allocation13 [shape = 's32[1]{0}', space=sflag, size = 0x4, scoped, tag = 'scoped memory for tpu_custom_call.1']
    #allocation14 [shape = 'u8[8192]{0}', space=vmem, size = 0x2000, scoped, tag = 'input window, operand 17, single buffered']
    #allocation15 [shape = 'u8[512]{0}', space=vmem, size = 0x400, scoped, tag = 'input window, operand 18, single buffered']
    #allocation16 [shape = 's32[1]{0}', space=sflag, size = 0x4, scoped, tag = 'scoped memory for tpu_custom_call.1']
    #allocation17 [shape = 'u8[8192]{0}', space=vmem, size = 0x2000, scoped, tag = 'input window, operand 19, single buffered']
    #allocation18 [shape = 'u8[512]{0}', space=vmem, size = 0x400, scoped, tag = 'input window, operand 20, single buffered']
    #allocation19 [shape = 's32[1]{0}', space=sflag, size = 0x4, scoped, tag = 'scoped memory for tpu_custom_call.1']
    #allocation20 [shape = 'u8[8192]{0}', space=vmem, size = 0x2000, scoped, tag = 'input window, operand 21, single buffered']
    #allocation21 [shape = 'u8[512]{0}', space=vmem, size = 0x400, scoped, tag = 'input window, operand 22, single buffered']
    #allocation22 [shape = 's32[1]{0}', space=sflag, size = 0x4, scoped, tag = 'scoped memory for tpu_custom_call.1']
    #allocation23 [shape = 'u8[512]{0}', space=vmem, size = 0x400, scoped, tag = 'input window, operand 23, single buffered']
    #allocation24 [shape = 'u8[512]{0}', space=vmem, size = 0x400, scoped, tag = 'input window, operand 24, single buffered']
    #allocation25 [shape = 's32[1]{0}', space=sflag, size = 0x4, scoped, tag = 'scoped memory for tpu_custom_call.1']
    #allocation26 [shape = 'u8[8192]{0}', space=vmem, size = 0x2000, scoped, tag = 'input window, operand 25, single buffered']
    #allocation27 [shape = 'u8[512]{0}', space=vmem, size = 0x400, scoped, tag = 'input window, operand 26, single buffered']
    #allocation28 [shape = 's32[1]{0}', space=sflag, size = 0x4, scoped, tag = 'scoped memory for tpu_custom_call.1']
    #allocation29 [shape = 'u8[8192]{0}', space=vmem, size = 0x2000, scoped, tag = 'output window, operand 0']
    %64 = vsyncpa [#allocation4], 0
    %s65 = scalar_lea.sflag [#allocation4], 1
    %66 = vsyncpa %s65, 0
    %67 = vsyncpa [#allocation7], 0
    %68 = vsyncpa [#allocation10], 0
    %69 = vsyncpa [#allocation13], 0
    %70 = vsyncpa [#allocation16], 0
    %71 = vsyncpa [#allocation19], 0
    %72 = vsyncpa [#allocation22], 0
    %73 = vsyncpa [#allocation25], 0
    %74 = vsyncpa [#allocation28], 0
    %75 = vsyncpa [#allocation5], 0
    %s76 = scalar_lea.sflag [#allocation5], 1
    %77 = vsyncpa %s76, 0
    loop: start=0, step=1, limit=4
    $region2: #{tpu_custom_call.1} parent=1 // loop_pre_header
      _
    $region3: #{tpu_custom_call.1} parent=1 // loop_header
      %s79 = sphi 0, %s83
      %p80 = scmp.ge.s32.totalorder %s79, 4
      %s89 = sphi 0, %s91
      %s92 = sphi 0, %s89
      %s93 = sphi 0, %s92
      %s109 = sphi 0, %s93
      %s115 = sphi 0, %s117
      %s118 = sphi 0, %s115
      %s119 = sphi 0, %s118
      %s135 = sphi 0, %s119
      %s141 = sphi 0, %s143
      %s144 = sphi 0, %s141
      %s145 = sphi 0, %s144
      %s161 = sphi 0, %s145
      %s165 = sphi 0, %s165
      %s167 = sphi 0, %s165
      %s168 = sphi 0, %s167
      %s182 = sphi 0, %s168
      %s186 = sphi 0, %s186
      %s188 = sphi 0, %s186
      %s189 = sphi 0, %s188
      %s203 = sphi 0, %s189
      %s207 = sphi 0, %s207
      %s209 = sphi 0, %s207
      %s210 = sphi 0, %s209
      %s224 = sphi 0, %s210
      %s228 = sphi 0, %s228
      %s230 = sphi 0, %s228
      %s231 = sphi 0, %s230
      %s245 = sphi 0, %s231
      %s249 = sphi 0, %s249
      %s251 = sphi 0, %s249
      %s252 = sphi 0, %s251
      %s266 = sphi 0, %s252
      %s270 = sphi 0, %s270
      %s272 = sphi 0, %s270
      %s273 = sphi 0, %s272
      %s287 = sphi 0, %s273
      %s291 = sphi 0, %s291
      %s293 = sphi 0, %s291
      %s294 = sphi 0, %s293
      %s308 = sphi 0, %s294
      %s312 = sphi 0, %s312
      %s314 = sphi 0, %s312
      %s315 = sphi 0, %s314
      %s329 = sphi 0, %s315
      %s333 = sphi 0, %s333
      %s335 = sphi 0, %s333
      %s336 = sphi 0, %s335
      %s350 = sphi 0, %s336
      %s354 = sphi 0, %s354
      %s356 = sphi 0, %s354
      %s357 = sphi 0, %s356
      %s371 = sphi 0, %s357
      %s375 = sphi 0, %s375
      %s377 = sphi 0, %s375
      %s378 = sphi 0, %s377
      %s392 = sphi 0, %s378
      %s396 = sphi 0, %s396
      %s398 = sphi 0, %s396
      %s399 = sphi 0, %s398
      %s413 = sphi 0, %s399
      %s417 = sphi 0, %s417
      %s419 = sphi 0, %s417
      %s420 = sphi 0, %s419
      %s434 = sphi 0, %s420
      %s438 = sphi 0, %s438
      %s440 = sphi 0, %s438
      %s441 = sphi 0, %s440
      %s455 = sphi 0, %s441
      %s459 = sphi 0, %s459
      %s461 = sphi 0, %s459
      %s462 = sphi 0, %s461
      %s476 = sphi 0, %s462
      %s480 = sphi 0, %s480
      %s482 = sphi 0, %s480
      %s483 = sphi 0, %s482
      %s497 = sphi 0, %s483
      %s501 = sphi 0, %s501
      %s503 = sphi 0, %s501
      %s504 = sphi 0, %s503
      %s518 = sphi 0, %s504
      %s522 = sphi 0, %s522
      %s524 = sphi 0, %s522
      %s525 = sphi 0, %s524
      %s539 = sphi 0, %s525
      %s543 = sphi 0, %s543
      %s545 = sphi 0, %s543
      %s546 = sphi 0, %s545
      %s560 = sphi 0, %s546
      %s564 = sphi 0, %s564
      %s566 = sphi 0, %s564
      %s567 = sphi 0, %s566
      %s581 = sphi 0, %s567
      %s585 = sphi 0, %s585
      %s587 = sphi 0, %s585
      %s588 = sphi 0, %s587
      %s602 = sphi 0, %s588
      %s606 = sphi 0, %s606
      %s608 = sphi 0, %s606
      %s609 = sphi 0, %s608
      %s623 = sphi 0, %s609
      %s627 = sphi 0, %s627
      %s629 = sphi 0, %s627
      %s630 = sphi 0, %s629
      %s644 = sphi 0, %s630
      %s648 = sphi 0, %s648
      %s650 = sphi 0, %s648
      %s651 = sphi 0, %s650
      %s665 = sphi 0, %s651
      %s669 = sphi 0, %s669
      %s671 = sphi 0, %s669
      %s672 = sphi 0, %s671
      %s686 = sphi 0, %s672
      %s690 = sphi 0, %s690
      %s692 = sphi 0, %s690
      %s693 = sphi 0, %s692
      %s707 = sphi 0, %s693
      %s713 = sphi 0, %s715
      %s716 = sphi 0, %s713
      %s717 = sphi 0, %s716
      %s733 = sphi 0, %s717
    $region4: #{tpu_custom_call.1} parent=1 // loop_header_branch
      %82 = sbr.rel (%p80) target = $region8
    $region5: #{tpu_custom_call.1} parent=1 // loop_body
      %s84 = ssub.s32 %s79, 1
      %s85 = ssub.s32 %s79, 2
      %s86 = sadd.s32 %s79, 1
      %s87 = ssub.s32 %s79, %s86
      %p88 = scmp.eq.s32.totalorder %s87, 0
      %s90 = sadd.s32 %s89, 1
      %s91 = scalar_select %p88, %s89, %s90
      %p94 = pneg %p88
      %p95 = scmp.eq.s32.totalorder %s79, 1
      %p96 = por %p94, %p95
      %p97 = scmp.ne.s32.totalorder %s89, %s92
      %p98 = scmp.eq.s32.totalorder %s79, 0
      %p99 = por %p97, %p98
      %p100 = scmp.ne.s32.totalorder %s89, %s92
      %p101 = scmp.eq.s32.totalorder %s84, 1
      %p102 = por %p100, %p101
      %p103 = scmp.ne.s32.totalorder %s92, %s93
      %p104 = scmp.eq.s32.totalorder %s84, 0
      %p105 = por %p103, %p104
      %p106 = scmp.ne.s32.totalorder %s92, %s93
      %p107 = scmp.eq.s32.totalorder %s85, 1
      %p108 = por %p106, %p107
      %p110 = scmp.ne.s32.totalorder %s93, %s109
      %p111 = scmp.eq.s32.totalorder %s85, 0
      %p112 = por %p110, %p111
      %s113 = ssub.s32 %s79, %s86
      %p114 = scmp.eq.s32.totalorder %s113, 0
      %s116 = sadd.s32 %s115, 1
      %s117 = scalar_select %p114, %s115, %s116
      %p120 = pneg %p114
      %p121 = scmp.eq.s32.totalorder %s79, 1
      %p122 = por %p120, %p121
      %p123 = scmp.ne.s32.totalorder %s115, %s118
      %p124 = scmp.eq.s32.totalorder %s79, 0
      %p125 = por %p123, %p124
      %p126 = scmp.ne.s32.totalorder %s115, %s118
      %p127 = scmp.eq.s32.totalorder %s84, 1
      %p128 = por %p126, %p127
      %p129 = scmp.ne.s32.totalorder %s118, %s119
      %p130 = scmp.eq.s32.totalorder %s84, 0
      %p131 = por %p129, %p130
      %p132 = scmp.ne.s32.totalorder %s118, %s119
      %p133 = scmp.eq.s32.totalorder %s85, 1
      %p134 = por %p132, %p133
      %p136 = scmp.ne.s32.totalorder %s119, %s135
      %p137 = scmp.eq.s32.totalorder %s85, 0
      %p138 = por %p136, %p137
      %s139 = ssub.s32 %s79, %s86
      %p140 = scmp.eq.s32.totalorder %s139, 0
      %s142 = sadd.s32 %s141, 1
      %s143 = scalar_select %p140, %s141, %s142
      %p146 = pneg %p140
      %p147 = scmp.eq.s32.totalorder %s79, 1
      %p148 = por %p146, %p147
      %p149 = scmp.ne.s32.totalorder %s141, %s144
      %p150 = scmp.eq.s32.totalorder %s79, 0
      %p151 = por %p149, %p150
      %p152 = scmp.ne.s32.totalorder %s141, %s144
      %p153 = scmp.eq.s32.totalorder %s84, 1
      %p154 = por %p152, %p153
      %p155 = scmp.ne.s32.totalorder %s144, %s145
      %p156 = scmp.eq.s32.totalorder %s84, 0
      %p157 = por %p155, %p156
      %p158 = scmp.ne.s32.totalorder %s144, %s145
      %p159 = scmp.eq.s32.totalorder %s85, 1
      %p160 = por %p158, %p159
      %p162 = scmp.ne.s32.totalorder %s145, %s161
      %p163 = scmp.eq.s32.totalorder %s85, 0
      %p164 = por %p162, %p163
      %s166 = sadd.s32 %s165, 1
      %p169 = scmp.eq.s32.totalorder %s79, 1
      %p170 = scmp.ne.s32.totalorder %s165, %s167
      %p171 = scmp.eq.s32.totalorder %s79, 0
      %p172 = por %p170, %p171
      %p173 = scmp.ne.s32.totalorder %s165, %s167
      %p174 = scmp.eq.s32.totalorder %s84, 1
      %p175 = por %p173, %p174
      %p176 = scmp.ne.s32.totalorder %s167, %s168
      %p177 = scmp.eq.s32.totalorder %s84, 0
      %p178 = por %p176, %p177
      %p179 = scmp.ne.s32.totalorder %s167, %s168
      %p180 = scmp.eq.s32.totalorder %s85, 1
      %p181 = por %p179, %p180
      %p183 = scmp.ne.s32.totalorder %s168, %s182
      %p184 = scmp.eq.s32.totalorder %s85, 0
      %p185 = por %p183, %p184
      %s187 = sadd.s32 %s186, 1
      %p190 = scmp.eq.s32.totalorder %s79, 1
      %p191 = scmp.ne.s32.totalorder %s186, %s188
      %p192 = scmp.eq.s32.totalorder %s79, 0
      %p193 = por %p191, %p192
      %p194 = scmp.ne.s32.totalorder %s186, %s188
      %p195 = scmp.eq.s32.totalorder %s84, 1
      %p196 = por %p194, %p195
      %p197 = scmp.ne.s32.totalorder %s188, %s189
      %p198 = scmp.eq.s32.totalorder %s84, 0
      %p199 = por %p197, %p198
      %p200 = scmp.ne.s32.totalorder %s188, %s189
      %p201 = scmp.eq.s32.totalorder %s85, 1
      %p202 = por %p200, %p201
      %p204 = scmp.ne.s32.totalorder %s189, %s203
      %p205 = scmp.eq.s32.totalorder %s85, 0
      %p206 = por %p204, %p205
      %s208 = sadd.s32 %s207, 1
      %p211 = scmp.eq.s32.totalorder %s79, 1
      %p212 = scmp.ne.s32.totalorder %s207, %s209
      %p213 = scmp.eq.s32.totalorder %s79, 0
      %p214 = por %p212, %p213
      %p215 = scmp.ne.s32.totalorder %s207, %s209
      %p216 = scmp.eq.s32.totalorder %s84, 1
      %p217 = por %p215, %p216
      %p218 = scmp.ne.s32.totalorder %s209, %s210
      %p219 = scmp.eq.s32.totalorder %s84, 0
      %p220 = por %p218, %p219
      %p221 = scmp.ne.s32.totalorder %s209, %s210
      %p222 = scmp.eq.s32.totalorder %s85, 1
      %p223 = por %p221, %p222
      %p225 = scmp.ne.s32.totalorder %s210, %s224
      %p226 = scmp.eq.s32.totalorder %s85, 0
      %p227 = por %p225, %p226
      %s229 = sadd.s32 %s228, 1
      %p232 = scmp.eq.s32.totalorder %s79, 1
      %p233 = scmp.ne.s32.totalorder %s228, %s230
      %p234 = scmp.eq.s32.totalorder %s79, 0
      %p235 = por %p233, %p234
      %p236 = scmp.ne.s32.totalorder %s228, %s230
      %p237 = scmp.eq.s32.totalorder %s84, 1
      %p238 = por %p236, %p237
      %p239 = scmp.ne.s32.totalorder %s230, %s231
      %p240 = scmp.eq.s32.totalorder %s84, 0
      %p241 = por %p239, %p240
      %p242 = scmp.ne.s32.totalorder %s230, %s231
      %p243 = scmp.eq.s32.totalorder %s85, 1
      %p244 = por %p242, %p243
      %p246 = scmp.ne.s32.totalorder %s231, %s245
      %p247 = scmp.eq.s32.totalorder %s85, 0
      %p248 = por %p246, %p247
      %s250 = sadd.s32 %s249, 1
      %p253 = scmp.eq.s32.totalorder %s79, 1
      %p254 = scmp.ne.s32.totalorder %s249, %s251
      %p255 = scmp.eq.s32.totalorder %s79, 0
      %p256 = por %p254, %p255
      %p257 = scmp.ne.s32.totalorder %s249, %s251
      %p258 = scmp.eq.s32.totalorder %s84, 1
      %p259 = por %p257, %p258
      %p260 = scmp.ne.s32.totalorder %s251, %s252
      %p261 = scmp.eq.s32.totalorder %s84, 0
      %p262 = por %p260, %p261
      %p263 = scmp.ne.s32.totalorder %s251, %s252
      %p264 = scmp.eq.s32.totalorder %s85, 1
      %p265 = por %p263, %p264
      %p267 = scmp.ne.s32.totalorder %s252, %s266
      %p268 = scmp.eq.s32.totalorder %s85, 0
      %p269 = por %p267, %p268
      %s271 = sadd.s32 %s270, 1
      %p274 = scmp.eq.s32.totalorder %s79, 1
      %p275 = scmp.ne.s32.totalorder %s270, %s272
      %p276 = scmp.eq.s32.totalorder %s79, 0
      %p277 = por %p275, %p276
      %p278 = scmp.ne.s32.totalorder %s270, %s272
      %p279 = scmp.eq.s32.totalorder %s84, 1
      %p280 = por %p278, %p279
      %p281 = scmp.ne.s32.totalorder %s272, %s273
      %p282 = scmp.eq.s32.totalorder %s84, 0
      %p283 = por %p281, %p282
      %p284 = scmp.ne.s32.totalorder %s272, %s273
      %p285 = scmp.eq.s32.totalorder %s85, 1
      %p286 = por %p284, %p285
      %p288 = scmp.ne.s32.totalorder %s273, %s287
      %p289 = scmp.eq.s32.totalorder %s85, 0
      %p290 = por %p288, %p289
      %s292 = sadd.s32 %s291, 1
      %p295 = scmp.eq.s32.totalorder %s79, 1
      %p296 = scmp.ne.s32.totalorder %s291, %s293
      %p297 = scmp.eq.s32.totalorder %s79, 0
      %p298 = por %p296, %p297
      %p299 = scmp.ne.s32.totalorder %s291, %s293
      %p300 = scmp.eq.s32.totalorder %s84, 1
      %p301 = por %p299, %p300
      %p302 = scmp.ne.s32.totalorder %s293, %s294
      %p303 = scmp.eq.s32.totalorder %s84, 0
      %p304 = por %p302, %p303
      %p305 = scmp.ne.s32.totalorder %s293, %s294
      %p306 = scmp.eq.s32.totalorder %s85, 1
      %p307 = por %p305, %p306
      %p309 = scmp.ne.s32.totalorder %s294, %s308
      %p310 = scmp.eq.s32.totalorder %s85, 0
      %p311 = por %p309, %p310
      %s313 = sadd.s32 %s312, 1
      %p316 = scmp.eq.s32.totalorder %s79, 1
      %p317 = scmp.ne.s32.totalorder %s312, %s314
      %p318 = scmp.eq.s32.totalorder %s79, 0
      %p319 = por %p317, %p318
      %p320 = scmp.ne.s32.totalorder %s312, %s314
      %p321 = scmp.eq.s32.totalorder %s84, 1
      %p322 = por %p320, %p321
      %p323 = scmp.ne.s32.totalorder %s314, %s315
      %p324 = scmp.eq.s32.totalorder %s84, 0
      %p325 = por %p323, %p324
      %p326 = scmp.ne.s32.totalorder %s314, %s315
      %p327 = scmp.eq.s32.totalorder %s85, 1
      %p328 = por %p326, %p327
      %p330 = scmp.ne.s32.totalorder %s315, %s329
      %p331 = scmp.eq.s32.totalorder %s85, 0
      %p332 = por %p330, %p331
      %s334 = sadd.s32 %s333, 1
      %p337 = scmp.eq.s32.totalorder %s79, 1
      %p338 = scmp.ne.s32.totalorder %s333, %s335
      %p339 = scmp.eq.s32.totalorder %s79, 0
      %p340 = por %p338, %p339
      %p341 = scmp.ne.s32.totalorder %s333, %s335
      %p342 = scmp.eq.s32.totalorder %s84, 1
      %p343 = por %p341, %p342
      %p344 = scmp.ne.s32.totalorder %s335, %s336
      %p345 = scmp.eq.s32.totalorder %s84, 0
      %p346 = por %p344, %p345
      %p347 = scmp.ne.s32.totalorder %s335, %s336
      %p348 = scmp.eq.s32.totalorder %s85, 1
      %p349 = por %p347, %p348
      %p351 = scmp.ne.s32.totalorder %s336, %s350
      %p352 = scmp.eq.s32.totalorder %s85, 0
      %p353 = por %p351, %p352
      %s355 = sadd.s32 %s354, 1
      %p358 = scmp.eq.s32.totalorder %s79, 1
      %p359 = scmp.ne.s32.totalorder %s354, %s356
      %p360 = scmp.eq.s32.totalorder %s79, 0
      %p361 = por %p359, %p360
      %p362 = scmp.ne.s32.totalorder %s354, %s356
      %p363 = scmp.eq.s32.totalorder %s84, 1
      %p364 = por %p362, %p363
      %p365 = scmp.ne.s32.totalorder %s356, %s357
      %p366 = scmp.eq.s32.totalorder %s84, 0
      %p367 = por %p365, %p366
      %p368 = scmp.ne.s32.totalorder %s356, %s357
      %p369 = scmp.eq.s32.totalorder %s85, 1
      %p370 = por %p368, %p369
      %p372 = scmp.ne.s32.totalorder %s357, %s371
      %p373 = scmp.eq.s32.totalorder %s85, 0
      %p374 = por %p372, %p373
      %s376 = sadd.s32 %s375, 1
      %p379 = scmp.eq.s32.totalorder %s79, 1
      %p380 = scmp.ne.s32.totalorder %s375, %s377
      %p381 = scmp.eq.s32.totalorder %s79, 0
      %p382 = por %p380, %p381
      %p383 = scmp.ne.s32.totalorder %s375, %s377
      %p384 = scmp.eq.s32.totalorder %s84, 1
      %p385 = por %p383, %p384
      %p386 = scmp.ne.s32.totalorder %s377, %s378
      %p387 = scmp.eq.s32.totalorder %s84, 0
      %p388 = por %p386, %p387
      %p389 = scmp.ne.s32.totalorder %s377, %s378
      %p390 = scmp.eq.s32.totalorder %s85, 1
      %p391 = por %p389, %p390
      %p393 = scmp.ne.s32.totalorder %s378, %s392
      %p394 = scmp.eq.s32.totalorder %s85, 0
      %p395 = por %p393, %p394
      %s397 = sadd.s32 %s396, 1
      %p400 = scmp.eq.s32.totalorder %s79, 1
      %p401 = scmp.ne.s32.totalorder %s396, %s398
      %p402 = scmp.eq.s32.totalorder %s79, 0
      %p403 = por %p401, %p402
      %p404 = scmp.ne.s32.totalorder %s396, %s398
      %p405 = scmp.eq.s32.totalorder %s84, 1
      %p406 = por %p404, %p405
      %p407 = scmp.ne.s32.totalorder %s398, %s399
      %p408 = scmp.eq.s32.totalorder %s84, 0
      %p409 = por %p407, %p408
      %p410 = scmp.ne.s32.totalorder %s398, %s399
      %p411 = scmp.eq.s32.totalorder %s85, 1
      %p412 = por %p410, %p411
      %p414 = scmp.ne.s32.totalorder %s399, %s413
      %p415 = scmp.eq.s32.totalorder %s85, 0
      %p416 = por %p414, %p415
      %s418 = sadd.s32 %s417, 1
      %p421 = scmp.eq.s32.totalorder %s79, 1
      %p422 = scmp.ne.s32.totalorder %s417, %s419
      %p423 = scmp.eq.s32.totalorder %s79, 0
      %p424 = por %p422, %p423
      %p425 = scmp.ne.s32.totalorder %s417, %s419
      %p426 = scmp.eq.s32.totalorder %s84, 1
      %p427 = por %p425, %p426
      %p428 = scmp.ne.s32.totalorder %s419, %s420
      %p429 = scmp.eq.s32.totalorder %s84, 0
      %p430 = por %p428, %p429
      %p431 = scmp.ne.s32.totalorder %s419, %s420
      %p432 = scmp.eq.s32.totalorder %s85, 1
      %p433 = por %p431, %p432
      %p435 = scmp.ne.s32.totalorder %s420, %s434
      %p436 = scmp.eq.s32.totalorder %s85, 0
      %p437 = por %p435, %p436
      %s439 = sadd.s32 %s438, 1
      %p442 = scmp.eq.s32.totalorder %s79, 1
      %p443 = scmp.ne.s32.totalorder %s438, %s440
      %p444 = scmp.eq.s32.totalorder %s79, 0
      %p445 = por %p443, %p444
      %p446 = scmp.ne.s32.totalorder %s438, %s440
      %p447 = scmp.eq.s32.totalorder %s84, 1
      %p448 = por %p446, %p447
      %p449 = scmp.ne.s32.totalorder %s440, %s441
      %p450 = scmp.eq.s32.totalorder %s84, 0
      %p451 = por %p449, %p450
      %p452 = scmp.ne.s32.totalorder %s440, %s441
      %p453 = scmp.eq.s32.totalorder %s85, 1
      %p454 = por %p452, %p453
      %p456 = scmp.ne.s32.totalorder %s441, %s455
      %p457 = scmp.eq.s32.totalorder %s85, 0
      %p458 = por %p456, %p457
      %s460 = sadd.s32 %s459, 1
      %p463 = scmp.eq.s32.totalorder %s79, 1
      %p464 = scmp.ne.s32.totalorder %s459, %s461
      %p465 = scmp.eq.s32.totalorder %s79, 0
      %p466 = por %p464, %p465
      %p467 = scmp.ne.s32.totalorder %s459, %s461
      %p468 = scmp.eq.s32.totalorder %s84, 1
      %p469 = por %p467, %p468
      %p470 = scmp.ne.s32.totalorder %s461, %s462
      %p471 = scmp.eq.s32.totalorder %s84, 0
      %p472 = por %p470, %p471
      %p473 = scmp.ne.s32.totalorder %s461, %s462
      %p474 = scmp.eq.s32.totalorder %s85, 1
      %p475 = por %p473, %p474
      %p477 = scmp.ne.s32.totalorder %s462, %s476
      %p478 = scmp.eq.s32.totalorder %s85, 0
      %p479 = por %p477, %p478
      %s481 = sadd.s32 %s480, 1
      %p484 = scmp.eq.s32.totalorder %s79, 1
      %p485 = scmp.ne.s32.totalorder %s480, %s482
      %p486 = scmp.eq.s32.totalorder %s79, 0
      %p487 = por %p485, %p486
      %p488 = scmp.ne.s32.totalorder %s480, %s482
      %p489 = scmp.eq.s32.totalorder %s84, 1
      %p490 = por %p488, %p489
      %p491 = scmp.ne.s32.totalorder %s482, %s483
      %p492 = scmp.eq.s32.totalorder %s84, 0
      %p493 = por %p491, %p492
      %p494 = scmp.ne.s32.totalorder %s482, %s483
      %p495 = scmp.eq.s32.totalorder %s85, 1
      %p496 = por %p494, %p495
      %p498 = scmp.ne.s32.totalorder %s483, %s497
      %p499 = scmp.eq.s32.totalorder %s85, 0
      %p500 = por %p498, %p499
      %s502 = sadd.s32 %s501, 1
      %p505 = scmp.eq.s32.totalorder %s79, 1
      %p506 = scmp.ne.s32.totalorder %s501, %s503
      %p507 = scmp.eq.s32.totalorder %s79, 0
      %p508 = por %p506, %p507
      %p509 = scmp.ne.s32.totalorder %s501, %s503
      %p510 = scmp.eq.s32.totalorder %s84, 1
      %p511 = por %p509, %p510
      %p512 = scmp.ne.s32.totalorder %s503, %s504
      %p513 = scmp.eq.s32.totalorder %s84, 0
      %p514 = por %p512, %p513
      %p515 = scmp.ne.s32.totalorder %s503, %s504
      %p516 = scmp.eq.s32.totalorder %s85, 1
      %p517 = por %p515, %p516
      %p519 = scmp.ne.s32.totalorder %s504, %s518
      %p520 = scmp.eq.s32.totalorder %s85, 0
      %p521 = por %p519, %p520
      %s523 = sadd.s32 %s522, 1
      %p526 = scmp.eq.s32.totalorder %s79, 1
      %p527 = scmp.ne.s32.totalorder %s522, %s524
      %p528 = scmp.eq.s32.totalorder %s79, 0
      %p529 = por %p527, %p528
      %p530 = scmp.ne.s32.totalorder %s522, %s524
      %p531 = scmp.eq.s32.totalorder %s84, 1
      %p532 = por %p530, %p531
      %p533 = scmp.ne.s32.totalorder %s524, %s525
      %p534 = scmp.eq.s32.totalorder %s84, 0
      %p535 = por %p533, %p534
      %p536 = scmp.ne.s32.totalorder %s524, %s525
      %p537 = scmp.eq.s32.totalorder %s85, 1
      %p538 = por %p536, %p537
      %p540 = scmp.ne.s32.totalorder %s525, %s539
      %p541 = scmp.eq.s32.totalorder %s85, 0
      %p542 = por %p540, %p541
      %s544 = sadd.s32 %s543, 1
      %p547 = scmp.eq.s32.totalorder %s79, 1
      %p548 = scmp.ne.s32.totalorder %s543, %s545
      %p549 = scmp.eq.s32.totalorder %s79, 0
      %p550 = por %p548, %p549
      %p551 = scmp.ne.s32.totalorder %s543, %s545
      %p552 = scmp.eq.s32.totalorder %s84, 1
      %p553 = por %p551, %p552
      %p554 = scmp.ne.s32.totalorder %s545, %s546
      %p555 = scmp.eq.s32.totalorder %s84, 0
      %p556 = por %p554, %p555
      %p557 = scmp.ne.s32.totalorder %s545, %s546
      %p558 = scmp.eq.s32.totalorder %s85, 1
      %p559 = por %p557, %p558
      %p561 = scmp.ne.s32.totalorder %s546, %s560
      %p562 = scmp.eq.s32.totalorder %s85, 0
      %p563 = por %p561, %p562
      %s565 = sadd.s32 %s564, 1
      %p568 = scmp.eq.s32.totalorder %s79, 1
      %p569 = scmp.ne.s32.totalorder %s564, %s566
      %p570 = scmp.eq.s32.totalorder %s79, 0
      %p571 = por %p569, %p570
      %p572 = scmp.ne.s32.totalorder %s564, %s566
      %p573 = scmp.eq.s32.totalorder %s84, 1
      %p574 = por %p572, %p573
      %p575 = scmp.ne.s32.totalorder %s566, %s567
      %p576 = scmp.eq.s32.totalorder %s84, 0
      %p577 = por %p575, %p576
      %p578 = scmp.ne.s32.totalorder %s566, %s567
      %p579 = scmp.eq.s32.totalorder %s85, 1
      %p580 = por %p578, %p579
      %p582 = scmp.ne.s32.totalorder %s567, %s581
      %p583 = scmp.eq.s32.totalorder %s85, 0
      %p584 = por %p582, %p583
      %s586 = sadd.s32 %s585, 1
      %p589 = scmp.eq.s32.totalorder %s79, 1
      %p590 = scmp.ne.s32.totalorder %s585, %s587
      %p591 = scmp.eq.s32.totalorder %s79, 0
      %p592 = por %p590, %p591
      %p593 = scmp.ne.s32.totalorder %s585, %s587
      %p594 = scmp.eq.s32.totalorder %s84, 1
      %p595 = por %p593, %p594
      %p596 = scmp.ne.s32.totalorder %s587, %s588
      %p597 = scmp.eq.s32.totalorder %s84, 0
      %p598 = por %p596, %p597
      %p599 = scmp.ne.s32.totalorder %s587, %s588
      %p600 = scmp.eq.s32.totalorder %s85, 1
      %p601 = por %p599, %p600
      %p603 = scmp.ne.s32.totalorder %s588, %s602
      %p604 = scmp.eq.s32.totalorder %s85, 0
      %p605 = por %p603, %p604
      %s607 = sadd.s32 %s606, 1
      %p610 = scmp.eq.s32.totalorder %s79, 1
      %p611 = scmp.ne.s32.totalorder %s606, %s608
      %p612 = scmp.eq.s32.totalorder %s79, 0
      %p613 = por %p611, %p612
      %p614 = scmp.ne.s32.totalorder %s606, %s608
      %p615 = scmp.eq.s32.totalorder %s84, 1
      %p616 = por %p614, %p615
      %p617 = scmp.ne.s32.totalorder %s608, %s609
      %p618 = scmp.eq.s32.totalorder %s84, 0
      %p619 = por %p617, %p618
      %p620 = scmp.ne.s32.totalorder %s608, %s609
      %p621 = scmp.eq.s32.totalorder %s85, 1
      %p622 = por %p620, %p621
      %p624 = scmp.ne.s32.totalorder %s609, %s623
      %p625 = scmp.eq.s32.totalorder %s85, 0
      %p626 = por %p624, %p625
      %s628 = sadd.s32 %s627, 1
      %p631 = scmp.eq.s32.totalorder %s79, 1
      %p632 = scmp.ne.s32.totalorder %s627, %s629
      %p633 = scmp.eq.s32.totalorder %s79, 0
      %p634 = por %p632, %p633
      %p635 = scmp.ne.s32.totalorder %s627, %s629
      %p636 = scmp.eq.s32.totalorder %s84, 1
      %p637 = por %p635, %p636
      %p638 = scmp.ne.s32.totalorder %s629, %s630
      %p639 = scmp.eq.s32.totalorder %s84, 0
      %p640 = por %p638, %p639
      %p641 = scmp.ne.s32.totalorder %s629, %s630
      %p642 = scmp.eq.s32.totalorder %s85, 1
      %p643 = por %p641, %p642
      %p645 = scmp.ne.s32.totalorder %s630, %s644
      %p646 = scmp.eq.s32.totalorder %s85, 0
      %p647 = por %p645, %p646
      %s649 = sadd.s32 %s648, 1
      %p652 = scmp.eq.s32.totalorder %s79, 1
      %p653 = scmp.ne.s32.totalorder %s648, %s650
      %p654 = scmp.eq.s32.totalorder %s79, 0
      %p655 = por %p653, %p654
      %p656 = scmp.ne.s32.totalorder %s648, %s650
      %p657 = scmp.eq.s32.totalorder %s84, 1
      %p658 = por %p656, %p657
      %p659 = scmp.ne.s32.totalorder %s650, %s651
      %p660 = scmp.eq.s32.totalorder %s84, 0
      %p661 = por %p659, %p660
      %p662 = scmp.ne.s32.totalorder %s650, %s651
      %p663 = scmp.eq.s32.totalorder %s85, 1
      %p664 = por %p662, %p663
      %p666 = scmp.ne.s32.totalorder %s651, %s665
      %p667 = scmp.eq.s32.totalorder %s85, 0
      %p668 = por %p666, %p667
      %s670 = sadd.s32 %s669, 1
      %p673 = scmp.eq.s32.totalorder %s79, 1
      %p674 = scmp.ne.s32.totalorder %s669, %s671
      %p675 = scmp.eq.s32.totalorder %s79, 0
      %p676 = por %p674, %p675
      %p677 = scmp.ne.s32.totalorder %s669, %s671
      %p678 = scmp.eq.s32.totalorder %s84, 1
      %p679 = por %p677, %p678
      %p680 = scmp.ne.s32.totalorder %s671, %s672
      %p681 = scmp.eq.s32.totalorder %s84, 0
      %p682 = por %p680, %p681
      %p683 = scmp.ne.s32.totalorder %s671, %s672
      %p684 = scmp.eq.s32.totalorder %s85, 1
      %p685 = por %p683, %p684
      %p687 = scmp.ne.s32.totalorder %s672, %s686
      %p688 = scmp.eq.s32.totalorder %s85, 0
      %p689 = por %p687, %p688
      %s691 = sadd.s32 %s690, 1
      %p694 = scmp.eq.s32.totalorder %s79, 1
      %p695 = scmp.ne.s32.totalorder %s690, %s692
      %p696 = scmp.eq.s32.totalorder %s79, 0
      %p697 = por %p695, %p696
      %p698 = scmp.ne.s32.totalorder %s690, %s692
      %p699 = scmp.eq.s32.totalorder %s84, 1
      %p700 = por %p698, %p699
      %p701 = scmp.ne.s32.totalorder %s692, %s693
      %p702 = scmp.eq.s32.totalorder %s84, 0
      %p703 = por %p701, %p702
      %p704 = scmp.ne.s32.totalorder %s692, %s693
      %p705 = scmp.eq.s32.totalorder %s85, 1
      %p706 = por %p704, %p705
      %p708 = scmp.ne.s32.totalorder %s693, %s707
      %p709 = scmp.eq.s32.totalorder %s85, 0
      %p710 = por %p708, %p709
      %s711 = ssub.s32 %s79, %s86
      %p712 = scmp.eq.s32.totalorder %s711, 0
      %s714 = sadd.s32 %s713, 1
      %s715 = scalar_select %p712, %s713, %s714
      %p718 = pneg %p712
      %p719 = scmp.eq.s32.totalorder %s79, 1
      %p720 = por %p718, %p719
      %p721 = scmp.ne.s32.totalorder %s713, %s716
      %p722 = scmp.eq.s32.totalorder %s79, 0
      %p723 = por %p721, %p722
      %p724 = scmp.ne.s32.totalorder %s713, %s716
      %p725 = scmp.eq.s32.totalorder %s84, 1
      %p726 = por %p724, %p725
      %p727 = scmp.ne.s32.totalorder %s716, %s717
      %p728 = scmp.eq.s32.totalorder %s84, 0
      %p729 = por %p727, %p728
      %p730 = scmp.ne.s32.totalorder %s716, %s717
      %p731 = scmp.eq.s32.totalorder %s85, 1
      %p732 = por %p730, %p731
      %p734 = scmp.ne.s32.totalorder %s717, %s733
      %p735 = scmp.eq.s32.totalorder %s85, 0
      %p736 = por %p734, %p735
      %p737 = scmp.le.s32.totalorder 1, %s79
      %p738 = scmp.lt.s32.totalorder %s79, 3
      %p739 = pnand %p737, %p738
      %p740 = pneg %p739
      // Predicated region
      $region9: #{tpu_custom_call.1} parent=5 // pred_check
        _
      $region10: #{tpu_custom_call.1} parent=5 // pred_check_branch
        %742 = sbr.rel (%p739) target = $region12
      $region11: #{tpu_custom_call.1} parent=5 // pred_region
        %s743 = ssub.s32 %s79, 1
        // Predicated region
        $region13: #{tpu_custom_call.1} parent=11 // pred_check
          %p744 = pneg %p178
        $region14: #{tpu_custom_call.1} parent=11 // pred_check_branch
          %746 = sbr.rel (%p744) target = $region16
        $region15: #{tpu_custom_call.1} parent=11 // pred_region
          _
        $region16: #{tpu_custom_call.1} parent=11 // pred_fallthru
          _
        // Predicated region
        $region17: #{tpu_custom_call.1} parent=11 // pred_check
          %p747 = pneg %p199
        $region18: #{tpu_custom_call.1} parent=11 // pred_check_branch
          %749 = sbr.rel (%p747) target = $region20
        $region19: #{tpu_custom_call.1} parent=11 // pred_region
          _
        $region20: #{tpu_custom_call.1} parent=11 // pred_fallthru
          _
        // Predicated region
        $region21: #{tpu_custom_call.1} parent=11 // pred_check
          %p750 = pneg %p220
        $region22: #{tpu_custom_call.1} parent=11 // pred_check_branch
          %752 = sbr.rel (%p750) target = $region24
        $region23: #{tpu_custom_call.1} parent=11 // pred_region
          %754 = vsyncadd [#allocation7], 0
          %s755 = sshll.u32 %s11, 4
          %s756 = int_to_ptr.hbm [resolvable:$true] %s755
          %s757 = sshll.u32 [#allocation6], 4
          %s758 = int_to_ptr.vmem [resolvable:$true] %s757
          %763 = dma.hbm_to_vmem [thread:$0]  %s756, 256, %s758, [#allocation7], 64, 64, 4
        $region24: #{tpu_custom_call.1} parent=11 // pred_fallthru
          _
        // Predicated region
        $region25: #{tpu_custom_call.1} parent=11 // pred_check
          %p764 = pneg %p241
        $region26: #{tpu_custom_call.1} parent=11 // pred_check_branch
          %766 = sbr.rel (%p764) target = $region28
        $region27: #{tpu_custom_call.1} parent=11 // pred_region
          _
        $region28: #{tpu_custom_call.1} parent=11 // pred_fallthru
          _
        // Predicated region
        $region29: #{tpu_custom_call.1} parent=11 // pred_check
          %p767 = pneg %p262
        $region30: #{tpu_custom_call.1} parent=11 // pred_check_branch
          %769 = sbr.rel (%p767) target = $region32
        $region31: #{tpu_custom_call.1} parent=11 // pred_region
          %771 = vsyncadd [#allocation7], 0
          %s772 = sshll.u32 %s15, 4
          %s773 = int_to_ptr.hbm [resolvable:$true] %s772
          %s774 = sshll.u32 [#allocation8], 4
          %s775 = int_to_ptr.vmem [resolvable:$true] %s774
          %780 = dma.hbm_to_vmem [thread:$0]  %s773, 256, %s775, [#allocation7], 64, 64, 4
        $region32: #{tpu_custom_call.1} parent=11 // pred_fallthru
          _
        // Predicated region
        $region33: #{tpu_custom_call.1} parent=11 // pred_check
          %p781 = pneg %p283
        $region34: #{tpu_custom_call.1} parent=11 // pred_check_branch
          %783 = sbr.rel (%p781) target = $region36
        $region35: #{tpu_custom_call.1} parent=11 // pred_region
          _
        $region36: #{tpu_custom_call.1} parent=11 // pred_fallthru
          _
        // Predicated region
        $region37: #{tpu_custom_call.1} parent=11 // pred_check
          %p784 = pneg %p304
        $region38: #{tpu_custom_call.1} parent=11 // pred_check_branch
          %786 = sbr.rel (%p784) target = $region40
        $region39: #{tpu_custom_call.1} parent=11 // pred_region
          %788 = vsyncadd [#allocation10], 0
          %s789 = sshll.u32 %s19, 4
          %s790 = int_to_ptr.hbm [resolvable:$true] %s789
          %s791 = sshll.u32 [#allocation9], 4
          %s792 = int_to_ptr.vmem [resolvable:$true] %s791
          %797 = dma.hbm_to_vmem [thread:$0]  %s790, 256, %s792, [#allocation10], 64, 64, 4
        $region40: #{tpu_custom_call.1} parent=11 // pred_fallthru
          _
        // Predicated region
        $region41: #{tpu_custom_call.1} parent=11 // pred_check
          %p798 = pneg %p325
        $region42: #{tpu_custom_call.1} parent=11 // pred_check_branch
          %800 = sbr.rel (%p798) target = $region44
        $region43: #{tpu_custom_call.1} parent=11 // pred_region
          _
        $region44: #{tpu_custom_call.1} parent=11 // pred_fallthru
          _
        // Predicated region
        $region45: #{tpu_custom_call.1} parent=11 // pred_check
          %p801 = pneg %p346
        $region46: #{tpu_custom_call.1} parent=11 // pred_check_branch
          %803 = sbr.rel (%p801) target = $region48
        $region47: #{tpu_custom_call.1} parent=11 // pred_region
          %805 = vsyncadd [#allocation10], 0
          %s806 = sshll.u32 %s23, 4
          %s807 = int_to_ptr.hbm [resolvable:$true] %s806
          %s808 = sshll.u32 [#allocation11], 4
          %s809 = int_to_ptr.vmem [resolvable:$true] %s808
          %814 = dma.hbm_to_vmem [thread:$0]  %s807, 256, %s809, [#allocation10], 64, 64, 4
        $region48: #{tpu_custom_call.1} parent=11 // pred_fallthru
          _
        // Predicated region
        $region49: #{tpu_custom_call.1} parent=11 // pred_check
          %p815 = pneg %p367
        $region50: #{tpu_custom_call.1} parent=11 // pred_check_branch
          %817 = sbr.rel (%p815) target = $region52
        $region51: #{tpu_custom_call.1} parent=11 // pred_region
          _
        $region52: #{tpu_custom_call.1} parent=11 // pred_fallthru
          _
        // Predicated region
        $region53: #{tpu_custom_call.1} parent=11 // pred_check
          %p818 = pneg %p388
        $region54: #{tpu_custom_call.1} parent=11 // pred_check_branch
          %820 = sbr.rel (%p818) target = $region56
        $region55: #{tpu_custom_call.1} parent=11 // pred_region
          _
        $region56: #{tpu_custom_call.1} parent=11 // pred_fallthru
          _
        // Predicated region
        $region57: #{tpu_custom_call.1} parent=11 // pred_check
          %p821 = pneg %p409
        $region58: #{tpu_custom_call.1} parent=11 // pred_check_branch
          %823 = sbr.rel (%p821) target = $region60
        $region59: #{tpu_custom_call.1} parent=11 // pred_region
          _
        $region60: #{tpu_custom_call.1} parent=11 // pred_fallthru
          _
        // Predicated region
        $region61: #{tpu_custom_call.1} parent=11 // pred_check
          %p824 = pneg %p430
        $region62: #{tpu_custom_call.1} parent=11 // pred_check_branch
          %826 = sbr.rel (%p824) target = $region64
        $region63: #{tpu_custom_call.1} parent=11 // pred_region
          %828 = vsyncadd [#allocation13], 0
          %s829 = sshll.u32 %s31, 4
          %s830 = int_to_ptr.hbm [resolvable:$true] %s829
          %s831 = sshll.u32 [#allocation12], 4
          %s832 = int_to_ptr.vmem [resolvable:$true] %s831
          %837 = dma.hbm_to_vmem [thread:$0]  %s830, 256, %s832, [#allocation13], 64, 64, 4
        $region64: #{tpu_custom_call.1} parent=11 // pred_fallthru
          _
        // Predicated region
        $region65: #{tpu_custom_call.1} parent=11 // pred_check
          %p838 = pneg %p451
        $region66: #{tpu_custom_call.1} parent=11 // pred_check_branch
          %840 = sbr.rel (%p838) target = $region68
        $region67: #{tpu_custom_call.1} parent=11 // pred_region
          _
        $region68: #{tpu_custom_call.1} parent=11 // pred_fallthru
          _
        // Predicated region
        $region69: #{tpu_custom_call.1} parent=11 // pred_check
          %p841 = pneg %p472
        $region70: #{tpu_custom_call.1} parent=11 // pred_check_branch
          %843 = sbr.rel (%p841) target = $region72
        $region71: #{tpu_custom_call.1} parent=11 // pred_region
          %845 = vsyncadd [#allocation13], 0
          %s846 = sshll.u32 %s35, 4
          %s847 = int_to_ptr.hbm [resolvable:$true] %s846
          %s848 = sshll.u32 [#allocation14], 4
          %s849 = int_to_ptr.vmem [resolvable:$true] %s848
          %854 = dma.hbm_to_vmem [thread:$0]  %s847, 256, %s849, [#allocation13], 64, 64, 4
        $region72: #{tpu_custom_call.1} parent=11 // pred_fallthru
          _
        // Predicated region
        $region73: #{tpu_custom_call.1} parent=11 // pred_check
          %p855 = pneg %p493
        $region74: #{tpu_custom_call.1} parent=11 // pred_check_branch
          %857 = sbr.rel (%p855) target = $region76
        $region75: #{tpu_custom_call.1} parent=11 // pred_region
          %859 = vsyncadd [#allocation16], 0
          %s861 = sshll.u32 %s37, 4
          %s862 = int_to_ptr.hbm [resolvable:$true] %s861
          %s863 = sshll.u32 [#allocation15], 4
          %s864 = int_to_ptr.vmem [resolvable:$true] %s863
          %866 = dma.hbm_to_vmem [thread:$0]  %s862, 16, %s864, [#allocation16]
        $region76: #{tpu_custom_call.1} parent=11 // pred_fallthru
          _
        // Predicated region
        $region77: #{tpu_custom_call.1} parent=11 // pred_check
          %p867 = pneg %p514
        $region78: #{tpu_custom_call.1} parent=11 // pred_check_branch
          %869 = sbr.rel (%p867) target = $region80
        $region79: #{tpu_custom_call.1} parent=11 // pred_region
          %871 = vsyncadd [#allocation16], 0
          %s872 = sshll.u32 %s39, 4
          %s873 = int_to_ptr.hbm [resolvable:$true] %s872
          %s874 = sshll.u32 [#allocation17], 4
          %s875 = int_to_ptr.vmem [resolvable:$true] %s874
          %880 = dma.hbm_to_vmem [thread:$0]  %s873, 256, %s875, [#allocation16], 64, 64, 4
        $region80: #{tpu_custom_call.1} parent=11 // pred_fallthru
          _
        // Predicated region
        $region81: #{tpu_custom_call.1} parent=11 // pred_check
          %p881 = pneg %p535
        $region82: #{tpu_custom_call.1} parent=11 // pred_check_branch
          %883 = sbr.rel (%p881) target = $region84
        $region83: #{tpu_custom_call.1} parent=11 // pred_region
          %885 = vsyncadd [#allocation19], 0
          %s887 = sshll.u32 %s41, 4
          %s888 = int_to_ptr.hbm [resolvable:$true] %s887
          %s889 = sshll.u32 [#allocation18], 4
          %s890 = int_to_ptr.vmem [resolvable:$true] %s889
          %892 = dma.hbm_to_vmem [thread:$0]  %s888, 16, %s890, [#allocation19]
        $region84: #{tpu_custom_call.1} parent=11 // pred_fallthru
          _
        // Predicated region
        $region85: #{tpu_custom_call.1} parent=11 // pred_check
          %p893 = pneg %p556
        $region86: #{tpu_custom_call.1} parent=11 // pred_check_branch
          %895 = sbr.rel (%p893) target = $region88
        $region87: #{tpu_custom_call.1} parent=11 // pred_region
          %897 = vsyncadd [#allocation19], 0
          %s898 = sshll.u32 %s43, 4
          %s899 = int_to_ptr.hbm [resolvable:$true] %s898
          %s900 = sshll.u32 [#allocation20], 4
          %s901 = int_to_ptr.vmem [resolvable:$true] %s900
          %906 = dma.hbm_to_vmem [thread:$0]  %s899, 256, %s901, [#allocation19], 64, 64, 4
        $region88: #{tpu_custom_call.1} parent=11 // pred_fallthru
          _
        // Predicated region
        $region89: #{tpu_custom_call.1} parent=11 // pred_check
          %p907 = pneg %p577
        $region90: #{tpu_custom_call.1} parent=11 // pred_check_branch
          %909 = sbr.rel (%p907) target = $region92
        $region91: #{tpu_custom_call.1} parent=11 // pred_region
          %911 = vsyncadd [#allocation22], 0
          %s913 = sshll.u32 %s45, 4
          %s914 = int_to_ptr.hbm [resolvable:$true] %s913
          %s915 = sshll.u32 [#allocation21], 4
          %s916 = int_to_ptr.vmem [resolvable:$true] %s915
          %918 = dma.hbm_to_vmem [thread:$0]  %s914, 16, %s916, [#allocation22]
        $region92: #{tpu_custom_call.1} parent=11 // pred_fallthru
          _
        // Predicated region
        $region93: #{tpu_custom_call.1} parent=11 // pred_check
          %p919 = pneg %p598
        $region94: #{tpu_custom_call.1} parent=11 // pred_check_branch
          %921 = sbr.rel (%p919) target = $region96
        $region95: #{tpu_custom_call.1} parent=11 // pred_region
          %923 = vsyncadd [#allocation22], 0
          %s925 = sshll.u32 %s47, 4
          %s926 = int_to_ptr.hbm [resolvable:$true] %s925
          %s927 = sshll.u32 [#allocation23], 4
          %s928 = int_to_ptr.vmem [resolvable:$true] %s927
          %930 = dma.hbm_to_vmem [thread:$0]  %s926, 16, %s928, [#allocation22]
        $region96: #{tpu_custom_call.1} parent=11 // pred_fallthru
          _
        // Predicated region
        $region97: #{tpu_custom_call.1} parent=11 // pred_check
          %p931 = pneg %p619
        $region98: #{tpu_custom_call.1} parent=11 // pred_check_branch
          %933 = sbr.rel (%p931) target = $region100
        $region99: #{tpu_custom_call.1} parent=11 // pred_region
          %935 = vsyncadd [#allocation25], 0
          %s937 = sshll.u32 %s49, 4
          %s938 = int_to_ptr.hbm [resolvable:$true] %s937
          %s939 = sshll.u32 [#allocation24], 4
          %s940 = int_to_ptr.vmem [resolvable:$true] %s939
          %942 = dma.hbm_to_vmem [thread:$0]  %s938, 16, %s940, [#allocation25]
        $region100: #{tpu_custom_call.1} parent=11 // pred_fallthru
          _
        // Predicated region
        $region101: #{tpu_custom_call.1} parent=11 // pred_check
          %p943 = pneg %p640
        $region102: #{tpu_custom_call.1} parent=11 // pred_check_branch
          %945 = sbr.rel (%p943) target = $region104
        $region103: #{tpu_custom_call.1} parent=11 // pred_region
          %947 = vsyncadd [#allocation25], 0
          %s948 = sshll.u32 %s51, 4
          %s949 = int_to_ptr.hbm [resolvable:$true] %s948
          %s950 = sshll.u32 [#allocation26], 4
          %s951 = int_to_ptr.vmem [resolvable:$true] %s950
          %956 = dma.hbm_to_vmem [thread:$0]  %s949, 256, %s951, [#allocation25], 64, 64, 4
        $region104: #{tpu_custom_call.1} parent=11 // pred_fallthru
          _
        // Predicated region
        $region105: #{tpu_custom_call.1} parent=11 // pred_check
          %p957 = pneg %p661
        $region106: #{tpu_custom_call.1} parent=11 // pred_check_branch
          %959 = sbr.rel (%p957) target = $region108
        $region107: #{tpu_custom_call.1} parent=11 // pred_region
          %961 = vsyncadd [#allocation28], 0
          %s963 = sshll.u32 %s53, 4
          %s964 = int_to_ptr.hbm [resolvable:$true] %s963
          %s965 = sshll.u32 [#allocation27], 4
          %s966 = int_to_ptr.vmem [resolvable:$true] %s965
          %968 = dma.hbm_to_vmem [thread:$0]  %s964, 16, %s966, [#allocation28]
        $region108: #{tpu_custom_call.1} parent=11 // pred_fallthru
          _
        // Predicated region
        $region109: #{tpu_custom_call.1} parent=11 // pred_check
          %p969 = pneg %p682
        $region110: #{tpu_custom_call.1} parent=11 // pred_check_branch
          %971 = sbr.rel (%p969) target = $region112
        $region111: #{tpu_custom_call.1} parent=11 // pred_region
          _
        $region112: #{tpu_custom_call.1} parent=11 // pred_fallthru
          _
        // Predicated region
        $region113: #{tpu_custom_call.1} parent=11 // pred_check
          %p972 = pneg %p703
        $region114: #{tpu_custom_call.1} parent=11 // pred_check_branch
          %974 = sbr.rel (%p972) target = $region116
        $region115: #{tpu_custom_call.1} parent=11 // pred_region
          _
        $region116: #{tpu_custom_call.1} parent=11 // pred_fallthru
          _
      $region12: #{tpu_custom_call.1} parent=5 // pred_fallthru
        _
      %p975 = scmp.lt.s32.totalorder %s79, 2
      // Predicated region
      $region117: #{tpu_custom_call.1} parent=5 // pred_check
        %p976 = pneg %p975
      $region118: #{tpu_custom_call.1} parent=5 // pred_check_branch
        %978 = sbr.rel (%p976) target = $region120
      $region119: #{tpu_custom_call.1} parent=5 // pred_region
        // Predicated region
        $region121: #{tpu_custom_call.1} parent=119 // pred_check
          %p979 = pneg %p99
        $region122: #{tpu_custom_call.1} parent=119 // pred_check_branch
          %981 = sbr.rel (%p979) target = $region124
        $region123: #{tpu_custom_call.1} parent=119 // pred_region
          %p982 = scmp.lt.s32.totalorder %s79, 1
          %s983 = scalar_select %p982, %s79, 1
          %s984 = smul.addr %s983, 8
          %s985 = scalar_lea.vmem %s1, %s984
        $region124: #{tpu_custom_call.1} parent=119 // pred_fallthru
          _
        // Predicated region
        $region125: #{tpu_custom_call.1} parent=119 // pred_check
          %p986 = pneg %p125
        $region126: #{tpu_custom_call.1} parent=119 // pred_check_branch
          %988 = sbr.rel (%p986) target = $region128
        $region127: #{tpu_custom_call.1} parent=119 // pred_region
          %p989 = scmp.lt.s32.totalorder %s79, 1
          %s990 = scalar_select %p989, %s79, 1
          %s991 = smul.addr %s990, 2
          %s992 = smul.addr %s991, 8
          %s993 = scalar_lea.vmem %s3, %s992
        $region128: #{tpu_custom_call.1} parent=119 // pred_fallthru
          _
        // Predicated region
        $region129: #{tpu_custom_call.1} parent=119 // pred_check
          %p994 = pneg %p151
        $region130: #{tpu_custom_call.1} parent=119 // pred_check_branch
          %996 = sbr.rel (%p994) target = $region132
        $region131: #{tpu_custom_call.1} parent=119 // pred_region
          %s997 = sand.u32 %s141, 1
          %s998 = scalar_lea.sflag [#allocation4], %s997
          %s999 = sand.u32 %s141, 1
          %s1000 = scalar_lea.vmem [#allocation3], %s999
          %1002 = vsyncadd %s998, 0
          %s1003 = scalar_lea.hbm %s5, %s79
          %s1005 = sshll.u32 %s1003, 4
          %s1006 = int_to_ptr.hbm [resolvable:$true] %s1005
          %s1007 = sshll.u32 %s1000, 4
          %s1008 = int_to_ptr.vmem [resolvable:$true] %s1007
          %1010 = dma.hbm_to_vmem [thread:$0]  %s1006, 16, %s1008, %s998
        $region132: #{tpu_custom_call.1} parent=119 // pred_fallthru
          _
      $region120: #{tpu_custom_call.1} parent=5 // pred_fallthru
        _
      %p1011 = scmp.le.s32.totalorder 1, %s79
      %p1012 = scmp.lt.s32.totalorder %s79, 3
      %p1013 = pnand %p1011, %p1012
      %p1014 = pneg %p1013
      // Predicated region
      $region133: #{tpu_custom_call.1} parent=5 // pred_check
        _
      $region134: #{tpu_custom_call.1} parent=5 // pred_check_branch
        %1016 = sbr.rel (%p1013) target = $region136
      $region135: #{tpu_custom_call.1} parent=5 // pred_region
        %s1017 = ssub.s32 %s79, 1
        %s1018 = sand.u32 %s144, 1
        %s1019 = scalar_lea.sflag [#allocation4], %s1018
        %s1020 = sand.u32 %s144, 1
        %s1021 = scalar_lea.vmem [#allocation3], %s1020
        // Predicated region
        $region137: #{tpu_custom_call.1} parent=135 // pred_check
          %p1022 = pneg %p157
        $region138: #{tpu_custom_call.1} parent=135 // pred_check_branch
          %1024 = sbr.rel (%p1022) target = $region140
        $region139: #{tpu_custom_call.1} parent=135 // pred_region
          %1026 = dma.done %s1019, 16
        $region140: #{tpu_custom_call.1} parent=135 // pred_fallthru
          _
        // Predicated region
        $region141: #{tpu_custom_call.1} parent=135 // pred_check
          %p1027 = pneg %p220
        $region142: #{tpu_custom_call.1} parent=135 // pred_check_branch
          %1029 = sbr.rel (%p1027) target = $region144
        $region143: #{tpu_custom_call.1} parent=135 // pred_region
          %1031 = dma.done [#allocation7], 256
        $region144: #{tpu_custom_call.1} parent=135 // pred_fallthru
          _
        // Predicated region
        $region145: #{tpu_custom_call.1} parent=135 // pred_check
          %p1032 = pneg %p262
        $region146: #{tpu_custom_call.1} parent=135 // pred_check_branch
          %1034 = sbr.rel (%p1032) target = $region148
        $region147: #{tpu_custom_call.1} parent=135 // pred_region
          %1036 = dma.done [#allocation7], 256
        $region148: #{tpu_custom_call.1} parent=135 // pred_fallthru
          _
        // Predicated region
        $region149: #{tpu_custom_call.1} parent=135 // pred_check
          %p1037 = pneg %p304
        $region150: #{tpu_custom_call.1} parent=135 // pred_check_branch
          %1039 = sbr.rel (%p1037) target = $region152
        $region151: #{tpu_custom_call.1} parent=135 // pred_region
          %1041 = dma.done [#allocation10], 256
        $region152: #{tpu_custom_call.1} parent=135 // pred_fallthru
          _
        // Predicated region
        $region153: #{tpu_custom_call.1} parent=135 // pred_check
          %p1042 = pneg %p346
        $region154: #{tpu_custom_call.1} parent=135 // pred_check_branch
          %1044 = sbr.rel (%p1042) target = $region156
        $region155: #{tpu_custom_call.1} parent=135 // pred_region
          %1046 = dma.done [#allocation10], 256
        $region156: #{tpu_custom_call.1} parent=135 // pred_fallthru
          _
        // Predicated region
        $region157: #{tpu_custom_call.1} parent=135 // pred_check
          %p1047 = pneg %p430
        $region158: #{tpu_custom_call.1} parent=135 // pred_check_branch
          %1049 = sbr.rel (%p1047) target = $region160
        $region159: #{tpu_custom_call.1} parent=135 // pred_region
          %1051 = dma.done [#allocation13], 256
        $region160: #{tpu_custom_call.1} parent=135 // pred_fallthru
          _
        // Predicated region
        $region161: #{tpu_custom_call.1} parent=135 // pred_check
          %p1052 = pneg %p472
        $region162: #{tpu_custom_call.1} parent=135 // pred_check_branch
          %1054 = sbr.rel (%p1052) target = $region164
        $region163: #{tpu_custom_call.1} parent=135 // pred_region
          %1056 = dma.done [#allocation13], 256
        $region164: #{tpu_custom_call.1} parent=135 // pred_fallthru
          _
        // Predicated region
        $region165: #{tpu_custom_call.1} parent=135 // pred_check
          %p1057 = pneg %p493
        $region166: #{tpu_custom_call.1} parent=135 // pred_check_branch
          %1059 = sbr.rel (%p1057) target = $region168
        $region167: #{tpu_custom_call.1} parent=135 // pred_region
          %1061 = dma.done [#allocation16], 16
        $region168: #{tpu_custom_call.1} parent=135 // pred_fallthru
          _
        // Predicated region
        $region169: #{tpu_custom_call.1} parent=135 // pred_check
          %p1062 = pneg %p514
        $region170: #{tpu_custom_call.1} parent=135 // pred_check_branch
          %1064 = sbr.rel (%p1062) target = $region172
        $region171: #{tpu_custom_call.1} parent=135 // pred_region
          %1066 = dma.done [#allocation16], 256
        $region172: #{tpu_custom_call.1} parent=135 // pred_fallthru
          _
        // Predicated region
        $region173: #{tpu_custom_call.1} parent=135 // pred_check
          %p1067 = pneg %p535
        $region174: #{tpu_custom_call.1} parent=135 // pred_check_branch
          %1069 = sbr.rel (%p1067) target = $region176
        $region175: #{tpu_custom_call.1} parent=135 // pred_region
          %1071 = dma.done [#allocation19], 16
        $region176: #{tpu_custom_call.1} parent=135 // pred_fallthru
          _
        // Predicated region
        $region177: #{tpu_custom_call.1} parent=135 // pred_check
          %p1072 = pneg %p556
        $region178: #{tpu_custom_call.1} parent=135 // pred_check_branch
          %1074 = sbr.rel (%p1072) target = $region180
        $region179: #{tpu_custom_call.1} parent=135 // pred_region
          %1076 = dma.done [#allocation19], 256
        $region180: #{tpu_custom_call.1} parent=135 // pred_fallthru
          _
        // Predicated region
        $region181: #{tpu_custom_call.1} parent=135 // pred_check
          %p1077 = pneg %p577
        $region182: #{tpu_custom_call.1} parent=135 // pred_check_branch
          %1079 = sbr.rel (%p1077) target = $region184
        $region183: #{tpu_custom_call.1} parent=135 // pred_region
          %1081 = dma.done [#allocation22], 16
        $region184: #{tpu_custom_call.1} parent=135 // pred_fallthru
          _
        // Predicated region
        $region185: #{tpu_custom_call.1} parent=135 // pred_check
          %p1082 = pneg %p598
        $region186: #{tpu_custom_call.1} parent=135 // pred_check_branch
          %1084 = sbr.rel (%p1082) target = $region188
        $region187: #{tpu_custom_call.1} parent=135 // pred_region
          %1086 = dma.done [#allocation22], 16
        $region188: #{tpu_custom_call.1} parent=135 // pred_fallthru
          _
        // Predicated region
        $region189: #{tpu_custom_call.1} parent=135 // pred_check
          %p1087 = pneg %p619
        $region190: #{tpu_custom_call.1} parent=135 // pred_check_branch
          %1089 = sbr.rel (%p1087) target = $region192
        $region191: #{tpu_custom_call.1} parent=135 // pred_region
          %1091 = dma.done [#allocation25], 16
        $region192: #{tpu_custom_call.1} parent=135 // pred_fallthru
          _
        // Predicated region
        $region193: #{tpu_custom_call.1} parent=135 // pred_check
          %p1092 = pneg %p640
        $region194: #{tpu_custom_call.1} parent=135 // pred_check_branch
          %1094 = sbr.rel (%p1092) target = $region196
        $region195: #{tpu_custom_call.1} parent=135 // pred_region
          %1096 = dma.done [#allocation25], 256
        $region196: #{tpu_custom_call.1} parent=135 // pred_fallthru
          _
        // Predicated region
        $region197: #{tpu_custom_call.1} parent=135 // pred_check
          %p1097 = pneg %p661
        $region198: #{tpu_custom_call.1} parent=135 // pred_check_branch
          %1099 = sbr.rel (%p1097) target = $region200
        $region199: #{tpu_custom_call.1} parent=135 // pred_region
          %1101 = dma.done [#allocation28], 16
        $region200: #{tpu_custom_call.1} parent=135 // pred_fallthru
          _
        %p1102 = scmp.lt.s32.totalorder %s84, 1
        %s1103 = scalar_select %p1102, %s84, 1
        %s1104 = smul.addr %s1103, 8
        %s1105 = scalar_lea.vmem %s1, %s1104
        %p1106 = pneg %p105
        %p1107 = pneg %p102
        %p1108 = scmp.lt.s32.totalorder %s84, 1
        %s1109 = scalar_select %p1108, %s84, 1
        %s1110 = smul.addr %s1109, 2
        %s1111 = smul.addr %s1110, 8
        %s1112 = scalar_lea.vmem %s3, %s1111
        %p1113 = pneg %p131
        %p1114 = pneg %p128
        %s1115 = sand.u32 %s144, 1
        %s1116 = scalar_lea.sflag [#allocation4], %s1115
        %s1117 = sand.u32 %s144, 1
        %s1118 = scalar_lea.vmem [#allocation3], %s1117
        %p1119 = pneg %p157
        %p1120 = pneg %p154
        %p1121 = pneg %p178
        %p1122 = pneg %p175
        %p1123 = pneg %p199
        %p1124 = pneg %p196
        %p1125 = pneg %p220
        %p1126 = pneg %p217
        %p1127 = pneg %p241
        %p1128 = pneg %p238
        %p1129 = pneg %p262
        %p1130 = pneg %p259
        %p1131 = pneg %p283
        %p1132 = pneg %p280
        %p1133 = pneg %p304
        %p1134 = pneg %p301
        %p1135 = pneg %p325
        %p1136 = pneg %p322
        %p1137 = pneg %p346
        %p1138 = pneg %p343
        %p1139 = pneg %p367
        %p1140 = pneg %p364
        %p1141 = pneg %p388
        %p1142 = pneg %p385
        %p1143 = pneg %p409
        %p1144 = pneg %p406
        %p1145 = pneg %p430
        %p1146 = pneg %p427
        %p1147 = pneg %p451
        %p1148 = pneg %p448
        %p1149 = pneg %p472
        %p1150 = pneg %p469
        %p1151 = pneg %p493
        %p1152 = pneg %p490
        %p1153 = pneg %p514
        %p1154 = pneg %p511
        %p1155 = pneg %p535
        %p1156 = pneg %p532
        %p1157 = pneg %p556
        %p1158 = pneg %p553
        %p1159 = pneg %p577
        %p1160 = pneg %p574
        %p1161 = pneg %p598
        %p1162 = pneg %p595
        %p1163 = pneg %p619
        %p1164 = pneg %p616
        %p1165 = pneg %p640
        %p1166 = pneg %p637
        %p1167 = pneg %p661
        %p1168 = pneg %p658
        %p1169 = pneg %p682
        %p1170 = pneg %p679
        %p1171 = pneg %p703
        %p1172 = pneg %p700
        %p1173 = pneg %p729
        %p1174 = pneg %p726
        %s1175 = sand.u32 %s716, 1
        %s1176 = scalar_lea.sflag [#allocation5], %s1175
        %s1177 = sand.u32 %s716, 1
        %s1178 = smul.addr %s1177, 8
        %s1179 = scalar_lea.vmem [#allocation29], %s1178
        %p1180 = scmp.lt.s32.totalorder %s84, 1
        %s1181 = scalar_select %p1180, %s84, 1
        %s1182 = smul.addr %s1181, 8
        %s1183 = scalar_lea.vmem %s1, %s1182
        %p1184 = scmp.lt.s32.totalorder %s84, 1
        %s1185 = scalar_select %p1184, %s84, 1
        %s1186 = smul.addr %s1185, 2
        %s1187 = smul.addr %s1186, 8
        %s1188 = scalar_lea.vmem %s3, %s1187
        %v1190 = vld [vmem:[%s1183] sm:$0xff]
        %v1191 = vlaneseq
        %v1192 = vshrl.u32 %v1191, 7
        %v1193 = vlaneseq
        %v1194 = vand.u32 %v1193, 127
        %vm1195 = vcmp.le.s32.totalorder %v1194, %v1192
        %v1196 = vld [vmem:[%s1021] sm:$0x1]
        %vm1197 = vcmp.ne.s32.totalorder %v1196, 0
        %v1198 = vld [vmem:[%s1188] sm:$0xff]
        %v1199 = vld [vmem:[%s1188 + $0x8] sm:$0xff]
        %v1200 = vpack.c.bf16 %v1199, %v1198
        %v1201 = vld [vmem:[%s7] sm:$0x1]
        %v1202 = vld [vmem:[%s9] sm:$0x1]
        %vm1203 = vcmask 261120
        %v1204 = vsel %vm1203, %v1190, 0.0
        %1205 = vadd.xlane.f32.xlu0 %v1204
        %v1206 = vpop.xlane.xlu0 %1205
        %v1207 = vrcp.pop 32.0
        %v1208 = vmul.f32 32.0, %v1207
        %v1209 = vsub.f32 1.0, %v1208
        %v1210 = vmul.f32 %v1207, %v1209
        %v1211 = vadd.f32 %v1207, %v1210
        %vm1212 = vweird.f32 %v1207
        %v1213 = vsel %vm1212, %v1207, %v1211
        %v1214 = vmul.f32 %v1206, %v1213
        %v1215 = vsub.f32 %v1190, %v1214
        %v1216 = vmul.f32 %v1215, %v1215
        %v1217 = vsel %vm1203, %v1216, 0.0
        %1218 = vadd.xlane.f32.xlu0 %v1217
        %v1219 = vpop.xlane.xlu0 %1218
        %v1220 = vmul.f32 %v1219, 0.032258064
        %v1221 = vrsqrt.pop %v1220
        %v1222 = vmul.f32 %v1221, %v1220
        %v1223 = vmul.f32 %v1222, %v1221
        %v1224 = vmul.f32 0.5, %v1223
        %v1225 = vsub.f32 1.5, %v1224
        %v1226 = vmul.f32 %v1221, %v1225
        %v1227 = vmul.f32 %v1220, %v1226
        %vm1228 = vcmp.eq.f32.partialorder %v1220, inf
        %v1229 = vsel %vm1228, %v1220, %v1227
        %vm1230 = vcmp.eq.f32.partialorder %v1220, 0.0
        %v1231 = vand.u32 %v1220, 2147483648
        %v1232 = vsel %vm1230, %v1231, %v1229
        %v1233 = vadd.f32 %v1232, 1e-06
        %v1234 = vrcp.pop %v1233
        %v1236 = vperm.slane %v1201, 0
        %v1238 = vmul.f32 %v1236, %v1215
        %v1239 = vmul.f32 %v1238, %v1234
        %v1241 = vperm.slane %v1202, 0
        %v1243 = vadd.f32 %v1239, %v1241
        %v1244 = vpack.c.bf16 %v1243, %v1243
        %v1245 = vld [vmem:[#allocation6] sm:$0xf]
        %v1246 = vld [vmem:[#allocation6 + $0x4] sm:$0xf]
        %v1247 = vld [vmem:[#allocation6 + $0x8] sm:$0xf]
        %v1248 = vld [vmem:[#allocation6 + $0xc] sm:$0xf]
        %v1249 = vld [vmem:[%s13] sm:$0x1]
        %v1251 = vperm.slane %v1249, 0
        %v1257 = vunpack.c.l.b16 %v1245
        %v1258 = vunpack.c.l.b16 %v1246
        %v1259 = vunpack.c.l.b16 %v1247
        %v1260 = vunpack.c.l.b16 %v1248
        %v1261 = vpack.c.b16 %v1258, %v1257
        %v1262 = vpack.c.b16 %v1260, %v1259
        %v1266 = vsel %vm1203, %v1244, 0
        %1268 = vmatpush.bf16.msra.mxu0 0
        %1269 = vmatpush.bf16.msra.mxu0 0
        %1270 = vmatpush.bf16.msra.mxu0 0
        %1271 = vmatpush.bf16.msra.mxu0 0
        %1272 = vmatpush.bf16.msra.mxu0 0
        %1273 = vmatpush.bf16.msra.mxu0 0
        %1274 = vmatpush.bf16.msra.mxu0 %v1262
        %1275 = vmatpush.bf16.msra.mxu0 %v1261
        %1276 = vmatmul.bf16.gmra.mxu0 %v1266
        %v1277 = vpop.f32.mrf.mxu0
        %v1278 = vadd.f32 %v1251, %v1277
        %v1279 = vpop.f32.mrf.mxu0
        %1280 = vdwg.mxu0
        %v1281 = vld [vmem:[#allocation8] sm:$0xf]
        %v1282 = vld [vmem:[#allocation8 + $0x4] sm:$0xf]
        %v1283 = vld [vmem:[#allocation8 + $0x8] sm:$0xf]
        %v1284 = vld [vmem:[#allocation8 + $0xc] sm:$0xf]
        %v1285 = vld [vmem:[%s17] sm:$0x1]
        %v1287 = vperm.slane %v1285, 0
        %v1293 = vunpack.c.l.b16 %v1281
        %v1294 = vunpack.c.l.b16 %v1282
        %v1295 = vunpack.c.l.b16 %v1283
        %v1296 = vunpack.c.l.b16 %v1284
        %v1297 = vpack.c.b16 %v1294, %v1293
        %v1298 = vpack.c.b16 %v1296, %v1295
        %1301 = vmatpush.bf16.msra.mxu0 0
        %1302 = vmatpush.bf16.msra.mxu0 0
        %1303 = vmatpush.bf16.msra.mxu0 0
        %1304 = vmatpush.bf16.msra.mxu0 0
        %1305 = vmatpush.bf16.msra.mxu0 0
        %1306 = vmatpush.bf16.msra.mxu0 0
        %1307 = vmatpush.bf16.msra.mxu0 %v1298
        %1308 = vmatpush.bf16.msra.mxu0 %v1297
        %1309 = vmatmul.bf16.gmra.mxu0 %v1266
        %v1310 = vpop.f32.mrf.mxu0
        %v1311 = vadd.f32 %v1287, %v1310
        %v1312 = vpop.f32.mrf.mxu0
        %1313 = vdwg.mxu0
        %v1314 = vld [vmem:[#allocation9] sm:$0xf]
        %v1315 = vld [vmem:[#allocation9 + $0x4] sm:$0xf]
        %v1316 = vld [vmem:[#allocation9 + $0x8] sm:$0xf]
        %v1317 = vld [vmem:[#allocation9 + $0xc] sm:$0xf]
        %v1318 = vld [vmem:[%s21] sm:$0x1]
        %v1320 = vperm.slane %v1318, 0
        %v1326 = vunpack.c.l.b16 %v1314
        %v1327 = vunpack.c.l.b16 %v1315
        %v1328 = vunpack.c.l.b16 %v1316
        %v1329 = vunpack.c.l.b16 %v1317
        %v1330 = vpack.c.b16 %v1327, %v1326
        %v1331 = vpack.c.b16 %v1329, %v1328
        %1334 = vmatpush.bf16.msra.mxu0 0
        %1335 = vmatpush.bf16.msra.mxu0 0
        %1336 = vmatpush.bf16.msra.mxu0 0
        %1337 = vmatpush.bf16.msra.mxu0 0
        %1338 = vmatpush.bf16.msra.mxu0 0
        %1339 = vmatpush.bf16.msra.mxu0 0
        %1340 = vmatpush.bf16.msra.mxu0 %v1331
        %1341 = vmatpush.bf16.msra.mxu0 %v1330
        %1342 = vmatmul.bf16.gmra.mxu0 %v1266
        %v1343 = vpop.f32.mrf.mxu0
        %v1344 = vadd.f32 %v1320, %v1343
        %v1345 = vpop.f32.mrf.mxu0
        %1346 = vdwg.mxu0
        %v1347 = vmul.f32 %v1278, 0.35355338
        %v1348 = vpack.c.bf16 %v1347, %v1347
        %v1349 = vpack.c.bf16 %v1311, %v1311
        %v1350 = vpack.c.bf16 %v1344, %v1344
        %vm1351 = vcmask 64512
        %v1353 = vsel %vm1351, %v1348, 0
        %v1356 = vsel %vm1351, %v1349, 0
        %1358 = vmatpush.bf16.xpose.msra.mxu0 0
        %1359 = vmatpush.bf16.xpose.msra.mxu0 0
        %1360 = vmatpush.bf16.xpose.msra.mxu0 0
        %1361 = vmatpush.bf16.xpose.msra.mxu0 0
        %1362 = vmatpush.bf16.xpose.msra.mxu0 0
        %1363 = vmatpush.bf16.xpose.msra.mxu0 0
        %1364 = vmatpush.bf16.xpose.msra.mxu0 0
        %1365 = vmatpush.bf16.xpose.msra.mxu0 %v1356
        %1366 = vmatmul.bf16.gmra.mxu0 %v1353
        %v1367 = vpop.f32.mrf.mxu0
        %v1368 = vadd.f32 0.0, %v1367
        %v1369 = vpop.f32.mrf.mxu0
        %1370 = vdwg.mxu0
        %v1371 = vsel %vm1195, %v1368, -1e+09
        %v1372 = vsel %vm1351, %v1371, -inf
        %1373 = vmax.xlane.f32.xlu0 %v1372
        %v1374 = vpop.xlane.xlu0 %1373
        %v1375 = vsub.f32 %v1371, %v1374
        %v1376 = vmul.f32 %v1375, 1.442695
        %v1377 = vpow.pop %v1376
        %v1378 = vsel %vm1351, %v1377, 0.0
        %1379 = vadd.xlane.f32.xlu0 %v1378
        %v1380 = vpop.xlane.xlu0 %1379
        %v1381 = vrcp.pop %v1380
        %v1382 = vmul.f32 %v1377, %v1381
        %v1383 = vpack.c.bf16 %v1382, %v1382
        %v1385 = vsel %vm1351, %v1383, 0
        %vm1387 = vcmask 1043456
        %v1389 = vsel %vm1387, %v1350, 0
        %1391 = vmatpush.bf16.msra.mxu0 0
        %1392 = vmatpush.bf16.msra.mxu0 0
        %1393 = vmatpush.bf16.msra.mxu0 0
        %1394 = vmatpush.bf16.msra.mxu0 0
        %1395 = vmatpush.bf16.msra.mxu0 0
        %1396 = vmatpush.bf16.msra.mxu0 0
        %1397 = vmatpush.bf16.msra.mxu0 0
        %1398 = vmatpush.bf16.msra.mxu0 %v1389
        %1399 = vmatmul.bf16.gmra.mxu0 %v1385
        %v1400 = vpop.f32.mrf.mxu0
        %v1401 = vadd.f32 0.0, %v1400
        %v1402 = vpop.f32.mrf.mxu0
        %1403 = vdwg.mxu0
        %1404 = vst.msk [vmem:[#allocation2] sm:$0xff] %vm1351, %v1401
        %v1406 = vunpack.c.l.b16 %v1348
        %v1407 = vpack.c.b16 %v1406, %v1406
        %1408 = vrot.lane.b32.xlu0 %v1407, 120
        %v1409 = vpop.permute.xlu0 %1408
        %v1411 = vunpack.c.l.b16 %v1349
        %v1412 = vpack.c.b16 %v1411, %v1411
        %1413 = vrot.lane.b32.xlu0 %v1412, 120
        %v1414 = vpop.permute.xlu0 %1413
        %v1416 = vsel %vm1351, %v1409, 0
        %v1419 = vsel %vm1351, %v1414, 0
        %1421 = vmatpush.bf16.xpose.msra.mxu0 0
        %1422 = vmatpush.bf16.xpose.msra.mxu0 0
        %1423 = vmatpush.bf16.xpose.msra.mxu0 0
        %1424 = vmatpush.bf16.xpose.msra.mxu0 0
        %1425 = vmatpush.bf16.xpose.msra.mxu0 0
        %1426 = vmatpush.bf16.xpose.msra.mxu0 0
        %1427 = vmatpush.bf16.xpose.msra.mxu0 0
        %1428 = vmatpush.bf16.xpose.msra.mxu0 %v1419
        %1429 = vmatmul.bf16.gmra.mxu0 %v1416
        %v1430 = vpop.f32.mrf.mxu0
        %v1431 = vadd.f32 0.0, %v1430
        %v1432 = vpop.f32.mrf.mxu0
        %1433 = vdwg.mxu0
        %v1434 = vsel %vm1195, %v1431, -1e+09
        %v1435 = vsel %vm1351, %v1434, -inf
        %1436 = vmax.xlane.f32.xlu0 %v1435
        %v1437 = vpop.xlane.xlu0 %1436
        %v1438 = vsub.f32 %v1434, %v1437
        %v1439 = vmul.f32 %v1438, 1.442695
        %v1440 = vpow.pop %v1439
        %v1441 = vsel %vm1351, %v1440, 0.0
        %1442 = vadd.xlane.f32.xlu0 %v1441
        %v1443 = vpop.xlane.xlu0 %1442
        %v1444 = vrcp.pop %v1443
        %v1445 = vmul.f32 %v1440, %v1444
        %v1446 = vpack.c.bf16 %v1445, %v1445
        %v1448 = vunpack.c.l.b16 %v1350
        %v1449 = vpack.c.b16 %v1448, %v1448
        %1450 = vrot.lane.b32.xlu0 %v1449, 120
        %v1451 = vpop.permute.xlu0 %1450
        %v1453 = vsel %vm1351, %v1446, 0
        %v1456 = vsel %vm1387, %v1451, 0
        %1458 = vmatpush.bf16.msra.mxu0 0
        %1459 = vmatpush.bf16.msra.mxu0 0
        %1460 = vmatpush.bf16.msra.mxu0 0
        %1461 = vmatpush.bf16.msra.mxu0 0
        %1462 = vmatpush.bf16.msra.mxu0 0
        %1463 = vmatpush.bf16.msra.mxu0 0
        %1464 = vmatpush.bf16.msra.mxu0 0
        %1465 = vmatpush.bf16.msra.mxu0 %v1456
        %1466 = vmatmul.bf16.gmra.mxu0 %v1453
        %v1467 = vpop.f32.mrf.mxu0
        %v1468 = vadd.f32 0.0, %v1467
        %v1469 = vpop.f32.mrf.mxu0
        %1470 = vdwg.mxu0
        %1472 = vrot.lane.b32.xlu0 %v1468, 8
        %v1473 = vpop.permute.xlu0 %1472
        %vm1475 = vcmask 130112
        %1476 = vst.msk [vmem:[#allocation2] sm:$0xff] %vm1475, %v1473
        %1477 = vrot.lane.b32.xlu0 %v1407, 112
        %v1478 = vpop.permute.xlu0 %1477
        %1479 = vrot.lane.b32.xlu0 %v1412, 112
        %v1480 = vpop.permute.xlu0 %1479
        %v1482 = vsel %vm1351, %v1478, 0
        %v1485 = vsel %vm1351, %v1480, 0
        %1487 = vmatpush.bf16.xpose.msra.mxu0 0
        %1488 = vmatpush.bf16.xpose.msra.mxu0 0
        %1489 = vmatpush.bf16.xpose.msra.mxu0 0
        %1490 = vmatpush.bf16.xpose.msra.mxu0 0
        %1491 = vmatpush.bf16.xpose.msra.mxu0 0
        %1492 = vmatpush.bf16.xpose.msra.mxu0 0
        %1493 = vmatpush.bf16.xpose.msra.mxu0 0
        %1494 = vmatpush.bf16.xpose.msra.mxu0 %v1485
        %1495 = vmatmul.bf16.gmra.mxu0 %v1482
        %v1496 = vpop.f32.mrf.mxu0
        %v1497 = vadd.f32 0.0, %v1496
        %v1498 = vpop.f32.mrf.mxu0
        %1499 = vdwg.mxu0
        %v1500 = vsel %vm1195, %v1497, -1e+09
        %v1501 = vsel %vm1351, %v1500, -inf
        %1502 = vmax.xlane.f32.xlu0 %v1501
        %v1503 = vpop.xlane.xlu0 %1502
        %v1504 = vsub.f32 %v1500, %v1503
        %v1505 = vmul.f32 %v1504, 1.442695
        %v1506 = vpow.pop %v1505
        %v1507 = vsel %vm1351, %v1506, 0.0
        %1508 = vadd.xlane.f32.xlu0 %v1507
        %v1509 = vpop.xlane.xlu0 %1508
        %v1510 = vrcp.pop %v1509
        %v1511 = vmul.f32 %v1506, %v1510
        %v1512 = vpack.c.bf16 %v1511, %v1511
        %1513 = vrot.lane.b32.xlu0 %v1449, 112
        %v1514 = vpop.permute.xlu0 %1513
        %v1516 = vsel %vm1351, %v1512, 0
        %v1519 = vsel %vm1387, %v1514, 0
        %1521 = vmatpush.bf16.msra.mxu0 0
        %1522 = vmatpush.bf16.msra.mxu0 0
        %1523 = vmatpush.bf16.msra.mxu0 0
        %1524 = vmatpush.bf16.msra.mxu0 0
        %1525 = vmatpush.bf16.msra.mxu0 0
        %1526 = vmatpush.bf16.msra.mxu0 0
        %1527 = vmatpush.bf16.msra.mxu0 0
        %1528 = vmatpush.bf16.msra.mxu0 %v1519
        %1529 = vmatmul.bf16.gmra.mxu0 %v1516
        %v1530 = vpop.f32.mrf.mxu0
        %v1531 = vadd.f32 0.0, %v1530
        %v1532 = vpop.f32.mrf.mxu0
        %1533 = vdwg.mxu0
        %1535 = vrot.lane.b32.xlu0 %v1531, 16
        %v1536 = vpop.permute.xlu0 %1535
        %vm1538 = vcmask 195712
        %1539 = vst.msk [vmem:[#allocation2] sm:$0xff] %vm1538, %v1536
        %1540 = vrot.lane.b32.xlu0 %v1407, 104
        %v1541 = vpop.permute.xlu0 %1540
        %1542 = vrot.lane.b32.xlu0 %v1412, 104
        %v1543 = vpop.permute.xlu0 %1542
        %v1545 = vsel %vm1351, %v1541, 0
        %v1548 = vsel %vm1351, %v1543, 0
        %1550 = vmatpush.bf16.xpose.msra.mxu0 0
        %1551 = vmatpush.bf16.xpose.msra.mxu0 0
        %1552 = vmatpush.bf16.xpose.msra.mxu0 0
        %1553 = vmatpush.bf16.xpose.msra.mxu0 0
        %1554 = vmatpush.bf16.xpose.msra.mxu0 0
        %1555 = vmatpush.bf16.xpose.msra.mxu0 0
        %1556 = vmatpush.bf16.xpose.msra.mxu0 0
        %1557 = vmatpush.bf16.xpose.msra.mxu0 %v1548
        %1558 = vmatmul.bf16.gmra.mxu0 %v1545
        %v1559 = vpop.f32.mrf.mxu0
        %v1560 = vadd.f32 0.0, %v1559
        %v1561 = vpop.f32.mrf.mxu0
        %1562 = vdwg.mxu0
        %v1563 = vsel %vm1195, %v1560, -1e+09
        %v1564 = vsel %vm1351, %v1563, -inf
        %1565 = vmax.xlane.f32.xlu0 %v1564
        %v1566 = vpop.xlane.xlu0 %1565
        %v1567 = vsub.f32 %v1563, %v1566
        %v1568 = vmul.f32 %v1567, 1.442695
        %v1569 = vpow.pop %v1568
        %v1570 = vsel %vm1351, %v1569, 0.0
        %1571 = vadd.xlane.f32.xlu0 %v1570
        %v1572 = vpop.xlane.xlu0 %1571
        %v1573 = vrcp.pop %v1572
        %v1574 = vmul.f32 %v1569, %v1573
        %v1575 = vpack.c.bf16 %v1574, %v1574
        %1576 = vrot.lane.b32.xlu0 %v1449, 104
        %v1577 = vpop.permute.xlu0 %1576
        %v1579 = vsel %vm1351, %v1575, 0
        %v1582 = vsel %vm1387, %v1577, 0
        %1584 = vmatpush.bf16.msra.mxu0 0
        %1585 = vmatpush.bf16.msra.mxu0 0
        %1586 = vmatpush.bf16.msra.mxu0 0
        %1587 = vmatpush.bf16.msra.mxu0 0
        %1588 = vmatpush.bf16.msra.mxu0 0
        %1589 = vmatpush.bf16.msra.mxu0 0
        %1590 = vmatpush.bf16.msra.mxu0 0
        %1591 = vmatpush.bf16.msra.mxu0 %v1582
        %1592 = vmatmul.bf16.gmra.mxu0 %v1579
        %v1593 = vpop.f32.mrf.mxu0
        %v1594 = vadd.f32 0.0, %v1593
        %v1595 = vpop.f32.mrf.mxu0
        %1596 = vdwg.mxu0
        %1598 = vrot.lane.b32.xlu0 %v1594, 24
        %v1599 = vpop.permute.xlu0 %1598
        %vm1601 = vcmask 261312
        %1602 = vst.msk [vmem:[#allocation2] sm:$0xff] %vm1601, %v1599
        %v1603 = vld [vmem:[#allocation2] sm:$0xff]
        %v1604 = vpack.c.bf16 %v1603, %v1603
        %v1605 = vld [vmem:[#allocation11] sm:$0xf]
        %v1606 = vld [vmem:[#allocation11 + $0x4] sm:$0xf]
        %v1607 = vld [vmem:[#allocation11 + $0x8] sm:$0xf]
        %v1608 = vld [vmem:[#allocation11 + $0xc] sm:$0xf]
        %v1609 = vld [vmem:[%s25] sm:$0x1]
        %v1611 = vperm.slane %v1609, 0
        %v1617 = vunpack.c.l.b16 %v1605
        %v1618 = vunpack.c.l.b16 %v1606
        %v1619 = vunpack.c.l.b16 %v1607
        %v1620 = vunpack.c.l.b16 %v1608
        %v1621 = vpack.c.b16 %v1618, %v1617
        %v1622 = vpack.c.b16 %v1620, %v1619
        %v1626 = vsel %vm1203, %v1604, 0
        %1628 = vmatpush.bf16.msra.mxu0 0
        %1629 = vmatpush.bf16.msra.mxu0 0
        %1630 = vmatpush.bf16.msra.mxu0 0
        %1631 = vmatpush.bf16.msra.mxu0 0
        %1632 = vmatpush.bf16.msra.mxu0 0
        %1633 = vmatpush.bf16.msra.mxu0 0
        %1634 = vmatpush.bf16.msra.mxu0 %v1622
        %1635 = vmatpush.bf16.msra.mxu0 %v1621
        %1636 = vmatmul.bf16.gmra.mxu0 %v1626
        %v1637 = vpop.f32.mrf.mxu0
        %v1638 = vadd.f32 %v1611, %v1637
        %v1639 = vpop.f32.mrf.mxu0
        %1640 = vdwg.mxu0
        %v1641 = vadd.f32 %v1190, %v1638
        %v1642 = vld [vmem:[%s27] sm:$0x1]
        %v1643 = vld [vmem:[%s29] sm:$0x1]
        %v1644 = vsel %vm1203, %v1641, 0.0
        %1645 = vadd.xlane.f32.xlu0 %v1644
        %v1646 = vpop.xlane.xlu0 %1645
        %v1647 = vmul.f32 %v1646, %v1213
        %v1648 = vsub.f32 %v1641, %v1647
        %v1649 = vmul.f32 %v1648, %v1648
        %v1650 = vsel %vm1203, %v1649, 0.0
        %1651 = vadd.xlane.f32.xlu0 %v1650
        %v1652 = vpop.xlane.xlu0 %1651
        %v1653 = vmul.f32 %v1652, 0.032258064
        %v1654 = vrsqrt.pop %v1653
        %v1655 = vmul.f32 %v1654, %v1653
        %v1656 = vmul.f32 %v1655, %v1654
        %v1657 = vmul.f32 0.5, %v1656
        %v1658 = vsub.f32 1.5, %v1657
        %v1659 = vmul.f32 %v1654, %v1658
        %v1660 = vmul.f32 %v1653, %v1659
        %vm1661 = vcmp.eq.f32.partialorder %v1653, inf
        %v1662 = vsel %vm1661, %v1653, %v1660
        %vm1663 = vcmp.eq.f32.partialorder %v1653, 0.0
        %v1664 = vand.u32 %v1653, 2147483648
        %v1665 = vsel %vm1663, %v1664, %v1662
        %v1666 = vadd.f32 %v1665, 1e-06
        %v1667 = vrcp.pop %v1666
        %v1669 = vperm.slane %v1642, 0
        %v1671 = vmul.f32 %v1669, %v1648
        %v1672 = vmul.f32 %v1671, %v1667
        %v1674 = vperm.slane %v1643, 0
        %v1676 = vadd.f32 %v1672, %v1674
        %v1677 = vpack.c.bf16 %v1676, %v1676
        %v1678 = vld [vmem:[#allocation12] sm:$0xf]
        %v1679 = vld [vmem:[#allocation12 + $0x4] sm:$0xf]
        %v1680 = vld [vmem:[#allocation12 + $0x8] sm:$0xf]
        %v1681 = vld [vmem:[#allocation12 + $0xc] sm:$0xf]
        %v1682 = vld [vmem:[%s33] sm:$0x1]
        %v1684 = vperm.slane %v1682, 0
        %v1690 = vunpack.c.l.b16 %v1678
        %v1691 = vunpack.c.l.b16 %v1679
        %v1692 = vunpack.c.l.b16 %v1680
        %v1693 = vunpack.c.l.b16 %v1681
        %v1694 = vpack.c.b16 %v1691, %v1690
        %v1695 = vpack.c.b16 %v1693, %v1692
        %v1699 = vsel %vm1203, %v1677, 0
        %1701 = vmatpush.bf16.msra.mxu0 0
        %1702 = vmatpush.bf16.msra.mxu0 0
        %1703 = vmatpush.bf16.msra.mxu0 0
        %1704 = vmatpush.bf16.msra.mxu0 0
        %1705 = vmatpush.bf16.msra.mxu0 0
        %1706 = vmatpush.bf16.msra.mxu0 0
        %1707 = vmatpush.bf16.msra.mxu0 %v1695
        %1708 = vmatpush.bf16.msra.mxu0 %v1694
        %1709 = vmatmul.bf16.gmra.mxu0 %v1699
        %v1710 = vpop.f32.mrf.mxu0
        %v1711 = vadd.f32 %v1684, %v1710
        %v1712 = vpop.f32.mrf.mxu0
        %1713 = vdwg.mxu0
        %v1714 = vld [vmem:[#allocation14] sm:$0xf]
        %v1715 = vld [vmem:[#allocation14 + $0x4] sm:$0xf]
        %v1716 = vld [vmem:[#allocation14 + $0x8] sm:$0xf]
        %v1717 = vld [vmem:[#allocation14 + $0xc] sm:$0xf]
        %v1718 = vld [vmem:[#allocation15] sm:$0x1]
        %v1720 = vperm.slane %v1718, 0
        %v1726 = vunpack.c.l.b16 %v1714
        %v1727 = vunpack.c.l.b16 %v1715
        %v1728 = vunpack.c.l.b16 %v1716
        %v1729 = vunpack.c.l.b16 %v1717
        %v1730 = vpack.c.b16 %v1727, %v1726
        %v1731 = vpack.c.b16 %v1729, %v1728
        %v1735 = vsel %vm1203, %v1200, 0
        %1737 = vmatpush.bf16.msra.mxu0 0
        %1738 = vmatpush.bf16.msra.mxu0 0
        %1739 = vmatpush.bf16.msra.mxu0 0
        %1740 = vmatpush.bf16.msra.mxu0 0
        %1741 = vmatpush.bf16.msra.mxu0 0
        %1742 = vmatpush.bf16.msra.mxu0 0
        %1743 = vmatpush.bf16.msra.mxu0 %v1731
        %1744 = vmatpush.bf16.msra.mxu0 %v1730
        %1745 = vmatmul.bf16.gmra.mxu0 %v1735
        %v1746 = vpop.f32.mrf.mxu0
        %v1747 = vadd.f32 %v1720, %v1746
        %v1748 = vpop.f32.mrf.mxu0
        %v1749 = vadd.f32 %v1720, %v1748
        %1750 = vdwg.mxu0
        %v1751 = vld [vmem:[#allocation17] sm:$0xf]
        %v1752 = vld [vmem:[#allocation17 + $0x4] sm:$0xf]
        %v1753 = vld [vmem:[#allocation17 + $0x8] sm:$0xf]
        %v1754 = vld [vmem:[#allocation17 + $0xc] sm:$0xf]
        %v1755 = vld [vmem:[#allocation18] sm:$0x1]
        %v1757 = vperm.slane %v1755, 0
        %v1763 = vunpack.c.l.b16 %v1751
        %v1764 = vunpack.c.l.b16 %v1752
        %v1765 = vunpack.c.l.b16 %v1753
        %v1766 = vunpack.c.l.b16 %v1754
        %v1767 = vpack.c.b16 %v1764, %v1763
        %v1768 = vpack.c.b16 %v1766, %v1765
        %1771 = vmatpush.bf16.msra.mxu0 0
        %1772 = vmatpush.bf16.msra.mxu0 0
        %1773 = vmatpush.bf16.msra.mxu0 0
        %1774 = vmatpush.bf16.msra.mxu0 0
        %1775 = vmatpush.bf16.msra.mxu0 0
        %1776 = vmatpush.bf16.msra.mxu0 0
        %1777 = vmatpush.bf16.msra.mxu0 %v1768
        %1778 = vmatpush.bf16.msra.mxu0 %v1767
        %1779 = vmatmul.bf16.gmra.mxu0 %v1735
        %v1780 = vpop.f32.mrf.mxu0
        %v1781 = vadd.f32 %v1757, %v1780
        %v1782 = vpop.f32.mrf.mxu0
        %v1783 = vadd.f32 %v1757, %v1782
        %1784 = vdwg.mxu0
        %v1785 = vmul.f32 %v1711, 0.35355338
        %v1786 = vpack.c.bf16 %v1785, %v1785
        %v1787 = vpack.c.bf16 %v1747, %v1747
        %v1788 = vpack.c.bf16 %v1749, %v1749
        %v1789 = vpack.c.bf16 %v1781, %v1781
        %v1790 = vpack.c.bf16 %v1783, %v1783
        %v1793 = vunpack.c.l.b16 %v1787
        %v1794 = vunpack.c.l.b16 %v1788
        %v1795 = vpack.c.b16 %v1794, %v1793
        %v1797 = vsel %vm1351, %v1786, 0
        %v1800 = vsel %vm1351, %v1795, 0
        %1802 = vmatpush.bf16.xpose.msra.mxu0 0
        %1803 = vmatpush.bf16.xpose.msra.mxu0 0
        %1804 = vmatpush.bf16.xpose.msra.mxu0 0
        %1805 = vmatpush.bf16.xpose.msra.mxu0 0
        %1806 = vmatpush.bf16.xpose.msra.mxu0 0
        %1807 = vmatpush.bf16.xpose.msra.mxu0 0
        %1808 = vmatpush.bf16.xpose.msra.mxu0 0
        %1809 = vmatpush.bf16.xpose.msra.mxu0 %v1800
        %1810 = vmatmul.bf16.gmra.mxu0 %v1797
        %v1811 = vpop.f32.mrf.mxu0
        %v1812 = vadd.f32 0.0, %v1811
        %v1813 = vpop.f32.mrf.mxu0
        %1814 = vdwg.mxu0
        %v1815 = vsel %vm1197, 1, 0
        %v1816 = vperm.slane %v1815, 0
        %vm1817 = vcmp.eq.s32.totalorder %v1816, 1
        %v1818 = vsel %vm1817, %v1812, -1e+09
        %vm1819 = vcmask 130048
        %v1820 = vsel %vm1819, %v1818, -inf
        %1821 = vmax.xlane.f32.xlu0 %v1820
        %v1822 = vpop.xlane.xlu0 %1821
        %v1823 = vsub.f32 %v1818, %v1822
        %v1824 = vmul.f32 %v1823, 1.442695
        %v1825 = vpow.pop %v1824
        %v1826 = vsel %vm1819, %v1825, 0.0
        %1827 = vadd.xlane.f32.xlu0 %v1826
        %v1828 = vpop.xlane.xlu0 %1827
        %v1829 = vrcp.pop %v1828
        %v1830 = vmul.f32 %v1825, %v1829
        %v1831 = vpack.c.bf16 %v1830, %v1830
        %v1834 = vunpack.c.l.b16 %v1789
        %v1835 = vunpack.c.l.b16 %v1790
        %v1836 = vpack.c.b16 %v1835, %v1834
        %v1839 = vsel %vm1819, %v1831, 0
        %1841 = vmatpush.bf16.msra.mxu0 0
        %1842 = vmatpush.bf16.msra.mxu0 0
        %1843 = vmatpush.bf16.msra.mxu0 0
        %1844 = vmatpush.bf16.msra.mxu0 0
        %1845 = vmatpush.bf16.msra.mxu0 0
        %1846 = vmatpush.bf16.msra.mxu0 0
        %1847 = vmatpush.bf16.msra.mxu0 0
        %1848 = vmatpush.bf16.msra.mxu0 %v1836
        %1849 = vmatmul.bf16.gmra.mxu0 %v1839
        %v1850 = vpop.f32.mrf.mxu0
        %v1851 = vadd.f32 0.0, %v1850
        %v1852 = vpop.f32.mrf.mxu0
        %1853 = vdwg.mxu0
        %1854 = vst.msk [vmem:[#allocation2] sm:$0xff] %vm1351, %v1851
        %v1856 = vunpack.c.l.b16 %v1786
        %v1857 = vpack.c.b16 %v1856, %v1856
        %1858 = vrot.lane.b32.xlu0 %v1857, 120
        %v1859 = vpop.permute.xlu0 %1858
        %1860 = vrot.lane.b32.xlu0 %v1795, 120
        %v1861 = vpop.permute.xlu0 %1860
        %v1863 = vsel %vm1351, %v1859, 0
        %v1866 = vsel %vm1351, %v1861, 0
        %1868 = vmatpush.bf16.xpose.msra.mxu0 0
        %1869 = vmatpush.bf16.xpose.msra.mxu0 0
        %1870 = vmatpush.bf16.xpose.msra.mxu0 0
        %1871 = vmatpush.bf16.xpose.msra.mxu0 0
        %1872 = vmatpush.bf16.xpose.msra.mxu0 0
        %1873 = vmatpush.bf16.xpose.msra.mxu0 0
        %1874 = vmatpush.bf16.xpose.msra.mxu0 0
        %1875 = vmatpush.bf16.xpose.msra.mxu0 %v1866
        %1876 = vmatmul.bf16.gmra.mxu0 %v1863
        %v1877 = vpop.f32.mrf.mxu0
        %v1878 = vadd.f32 0.0, %v1877
        %v1879 = vpop.f32.mrf.mxu0
        %1880 = vdwg.mxu0
        %v1881 = vsel %vm1817, %v1878, -1e+09
        %v1882 = vsel %vm1819, %v1881, -inf
        %1883 = vmax.xlane.f32.xlu0 %v1882
        %v1884 = vpop.xlane.xlu0 %1883
        %v1885 = vsub.f32 %v1881, %v1884
        %v1886 = vmul.f32 %v1885, 1.442695
        %v1887 = vpow.pop %v1886
        %v1888 = vsel %vm1819, %v1887, 0.0
        %1889 = vadd.xlane.f32.xlu0 %v1888
        %v1890 = vpop.xlane.xlu0 %1889
        %v1891 = vrcp.pop %v1890
        %v1892 = vmul.f32 %v1887, %v1891
        %v1893 = vpack.c.bf16 %v1892, %v1892
        %1894 = vrot.lane.b32.xlu0 %v1836, 120
        %v1895 = vpop.permute.xlu0 %1894
        %v1898 = vsel %vm1819, %v1893, 0
        %1900 = vmatpush.bf16.msra.mxu0 0
        %1901 = vmatpush.bf16.msra.mxu0 0
        %1902 = vmatpush.bf16.msra.mxu0 0
        %1903 = vmatpush.bf16.msra.mxu0 0
        %1904 = vmatpush.bf16.msra.mxu0 0
        %1905 = vmatpush.bf16.msra.mxu0 0
        %1906 = vmatpush.bf16.msra.mxu0 0
        %1907 = vmatpush.bf16.msra.mxu0 %v1895
        %1908 = vmatmul.bf16.gmra.mxu0 %v1898
        %v1909 = vpop.f32.mrf.mxu0
        %v1910 = vadd.f32 0.0, %v1909
        %v1911 = vpop.f32.mrf.mxu0
        %1912 = vdwg.mxu0
        %1914 = vrot.lane.b32.xlu0 %v1910, 8
        %v1915 = vpop.permute.xlu0 %1914
        %1917 = vst.msk [vmem:[#allocation2] sm:$0xff] %vm1475, %v1915
        %1918 = vrot.lane.b32.xlu0 %v1857, 112
        %v1919 = vpop.permute.xlu0 %1918
        %1920 = vrot.lane.b32.xlu0 %v1795, 112
        %v1921 = vpop.permute.xlu0 %1920
        %v1923 = vsel %vm1351, %v1919, 0
        %v1926 = vsel %vm1351, %v1921, 0
        %1928 = vmatpush.bf16.xpose.msra.mxu0 0
        %1929 = vmatpush.bf16.xpose.msra.mxu0 0
        %1930 = vmatpush.bf16.xpose.msra.mxu0 0
        %1931 = vmatpush.bf16.xpose.msra.mxu0 0
        %1932 = vmatpush.bf16.xpose.msra.mxu0 0
        %1933 = vmatpush.bf16.xpose.msra.mxu0 0
        %1934 = vmatpush.bf16.xpose.msra.mxu0 0
        %1935 = vmatpush.bf16.xpose.msra.mxu0 %v1926
        %1936 = vmatmul.bf16.gmra.mxu0 %v1923
        %v1937 = vpop.f32.mrf.mxu0
        %v1938 = vadd.f32 0.0, %v1937
        %v1939 = vpop.f32.mrf.mxu0
        %1940 = vdwg.mxu0
        %v1941 = vsel %vm1817, %v1938, -1e+09
        %v1942 = vsel %vm1819, %v1941, -inf
        %1943 = vmax.xlane.f32.xlu0 %v1942
        %v1944 = vpop.xlane.xlu0 %1943
        %v1945 = vsub.f32 %v1941, %v1944
        %v1946 = vmul.f32 %v1945, 1.442695
        %v1947 = vpow.pop %v1946
        %v1948 = vsel %vm1819, %v1947, 0.0
        %1949 = vadd.xlane.f32.xlu0 %v1948
        %v1950 = vpop.xlane.xlu0 %1949
        %v1951 = vrcp.pop %v1950
        %v1952 = vmul.f32 %v1947, %v1951
        %v1953 = vpack.c.bf16 %v1952, %v1952
        %1954 = vrot.lane.b32.xlu0 %v1836, 112
        %v1955 = vpop.permute.xlu0 %1954
        %v1958 = vsel %vm1819, %v1953, 0
        %1960 = vmatpush.bf16.msra.mxu0 0
        %1961 = vmatpush.bf16.msra.mxu0 0
        %1962 = vmatpush.bf16.msra.mxu0 0
        %1963 = vmatpush.bf16.msra.mxu0 0
        %1964 = vmatpush.bf16.msra.mxu0 0
        %1965 = vmatpush.bf16.msra.mxu0 0
        %1966 = vmatpush.bf16.msra.mxu0 0
        %1967 = vmatpush.bf16.msra.mxu0 %v1955
        %1968 = vmatmul.bf16.gmra.mxu0 %v1958
        %v1969 = vpop.f32.mrf.mxu0
        %v1970 = vadd.f32 0.0, %v1969
        %v1971 = vpop.f32.mrf.mxu0
        %1972 = vdwg.mxu0
        %1974 = vrot.lane.b32.xlu0 %v1970, 16
        %v1975 = vpop.permute.xlu0 %1974
        %1977 = vst.msk [vmem:[#allocation2] sm:$0xff] %vm1538, %v1975
        %1978 = vrot.lane.b32.xlu0 %v1857, 104
        %v1979 = vpop.permute.xlu0 %1978
        %1980 = vrot.lane.b32.xlu0 %v1795, 104
        %v1981 = vpop.permute.xlu0 %1980
        %v1983 = vsel %vm1351, %v1979, 0
        %v1986 = vsel %vm1351, %v1981, 0
        %1988 = vmatpush.bf16.xpose.msra.mxu0 0
        %1989 = vmatpush.bf16.xpose.msra.mxu0 0
        %1990 = vmatpush.bf16.xpose.msra.mxu0 0
        %1991 = vmatpush.bf16.xpose.msra.mxu0 0
        %1992 = vmatpush.bf16.xpose.msra.mxu0 0
        %1993 = vmatpush.bf16.xpose.msra.mxu0 0
        %1994 = vmatpush.bf16.xpose.msra.mxu0 0
        %1995 = vmatpush.bf16.xpose.msra.mxu0 %v1986
        %1996 = vmatmul.bf16.gmra.mxu0 %v1983
        %v1997 = vpop.f32.mrf.mxu0
        %v1998 = vadd.f32 0.0, %v1997
        %v1999 = vpop.f32.mrf.mxu0
        %2000 = vdwg.mxu0
        %v2001 = vsel %vm1817, %v1998, -1e+09
        %v2002 = vsel %vm1819, %v2001, -inf
        %2003 = vmax.xlane.f32.xlu0 %v2002
        %v2004 = vpop.xlane.xlu0 %2003
        %v2005 = vsub.f32 %v2001, %v2004
        %v2006 = vmul.f32 %v2005, 1.442695
        %v2007 = vpow.pop %v2006
        %v2008 = vsel %vm1819, %v2007, 0.0
        %2009 = vadd.xlane.f32.xlu0 %v2008
        %v2010 = vpop.xlane.xlu0 %2009
        %v2011 = vrcp.pop %v2010
        %v2012 = vmul.f32 %v2007, %v2011
        %v2013 = vpack.c.bf16 %v2012, %v2012
        %2014 = vrot.lane.b32.xlu0 %v1836, 104
        %v2015 = vpop.permute.xlu0 %2014
        %v2018 = vsel %vm1819, %v2013, 0
        %2020 = vmatpush.bf16.msra.mxu0 0
        %2021 = vmatpush.bf16.msra.mxu0 0
        %2022 = vmatpush.bf16.msra.mxu0 0
        %2023 = vmatpush.bf16.msra.mxu0 0
        %2024 = vmatpush.bf16.msra.mxu0 0
        %2025 = vmatpush.bf16.msra.mxu0 0
        %2026 = vmatpush.bf16.msra.mxu0 0
        %2027 = vmatpush.bf16.msra.mxu0 %v2015
        %2028 = vmatmul.bf16.gmra.mxu0 %v2018
        %v2029 = vpop.f32.mrf.mxu0
        %v2030 = vadd.f32 0.0, %v2029
        %v2031 = vpop.f32.mrf.mxu0
        %2032 = vdwg.mxu0
        %2034 = vrot.lane.b32.xlu0 %v2030, 24
        %v2035 = vpop.permute.xlu0 %2034
        %2037 = vst.msk [vmem:[#allocation2] sm:$0xff] %vm1601, %v2035
        %v2038 = vld [vmem:[#allocation2] sm:$0xff]
        %v2039 = vpack.c.bf16 %v2038, %v2038
        %v2040 = vld [vmem:[#allocation20] sm:$0xf]
        %v2041 = vld [vmem:[#allocation20 + $0x4] sm:$0xf]
        %v2042 = vld [vmem:[#allocation20 + $0x8] sm:$0xf]
        %v2043 = vld [vmem:[#allocation20 + $0xc] sm:$0xf]
        %v2044 = vld [vmem:[#allocation21] sm:$0x1]
        %v2046 = vperm.slane %v2044, 0
        %v2052 = vunpack.c.l.b16 %v2040
        %v2053 = vunpack.c.l.b16 %v2041
        %v2054 = vunpack.c.l.b16 %v2042
        %v2055 = vunpack.c.l.b16 %v2043
        %v2056 = vpack.c.b16 %v2053, %v2052
        %v2057 = vpack.c.b16 %v2055, %v2054
        %v2061 = vsel %vm1203, %v2039, 0
        %2063 = vmatpush.bf16.msra.mxu0 0
        %2064 = vmatpush.bf16.msra.mxu0 0
        %2065 = vmatpush.bf16.msra.mxu0 0
        %2066 = vmatpush.bf16.msra.mxu0 0
        %2067 = vmatpush.bf16.msra.mxu0 0
        %2068 = vmatpush.bf16.msra.mxu0 0
        %2069 = vmatpush.bf16.msra.mxu0 %v2057
        %2070 = vmatpush.bf16.msra.mxu0 %v2056
        %2071 = vmatmul.bf16.gmra.mxu0 %v2061
        %v2072 = vpop.f32.mrf.mxu0
        %v2073 = vadd.f32 %v2046, %v2072
        %v2074 = vpop.f32.mrf.mxu0
        %2075 = vdwg.mxu0
        %v2076 = vadd.f32 %v1641, %v2073
        %v2077 = vld [vmem:[#allocation23] sm:$0x1]
        %v2078 = vld [vmem:[#allocation24] sm:$0x1]
        %v2079 = vsel %vm1203, %v2076, 0.0
        %2080 = vadd.xlane.f32.xlu0 %v2079
        %v2081 = vpop.xlane.xlu0 %2080
        %v2082 = vmul.f32 %v2081, %v1213
        %v2083 = vsub.f32 %v2076, %v2082
        %v2084 = vmul.f32 %v2083, %v2083
        %v2085 = vsel %vm1203, %v2084, 0.0
        %2086 = vadd.xlane.f32.xlu0 %v2085
        %v2087 = vpop.xlane.xlu0 %2086
        %v2088 = vmul.f32 %v2087, 0.032258064
        %v2089 = vrsqrt.pop %v2088
        %v2090 = vmul.f32 %v2089, %v2088
        %v2091 = vmul.f32 %v2090, %v2089
        %v2092 = vmul.f32 0.5, %v2091
        %v2093 = vsub.f32 1.5, %v2092
        %v2094 = vmul.f32 %v2089, %v2093
        %v2095 = vmul.f32 %v2088, %v2094
        %vm2096 = vcmp.eq.f32.partialorder %v2088, inf
        %v2097 = vsel %vm2096, %v2088, %v2095
        %vm2098 = vcmp.eq.f32.partialorder %v2088, 0.0
        %v2099 = vand.u32 %v2088, 2147483648
        %v2100 = vsel %vm2098, %v2099, %v2097
        %v2101 = vadd.f32 %v2100, 1e-06
        %v2102 = vrcp.pop %v2101
        %v2104 = vperm.slane %v2077, 0
        %v2106 = vmul.f32 %v2104, %v2083
        %v2107 = vmul.f32 %v2106, %v2102
        %v2109 = vperm.slane %v2078, 0
        %v2111 = vadd.f32 %v2107, %v2109
        %v2112 = vpack.c.bf16 %v2111, %v2111
        %v2113 = vld [vmem:[#allocation26] sm:$0xf]
        %v2114 = vld [vmem:[#allocation26 + $0x4] sm:$0xf]
        %v2115 = vld [vmem:[#allocation26 + $0x8] sm:$0xf]
        %v2116 = vld [vmem:[#allocation26 + $0xc] sm:$0xf]
        %v2117 = vld [vmem:[#allocation27] sm:$0x1]
        %v2119 = vperm.slane %v2117, 0
        %v2125 = vunpack.c.l.b16 %v2113
        %v2126 = vunpack.c.l.b16 %v2114
        %v2127 = vunpack.c.l.b16 %v2115
        %v2128 = vunpack.c.l.b16 %v2116
        %v2129 = vpack.c.b16 %v2126, %v2125
        %v2130 = vpack.c.b16 %v2128, %v2127
        %v2134 = vsel %vm1203, %v2112, 0
        %2136 = vmatpush.bf16.msra.mxu0 0
        %2137 = vmatpush.bf16.msra.mxu0 0
        %2138 = vmatpush.bf16.msra.mxu0 0
        %2139 = vmatpush.bf16.msra.mxu0 0
        %2140 = vmatpush.bf16.msra.mxu0 0
        %2141 = vmatpush.bf16.msra.mxu0 0
        %2142 = vmatpush.bf16.msra.mxu0 %v2130
        %2143 = vmatpush.bf16.msra.mxu0 %v2129
        %2144 = vmatmul.bf16.gmra.mxu0 %v2134
        %v2145 = vpop.f32.mrf.mxu0
        %v2146 = vadd.f32 %v2119, %v2145
        %v2147 = vpop.f32.mrf.mxu0
        %2148 = vdwg.mxu0
        %v2149 = vmax.f32 %v2146, 0.0
        %v2150 = vpack.c.bf16 %v2149, %v2149
        %v2151 = vld [vmem:[%s55] sm:$0xf]
        %v2152 = vld [vmem:[%s55 + $0x4] sm:$0xf]
        %v2153 = vld [vmem:[%s55 + $0x8] sm:$0xf]
        %v2154 = vld [vmem:[%s55 + $0xc] sm:$0xf]
        %v2155 = vld [vmem:[%s55 + $0x10] sm:$0xf]
        %v2156 = vld [vmem:[%s55 + $0x14] sm:$0xf]
        %v2157 = vld [vmem:[%s55 + $0x18] sm:$0xf]
        %v2158 = vld [vmem:[%s55 + $0x1c] sm:$0xf]
        %v2159 = vld [vmem:[%s57] sm:$0x1]
        %v2161 = vperm.slane %v2159, 0
        %v2171 = vunpack.c.l.b16 %v2151
        %v2172 = vunpack.c.l.b16 %v2152
        %v2173 = vunpack.c.l.b16 %v2153
        %v2174 = vunpack.c.l.b16 %v2154
        %v2175 = vunpack.c.l.b16 %v2155
        %v2176 = vunpack.c.l.b16 %v2156
        %v2177 = vunpack.c.l.b16 %v2157
        %v2178 = vunpack.c.l.b16 %v2158
        %v2179 = vpack.c.b16 %v2172, %v2171
        %v2180 = vpack.c.b16 %v2174, %v2173
        %v2181 = vpack.c.b16 %v2176, %v2175
        %v2182 = vpack.c.b16 %v2178, %v2177
        %vm2187 = vcmask 523264
        %v2189 = vsel %vm2187, %v2150, 0
        %2191 = vmatpush.bf16.msra.mxu0 0
        %2192 = vmatpush.bf16.msra.mxu0 0
        %2193 = vmatpush.bf16.msra.mxu0 0
        %2194 = vmatpush.bf16.msra.mxu0 0
        %2195 = vmatpush.bf16.msra.mxu0 %v2182
        %2196 = vmatpush.bf16.msra.mxu0 %v2181
        %2197 = vmatpush.bf16.msra.mxu0 %v2180
        %2198 = vmatpush.bf16.msra.mxu0 %v2179
        %2199 = vmatmul.bf16.gmra.mxu0 %v2189
        %v2200 = vpop.f32.mrf.mxu0
        %v2201 = vadd.f32 %v2161, %v2200
        %v2202 = vpop.f32.mrf.mxu0
        %2203 = vdwg.mxu0
        %v2204 = vadd.f32 %v2076, %v2201
        %2205 = vst.msk [vmem:[%s1179] sm:$0xff] %vm1203, %v2204
        %s2206 = sand.u32 %s716, 1
        %s2207 = scalar_lea.sflag [#allocation5], %s2206
        %s2208 = sand.u32 %s716, 1
        %s2209 = smul.addr %s2208, 8
        %s2210 = scalar_lea.vmem [#allocation29], %s2209
        // Predicated region
        $region201: #{tpu_custom_call.1} parent=135 // pred_check
          %p2211 = pneg %p726
        $region202: #{tpu_custom_call.1} parent=135 // pred_check_branch
          %2213 = sbr.rel (%p2211) target = $region204
        $region203: #{tpu_custom_call.1} parent=135 // pred_region
          %2215 = vsyncadd %s2207, 0
          %s2216 = smul.addr %s84, 8
          %s2217 = scalar_lea.hbm %s59, %s2216
          %s2219 = sshll.u32 %s2210, 4
          %s2220 = int_to_ptr.vmem [resolvable:$true] %s2219
          %s2221 = sshll.u32 %s2217, 4
          %s2222 = int_to_ptr.hbm [resolvable:$true] %s2221
          %2224 = dma.vmem_to_hbm [thread:$0]  %s2220, 128, %s2222, %s2207
        $region204: #{tpu_custom_call.1} parent=135 // pred_fallthru
          _
      $region136: #{tpu_custom_call.1} parent=5 // pred_fallthru
        _
      %p2225 = scmp.le.s32.totalorder 2, %s79
      // Predicated region
      $region205: #{tpu_custom_call.1} parent=5 // pred_check
        %p2226 = pneg %p2225
      $region206: #{tpu_custom_call.1} parent=5 // pred_check_branch
        %2228 = sbr.rel (%p2226) target = $region208
      $region207: #{tpu_custom_call.1} parent=5 // pred_region
        %s2229 = ssub.s32 %s79, 2
        // Predicated region
        $region209: #{tpu_custom_call.1} parent=207 // pred_check
          %p2230 = pneg %p732
        $region210: #{tpu_custom_call.1} parent=207 // pred_check_branch
          %2232 = sbr.rel (%p2230) target = $region212
        $region211: #{tpu_custom_call.1} parent=207 // pred_region
          %s2233 = sand.u32 %s717, 1
          %s2234 = scalar_lea.sflag [#allocation5], %s2233
          %s2235 = sand.u32 %s717, 1
          %s2236 = smul.addr %s2235, 8
          %s2237 = scalar_lea.vmem [#allocation29], %s2236
          %2239 = dma.done %s2234, 128
        $region212: #{tpu_custom_call.1} parent=207 // pred_fallthru
          _
      $region208: #{tpu_custom_call.1} parent=5 // pred_fallthru
        _
    $region6: #{tpu_custom_call.1} parent=1 // loop_footer
      %s83 = sadd.s32 1, %s79
    $region7: #{tpu_custom_call.1} parent=1 // loop_footer_branch
      %78 = sbr.rel target = $region3
    $region8: #{tpu_custom_call.1} parent=1 // loop_exit
      _
    %2240 = vsyncpa [#allocation4], 1
    %s2241 = scalar_lea.sflag [#allocation4], 1
    %2242 = vsyncpa %s2241, 1
    %2243 = vsyncpa [#allocation7], 1
    %2244 = vsyncpa [#allocation10], 1
    %2245 = vsyncpa [#allocation13], 1
    %2246 = vsyncpa [#allocation16], 1
    %2247 = vsyncpa [#allocation19], 1
    %2248 = vsyncpa [#allocation22], 1
    %2249 = vsyncpa [#allocation25], 1
    %2250 = vsyncpa [#allocation28], 1
    %2251 = vsyncpa [#allocation5], 1
    %s2252 = scalar_lea.sflag [#allocation5], 1
    %2253 = vsyncpa %s2252, 1

</llo_original>
